<compile_context>
chip_gen: v7x
topology: tpu7x:2x2x1
jax: 0.10.0
libtpu: 0.0.40
codegen_flags: <defaults>
</compile_context>

<pallas_src>
import jax
import jax.numpy as jnp
from jax import lax
from jax.experimental import pallas as pl
from jax.experimental.pallas import tpu as pltpu


# ----------------------------- small helpers -----------------------------

def _round_up(n, m):
    return ((n + m - 1) // m) * m


def _silu(v):
    return v * jax.nn.sigmoid(v)


def _norm_cols(v, eps=1e-5):
    # LayerNorm (no affine -- affine is folded into the next Linear) over the
    # feature (sublane) axis; each lane column is one batch element.
    mu = jnp.mean(v, axis=0, keepdims=True)
    var = jnp.mean((v - mu) ** 2, axis=0, keepdims=True)
    return (v - mu) * lax.rsqrt(var + eps)


def _is_v7x():
    try:
        return "v7" in jax.devices()[0].device_kind.lower()
    except Exception:
        return False


def _vmem_limit_bytes():
    # ~75% of physical VMEM: leaves compiler/internal-scratch headroom on v7x
    # (64 MiB/TC) and raises the default scoped limit on v5e/v6e (128 MiB).
    try:
        return int(0.75 * pltpu.get_tpu_info().vmem_capacity_bytes)
    except Exception:
        return 64 * 1024 * 1024


def _choose_block_b(B, block_b):
    Bp128 = _round_up(B, 128)
    bb = min(_round_up(block_b, 128), Bp128)
    # v7x has 2 TensorCores/chip: give the "parallel" batch axis >= 2 grid
    # steps when the batch allows it so both cores get work.
    if _is_v7x() and Bp128 >= 2 * 128:
        bb = min(bb, _round_up(Bp128 // 2, 128))
    return max(128, bb)


# ------------------------------ Pallas kernel ------------------------------

def diffusion_kernel(x_ref, t_ref,
                     te_w1_ref, te_b1_ref,
                     in_wx_ref, w_ti_ref, in_b_ref,
                     w1_ref, w2_ref, bb_ref,
                     out_w_ref, out_b_ref,
                     o_ref, val_ref):
    j = pl.program_id(1)
    last = pl.num_programs(1) - 1

    def dot(w, a):
        # Weights arrive pre-cast (bf16 on the fast path); only the activation
        # is cast at the dot.  f32 accumulation on the MXU.
        return jnp.dot(w, a.astype(w.dtype), preferred_element_type=jnp.float32)

    # ---- prologue (first block step): time embedding + inblock ----
    @pl.when(j == 0)
    def _():
        x = x_ref[...].astype(jnp.float32)        # (F, Bb), batch on lanes
        t = t_ref[...].astype(jnp.float32)        # (1, Bb)
        # time_embed Linear(1, H) is a broadcasted scale+shift.
        h = _silu(te_w1_ref[...] * t + te_b1_ref[...])        # (H, Bb)
        # inblock(cat([x, t_emb])) with time_embed's 2nd Linear folded in:
        #   W_ti = in_wt @ te_w2,  in_b' = in_b + in_wt @ te_b2
        val_ref[...] = (dot(in_wx_ref[...], x)
                        + dot(w_ti_ref[...], h)
                        + in_b_ref[...])                       # (H, Bb)

    # ---- residual MLP block j (streamed weights; LN affine pre-folded) ----
    # TODO(synk): nn.Dropout is identity here (inference); a training forward
    # would need pltpu.prng_seed/prng_random_bits masking.
    val = val_ref[...]
    xn = _norm_cols(val)
    bb = bb_ref[0]                                 # (H, 2): packed [b1', b2]
    b1 = bb[:, :1]
    b2 = bb[:, 1:]
    h1 = _silu(dot(w1_ref[0], xn) + b1)
    val = val + dot(w2_ref[0], h1) + b2
    val_ref[...] = val

    # ---- epilogue (last block step): final norm + outblock (affine folded) --
    @pl.when(j == last)
    def _():
        v = _norm_cols(val)
        o_ref[...] = (dot(out_w_ref[...], v) + out_b_ref[...]).astype(o_ref.dtype)


# --------------------- wrapper-side weight preprocessing ---------------------

def _prepare_weights(p, use_bf16):
    """Fold LN affines / time-embed Linear2 and pre-cast matmul weights."""
    f32 = jnp.float32
    mm = jnp.bfloat16 if use_bf16 else jnp.float32

    # Fuse time_embed's second Linear into inblock's t_emb slice.
    w_ti = p["in_wt"] @ p["te_w2"]                            # (H, H)
    in_b_c = p["in_b"] + p["in_wt"] @ p["te_b2"]              # (H, 1)

    # Fold per-block LayerNorm affine into linear1 (W1' = W1*g, b1' = b1+W1@beta).
    g = p["ng"][:, :, 0]                                      # (nblocks, H)
    w1f = p["w1"] * g[:, None, :]
    b1f = p["b1"] + jnp.einsum("bij,bjk->bik", p["w1"], p["nbeta"])
    bb = jnp.concatenate([b1f, p["b2"]], axis=-1)             # (nblocks, H, 2)

    # Fold final LayerNorm affine into outblock.
    out_wf = p["out_w"] * p["fn_g"][:, 0][None, :]            # (F, H)
    out_bf = p["out_b"] + p["out_w"] @ p["fn_b"]              # (F, 1)

    # TODO(synk): optional fp8 weight quantization (per-channel scales) for v7x.
    return {
        "te_w1": p["te_w1"].astype(f32), "te_b1": p["te_b1"].astype(f32),
        "in_wx": p["in_wx"].astype(mm), "w_ti": w_ti.astype(mm),
        "in_b": in_b_c.astype(f32),
        "w1": w1f.astype(mm), "w2": p["w2"].astype(mm), "bb": bb.astype(f32),
        "out_w": out_wf.astype(mm), "out_b": out_bf.astype(f32),
    }


# ------------------------------ forward wrapper ------------------------------

def diffusion_forward(x, t, params, *, block_b=512, use_bf16=True):
    """x: (B, nfeatures), t: (B, 1) -> (B, nfeatures)."""
    B, F = x.shape
    H = params["te_w2"].shape[0]
    nblocks = params["w1"].shape[0]

    block_b = _choose_block_b(B, block_b)
    Bp = _round_up(B, block_b)
    pad = Bp - B
    # TODO(synk): accept/produce (F, B)-layout activations to avoid these two
    # wrapper-side transposes once B*F is large enough to matter.
    xT = jnp.pad(x, ((0, pad), (0, 0))).T          # (F, Bp)
    tT = jnp.pad(t, ((0, pad), (0, 0))).T          # (1, Bp)

    w = _prepare_weights(params, use_bf16)
    num_bt = Bp // block_b

    def run(single_buffer_weights):
        def const_spec(arr):
            nd = arr.ndim
            idx = lambda i, j, _nd=nd: (0,) * _nd
            if single_buffer_weights:
                # Constant block index across the grid: one DMA total, so
                # double-buffering only doubles VMEM.
                return pl.BlockSpec(arr.shape, idx, pipeline_mode=pl.Buffered(1))
            return pl.BlockSpec(arr.shape, idx)

        in_specs = [
            pl.BlockSpec((F, block_b), lambda i, j: (0, i)),   # x^T
            pl.BlockSpec((1, block_b), lambda i, j: (0, i)),   # t^T
            const_spec(w["te_w1"]), const_spec(w["te_b1"]),
            const_spec(w["in_wx"]), const_spec(w["w_ti"]), const_spec(w["in_b"]),
            # Streamed per-block weights (double-buffered by default -> DMA of
            # block j+1 overlaps compute of block j).
            pl.BlockSpec((1, H, H), lambda i, j: (j, 0, 0)),   # w1'
            pl.BlockSpec((1, H, H), lambda i, j: (j, 0, 0)),   # w2
            pl.BlockSpec((1, H, 2), lambda i, j: (j, 0, 0)),   # [b1', b2]
            const_spec(w["out_w"]), const_spec(w["out_b"]),
        ]
        out_spec = pl.BlockSpec((F, block_b), lambda i, j: (0, i))

        call = pl.pallas_call(
            diffusion_kernel,
            out_shape=jax.ShapeDtypeStruct((F, Bp), jnp.float32),
            grid_spec=pltpu.PrefetchScalarGridSpec(
                num_scalar_prefetch=0,
                grid=(num_bt, nblocks),
                in_specs=in_specs,
                out_specs=out_spec,
                scratch_shapes=[pltpu.VMEM((H, block_b), jnp.float32)],
            ),
            compiler_params=pltpu.CompilerParams(
                dimension_semantics=("parallel", "arbitrary"),
                vmem_limit_bytes=_vmem_limit_bytes()),
        )
        return jax.block_until_ready(
            call(xT, tT, w["te_w1"], w["te_b1"], w["in_wx"], w["w_ti"],
                 w["in_b"], w["w1"], w["w2"], w["bb"], w["out_w"], w["out_b"]))

    try:
        outT = run(True)
    except Exception:
        # pipeline_mode=pl.Buffered(1) not supported by this jax version.
        outT = run(False)

    return outT.T[:B]


# -------------------------- parameter construction --------------------------
# Weights stored in native PyTorch (out_features, in_features) layout; biases
# and LayerNorm params as (out, 1) columns (lane-broadcast in the kernel).

def init_params(key, nfeatures, nblocks, hidden):
    ks = iter(jax.random.split(key, 32))

    def rnd(shape, scale):
        return scale * jax.random.normal(next(ks), shape, jnp.float32)

    def lin(fan_in, shape):
        return rnd(shape, 1.0 / float(fan_in) ** 0.5)

    return {
        # time_embed: Linear(1,H), SiLU, Linear(H,H)
        "te_w1": lin(1, (hidden, 1)),
        "te_b1": rnd((hidden, 1), 0.1),
        "te_w2": lin(hidden, (hidden, hidden)),
        "te_b2": rnd((hidden, 1), 0.1),
        # inblock: Linear(nfeatures + hidden, hidden), split x / t_emb parts
        "in_wx": lin(nfeatures + hidden, (hidden, nfeatures)),
        "in_wt": lin(nfeatures + hidden, (hidden, hidden)),
        "in_b": rnd((hidden, 1), 0.1),
        # mid blocks (stacked along axis 0); non-trivial LN affines so the
        # offline folding is actually exercised by the correctness check.
        "ng": 1.0 + rnd((nblocks, hidden, 1), 0.1),
        "nbeta": rnd((nblocks, hidden, 1), 0.1),
        "w1": lin(hidden, (nblocks, hidden, hidden)),
        "b1": rnd((nblocks, hidden, 1), 0.1),
        "w2": lin(hidden, (nblocks, hidden, hidden)),
        "b2": rnd((nblocks, hidden, 1), 0.1),
        # final norm + outblock
        "fn_g": 1.0 + rnd((hidden, 1), 0.1),
        "fn_b": rnd((hidden, 1), 0.1),
        "out_w": lin(hidden, (nfeatures, hidden)),
        "out_b": rnd((nfeatures, 1), 0.1),
    }


# ------------------------ pure-JAX reference (check) ------------------------

def reference_forward(x, t, p):
    def ln(v, g, b):
        mu = jnp.mean(v, -1, keepdims=True)
        var = jnp.mean((v - mu) ** 2, -1, keepdims=True)
        return (v - mu) / jnp.sqrt(var + 1e-5) * g.T + b.T

    t = t.astype(jnp.float32)
    h = t @ p["te_w1"].T + p["te_b1"].T
    h = h * jax.nn.sigmoid(h)
    t_emb = h @ p["te_w2"].T + p["te_b2"].T
    val = x @ p["in_wx"].T + t_emb @ p["in_wt"].T + p["in_b"].T
    for i in range(p["w1"].shape[0]):
        res = val
        xn = ln(val, p["ng"][i], p["nbeta"][i])
        h1 = xn @ p["w1"][i].T + p["b1"][i].T
        h1 = h1 * jax.nn.sigmoid(h1)
        val = res + h1 @ p["w2"][i].T + p["b2"][i].T
    val = ln(val, p["fn_g"], p["fn_b"])
    return val @ p["out_w"].T + p["out_b"].T


# ---------------------------------- main ----------------------------------

if __name__ == "__main__":
    nfeatures, hidden, nblocks, batch = 8, 32, 4, 8

    key = jax.random.PRNGKey(0)
    kx, kt, kp = jax.random.split(key, 3)

    x = jax.random.normal(kx, (batch, nfeatures), jnp.float32)
    t = jax.random.uniform(kt, (batch, 1), jnp.float32)
    params = init_params(kp, nfeatures, nblocks, hidden)

    ref = reference_forward(x, t, params)

    # f32-matmul path: tight check of the fused/folded, streamed-weight kernel.
    out_f32 = diffusion_forward(x, t, params, use_bf16=False)
    assert out_f32.shape == (batch, nfeatures)
    assert jnp.allclose(out_f32, ref, atol=2e-3, rtol=2e-3), "f32 mismatch"

    # bf16-weight fast path (f32 accumulation) -> looser tolerance.
    out = diffusion_forward(x, t, params, use_bf16=True)
    assert out.shape == (batch, nfeatures)
    assert jnp.allclose(out, ref, atol=5e-2, rtol=5e-2), "bf16 mismatch"

    print("KERNEL_OK")
</pallas_src>

<mosaic_0001>
module attributes {stable_mosaic.version = 11 : i64} {
  func.func @diffusion_kernel(%arg0: i32, %arg1: i32, %arg2: memref<8x128xf32, #tpu.memory_space<vmem>>, %arg3: memref<1x128xf32, #tpu.memory_space<vmem>>, %arg4: memref<32x1xf32, #tpu.memory_space<vmem>>, %arg5: memref<32x1xf32, #tpu.memory_space<vmem>>, %arg6: memref<32x8xf32, #tpu.memory_space<vmem>>, %arg7: memref<32x32xf32, #tpu.memory_space<vmem>>, %arg8: memref<32x1xf32, #tpu.memory_space<vmem>>, %arg9: memref<1x32x32xf32, #tpu.memory_space<vmem>>, %arg10: memref<1x32x32xf32, #tpu.memory_space<vmem>>, %arg11: memref<1x32x2xf32, #tpu.memory_space<vmem>>, %arg12: memref<8x32xf32, #tpu.memory_space<vmem>>, %arg13: memref<8x1xf32, #tpu.memory_space<vmem>>, %arg14: memref<8x128xf32, #tpu.memory_space<vmem>>, %arg15: memref<32x128xf32, #tpu.memory_space<vmem>>) attributes {dimension_semantics = [#tpu.dimension_semantics<parallel>, #tpu.dimension_semantics<arbitrary>], iteration_bounds = array<i64: 1, 4>, scalar_prefetch = 0 : i64, scratch_operands = 1 : i64, tpu.core_type = #tpu.core_type<tc>, window_params = [{transform_indices = @transform_0, window_bounds = array<i64: 8, 128>}, {transform_indices = @transform_1, window_bounds = array<i64: 1, 128>}, {pipeline_mode = #tpu.pipeline_mode<synchronous>, transform_indices = @transform_2, window_bounds = array<i64: 32, 1>}, {pipeline_mode = #tpu.pipeline_mode<synchronous>, transform_indices = @transform_3, window_bounds = array<i64: 32, 1>}, {pipeline_mode = #tpu.pipeline_mode<synchronous>, transform_indices = @transform_4, window_bounds = array<i64: 32, 8>}, {pipeline_mode = #tpu.pipeline_mode<synchronous>, transform_indices = @transform_5, window_bounds = array<i64: 32, 32>}, {pipeline_mode = #tpu.pipeline_mode<synchronous>, transform_indices = @transform_6, window_bounds = array<i64: 32, 1>}, {transform_indices = @transform_7, window_bounds = array<i64: 1, 32, 32>}, {transform_indices = @transform_8, window_bounds = array<i64: 1, 32, 32>}, {transform_indices = @transform_9, window_bounds = array<i64: 1, 32, 2>}, {pipeline_mode = #tpu.pipeline_mode<synchronous>, transform_indices = @transform_10, window_bounds = array<i64: 8, 32>}, {pipeline_mode = #tpu.pipeline_mode<synchronous>, transform_indices = @transform_11, window_bounds = array<i64: 8, 1>}, {transform_indices = @transform_12, window_bounds = array<i64: 8, 128>}]} {
    %c0_i32 = arith.constant 0 : i32
    %0 = arith.cmpi eq, %arg1, %c0_i32 : i32
    %1 = arith.extui %0 : i1 to i32
    %c0_i32_0 = arith.constant 0 : i32
    %2 = arith.cmpi ne, %1, %c0_i32_0 : i32
    scf.if %2 {
      %c0_21 = arith.constant 0 : index
      %c0_22 = arith.constant 0 : index
      %47 = vector.load %arg2[%c0_21, %c0_22] : memref<8x128xf32, #tpu.memory_space<vmem>>, vector<8x128xf32>
      %c0_23 = arith.constant 0 : index
      %c0_24 = arith.constant 0 : index
      %48 = vector.load %arg3[%c0_23, %c0_24] : memref<1x128xf32, #tpu.memory_space<vmem>>, vector<1x128xf32>
      %c0_25 = arith.constant 0 : index
      %c0_26 = arith.constant 0 : index
      %49 = vector.load %arg4[%c0_25, %c0_26] : memref<32x1xf32, #tpu.memory_space<vmem>>, vector<32x1xf32>
      %50 = vector.broadcast %49 : vector<32x1xf32> to vector<32x128xf32>
      %51 = vector.broadcast %48 : vector<1x128xf32> to vector<32x128xf32>
      %52 = arith.mulf %50, %51 : vector<32x128xf32>
      %c0_27 = arith.constant 0 : index
      %c0_28 = arith.constant 0 : index
      %53 = vector.load %arg5[%c0_27, %c0_28] : memref<32x1xf32, #tpu.memory_space<vmem>>, vector<32x1xf32>
      %54 = vector.broadcast %53 : vector<32x1xf32> to vector<32x128xf32>
      %55 = arith.addf %52, %54 : vector<32x128xf32>
      %56 = arith.negf %55 : vector<32x128xf32>
      %57 = math.exp %56 : vector<32x128xf32>
      %cst_29 = arith.constant 1.000000e+00 : f32
      %58 = vector.broadcast %cst_29 : f32 to vector<32x128xf32>
      %59 = arith.addf %58, %57 : vector<32x128xf32>
      %60 = arith.divf %58, %59 : vector<32x128xf32>
      %61 = arith.mulf %55, %60 : vector<32x128xf32>
      %c0_30 = arith.constant 0 : index
      %c0_31 = arith.constant 0 : index
      %62 = vector.load %arg6[%c0_30, %c0_31] : memref<32x8xf32, #tpu.memory_space<vmem>>, vector<32x8xf32>
      %cst_32 = arith.constant dense<0.000000e+00> : vector<32x128xf32>
      %63 = tpu.matmul %62, %47, %cst_32 {dimension_numbers = #tpu.dot_dimension_numbers<[1], [0], [0], [1], [0, 0, 1, 1], [], []>} : vector<32x8xf32>, vector<8x128xf32>, vector<32x128xf32> -> vector<32x128xf32>
      %c0_33 = arith.constant 0 : index
      %c0_34 = arith.constant 0 : index
      %64 = vector.load %arg7[%c0_33, %c0_34] : memref<32x32xf32, #tpu.memory_space<vmem>>, vector<32x32xf32>
      %cst_35 = arith.constant dense<0.000000e+00> : vector<32x128xf32>
      %65 = tpu.matmul %64, %61, %cst_35 {dimension_numbers = #tpu.dot_dimension_numbers<[1], [0], [0], [1], [0, 0, 1, 1], [], []>} : vector<32x32xf32>, vector<32x128xf32>, vector<32x128xf32> -> vector<32x128xf32>
      %66 = arith.addf %63, %65 : vector<32x128xf32>
      %c0_36 = arith.constant 0 : index
      %c0_37 = arith.constant 0 : index
      %67 = vector.load %arg8[%c0_36, %c0_37] : memref<32x1xf32, #tpu.memory_space<vmem>>, vector<32x1xf32>
      %68 = vector.broadcast %67 : vector<32x1xf32> to vector<32x128xf32>
      %69 = arith.addf %66, %68 : vector<32x128xf32>
      %c0_38 = arith.constant 0 : index
      %c0_39 = arith.constant 0 : index
      %70 = vector.load %arg15[%c0_38, %c0_39] : memref<32x128xf32, #tpu.memory_space<vmem>>, vector<32x128xf32>
      tpu.vector_store %arg15[%c0_38, %c0_39], %69 {strides = array<i32>} : memref<32x128xf32, #tpu.memory_space<vmem>>, vector<32x128xf32>,
    } else {
    }
    %c0 = arith.constant 0 : index
    %c0_1 = arith.constant 0 : index
    %3 = vector.load %arg15[%c0, %c0_1] : memref<32x128xf32, #tpu.memory_space<vmem>>, vector<32x128xf32>
    %cst = arith.constant dense<0.000000e+00> : vector<128xf32>
    %4 = vector.multi_reduction <add>, %3, %cst [0] : vector<32x128xf32> to vector<128xf32>
    %5 = vector.shape_cast %4 : vector<128xf32> to vector<1x128xf32>
    %cst_2 = arith.constant 3.200000e+01 : f32
    %6 = vector.broadcast %cst_2 : f32 to vector<1x128xf32>
    %7 = arith.divf %5, %6 : vector<1x128xf32>
    %8 = vector.broadcast %7 : vector<1x128xf32> to vector<32x128xf32>
    %9 = arith.subf %3, %8 : vector<32x128xf32>
    %10 = arith.mulf %9, %9 : vector<32x128xf32>
    %cst_3 = arith.constant dense<0.000000e+00> : vector<128xf32>
    %11 = vector.multi_reduction <add>, %10, %cst_3 [0] : vector<32x128xf32> to vector<128xf32>
    %12 = vector.shape_cast %11 : vector<128xf32> to vector<1x128xf32>
    %cst_4 = arith.constant 3.200000e+01 : f32
    %13 = vector.broadcast %cst_4 : f32 to vector<1x128xf32>
    %14 = arith.divf %12, %13 : vector<1x128xf32>
    %15 = vector.broadcast %7 : vector<1x128xf32> to vector<32x128xf32>
    %16 = arith.subf %3, %15 : vector<32x128xf32>
    %cst_5 = arith.constant 9.99999974E-6 : f32
    %17 = vector.broadcast %cst_5 : f32 to vector<1x128xf32>
    %18 = arith.addf %14, %17 : vector<1x128xf32>
    %19 = math.rsqrt %18 : vector<1x128xf32>
    %20 = vector.broadcast %19 : vector<1x128xf32> to vector<32x128xf32>
    %21 = arith.mulf %16, %20 : vector<32x128xf32>
    %c0_6 = arith.constant 0 : index
    %c0_7 = arith.constant 0 : index
    %c0_8 = arith.constant 0 : index
    %22 = vector.load %arg11[%c0_6, %c0_7, %c0_8] : memref<1x32x2xf32, #tpu.memory_space<vmem>>, vector<1x32x2xf32>
    %23 = vector.shape_cast %22 : vector<1x32x2xf32> to vector<32x2xf32>
    %24 = vector.extract_strided_slice %23 {offsets = [0, 0], sizes = [32, 1], strides = [1, 1]} : vector<32x2xf32> to vector<32x1xf32>
    %25 = vector.extract_strided_slice %23 {offsets = [0, 1], sizes = [32, 1], strides = [1, 1]} : vector<32x2xf32> to vector<32x1xf32>
    %c0_9 = arith.constant 0 : index
    %c0_10 = arith.constant 0 : index
    %c0_11 = arith.constant 0 : index
    %26 = vector.load %arg9[%c0_9, %c0_10, %c0_11] : memref<1x32x32xf32, #tpu.memory_space<vmem>>, vector<1x32x32xf32>
    %27 = vector.shape_cast %26 : vector<1x32x32xf32> to vector<32x32xf32>
    %cst_12 = arith.constant dense<0.000000e+00> : vector<32x128xf32>
    %28 = tpu.matmul %27, %21, %cst_12 {dimension_numbers = #tpu.dot_dimension_numbers<[1], [0], [0], [1], [0, 0, 1, 1], [], []>} : vector<32x32xf32>, vector<32x128xf32>, vector<32x128xf32> -> vector<32x128xf32>
    %29 = vector.broadcast %24 : vector<32x1xf32> to vector<32x128xf32>
    %30 = arith.addf %28, %29 : vector<32x128xf32>
    %31 = arith.negf %30 : vector<32x128xf32>
    %32 = math.exp %31 : vector<32x128xf32>
    %cst_13 = arith.constant 1.000000e+00 : f32
    %33 = vector.broadcast %cst_13 : f32 to vector<32x128xf32>
    %34 = arith.addf %33, %32 : vector<32x128xf32>
    %35 = arith.divf %33, %34 : vector<32x128xf32>
    %36 = arith.mulf %30, %35 : vector<32x128xf32>
    %c0_14 = arith.constant 0 : index
    %c0_15 = arith.constant 0 : index
    %c0_16 = arith.constant 0 : index
    %37 = vector.load %arg10[%c0_14, %c0_15, %c0_16] : memref<1x32x32xf32, #tpu.memory_space<vmem>>, vector<1x32x32xf32>
    %38 = vector.shape_cast %37 : vector<1x32x32xf32> to vector<32x32xf32>
    %cst_17 = arith.constant dense<0.000000e+00> : vector<32x128xf32>
    %39 = tpu.matmul %38, %36, %cst_17 {dimension_numbers = #tpu.dot_dimension_numbers<[1], [0], [0], [1], [0, 0, 1, 1], [], []>} : vector<32x32xf32>, vector<32x128xf32>, vector<32x128xf32> -> vector<32x128xf32>
    %40 = arith.addf %3, %39 : vector<32x128xf32>
    %41 = vector.broadcast %25 : vector<32x1xf32> to vector<32x128xf32>
    %42 = arith.addf %40, %41 : vector<32x128xf32>
    %c0_18 = arith.constant 0 : index
    %c0_19 = arith.constant 0 : index
    %43 = vector.load %arg15[%c0_18, %c0_19] : memref<32x128xf32, #tpu.memory_space<vmem>>, vector<32x128xf32>
    tpu.vector_store %arg15[%c0_18, %c0_19], %42 {strides = array<i32>} : memref<32x128xf32, #tpu.memory_space<vmem>>, vector<32x128xf32>,
    %c3_i32 = arith.constant 3 : i32
    %44 = arith.cmpi eq, %arg1, %c3_i32 : i32
    %45 = arith.extui %44 : i1 to i32
    %c0_i32_20 = arith.constant 0 : i32
    %46 = arith.cmpi ne, %45, %c0_i32_20 : i32
    scf.if %46 {
      %cst_21 = arith.constant dense<0.000000e+00> : vector<128xf32>
      %47 = vector.multi_reduction <add>, %42, %cst_21 [0] : vector<32x128xf32> to vector<128xf32>
      %48 = vector.shape_cast %47 : vector<128xf32> to vector<1x128xf32>
      %cst_22 = arith.constant 3.200000e+01 : f32
      %49 = vector.broadcast %cst_22 : f32 to vector<1x128xf32>
      %50 = arith.divf %48, %49 : vector<1x128xf32>
      %51 = vector.broadcast %50 : vector<1x128xf32> to vector<32x128xf32>
      %52 = arith.subf %42, %51 : vector<32x128xf32>
      %53 = arith.mulf %52, %52 : vector<32x128xf32>
      %cst_23 = arith.constant dense<0.000000e+00> : vector<128xf32>
      %54 = vector.multi_reduction <add>, %53, %cst_23 [0] : vector<32x128xf32> to vector<128xf32>
      %55 = vector.shape_cast %54 : vector<128xf32> to vector<1x128xf32>
      %cst_24 = arith.constant 3.200000e+01 : f32
      %56 = vector.broadcast %cst_24 : f32 to vector<1x128xf32>
      %57 = arith.divf %55, %56 : vector<1x128xf32>
      %58 = vector.broadcast %50 : vector<1x128xf32> to vector<32x128xf32>
      %59 = arith.subf %42, %58 : vector<32x128xf32>
      %cst_25 = arith.constant 9.99999974E-6 : f32
      %60 = vector.broadcast %cst_25 : f32 to vector<1x128xf32>
      %61 = arith.addf %57, %60 : vector<1x128xf32>
      %62 = math.rsqrt %61 : vector<1x128xf32>
      %63 = vector.broadcast %62 : vector<1x128xf32> to vector<32x128xf32>
      %64 = arith.mulf %59, %63 : vector<32x128xf32>
      %c0_26 = arith.constant 0 : index
      %c0_27 = arith.constant 0 : index
      %65 = vector.load %arg12[%c0_26, %c0_27] : memref<8x32xf32, #tpu.memory_space<vmem>>, vector<8x32xf32>
      %cst_28 = arith.constant dense<0.000000e+00> : vector<8x128xf32>
      %66 = tpu.matmul %65, %64, %cst_28 {dimension_numbers = #tpu.dot_dimension_numbers<[1], [0], [0], [1], [0, 0, 1, 1], [], []>} : vector<8x32xf32>, vector<32x128xf32>, vector<8x128xf32> -> vector<8x128xf32>
      %c0_29 = arith.constant 0 : index
      %c0_30 = arith.constant 0 : index
      %67 = vector.load %arg13[%c0_29, %c0_30] : memref<8x1xf32, #tpu.memory_space<vmem>>, vector<8x1xf32>
      %68 = vector.broadcast %67 : vector<8x1xf32> to vector<8x128xf32>
      %69 = arith.addf %66, %68 : vector<8x128xf32>
      %c0_31 = arith.constant 0 : index
      %c0_32 = arith.constant 0 : index
      %70 = vector.load %arg14[%c0_31, %c0_32] : memref<8x128xf32, #tpu.memory_space<vmem>>, vector<8x128xf32>
      tpu.vector_store %arg14[%c0_31, %c0_32], %69 {strides = array<i32>} : memref<8x128xf32, #tpu.memory_space<vmem>>, vector<8x128xf32>,
    } else {
    }
    return
  }
  func.func @transform_0(%arg0: i32, %arg1: i32) -> (i32, i32) {
    %c0_i32 = arith.constant 0 : i32
    %c0_i32_0 = arith.constant 0 : i32
    return %c0_i32, %arg0 : i32, i32
  }
  func.func @transform_1(%arg0: i32, %arg1: i32) -> (i32, i32) {
    %c0_i32 = arith.constant 0 : i32
    %c0_i32_0 = arith.constant 0 : i32
    return %c0_i32, %arg0 : i32, i32
  }
  func.func @transform_2(%arg0: i32, %arg1: i32) -> (i32, i32) {
    %c0_i32 = arith.constant 0 : i32
    %c0_i32_0 = arith.constant 0 : i32
    %c0_i32_1 = arith.constant 0 : i32
    return %c0_i32, %c0_i32_0 : i32, i32
  }
  func.func @transform_3(%arg0: i32, %arg1: i32) -> (i32, i32) {
    %c0_i32 = arith.constant 0 : i32
    %c0_i32_0 = arith.constant 0 : i32
    %c0_i32_1 = arith.constant 0 : i32
    return %c0_i32, %c0_i32_0 : i32, i32
  }
  func.func @transform_4(%arg0: i32, %arg1: i32) -> (i32, i32) {
    %c0_i32 = arith.constant 0 : i32
    %c0_i32_0 = arith.constant 0 : i32
    %c0_i32_1 = arith.constant 0 : i32
    return %c0_i32, %c0_i32_0 : i32, i32
  }
  func.func @transform_5(%arg0: i32, %arg1: i32) -> (i32, i32) {
    %c0_i32 = arith.constant 0 : i32
    %c0_i32_0 = arith.constant 0 : i32
    %c0_i32_1 = arith.constant 0 : i32
    return %c0_i32, %c0_i32_0 : i32, i32
  }
  func.func @transform_6(%arg0: i32, %arg1: i32) -> (i32, i32) {
    %c0_i32 = arith.constant 0 : i32
    %c0_i32_0 = arith.constant 0 : i32
    %c0_i32_1 = arith.constant 0 : i32
    return %c0_i32, %c0_i32_0 : i32, i32
  }
  func.func @transform_7(%arg0: i32, %arg1: i32) -> (i32, i32, i32) {
    %c0_i32 = arith.constant 0 : i32
    %c0_i32_0 = arith.constant 0 : i32
    %c0_i32_1 = arith.constant 0 : i32
    return %arg1, %c0_i32, %c0_i32_0 : i32, i32, i32
  }
  func.func @transform_8(%arg0: i32, %arg1: i32) -> (i32, i32, i32) {
    %c0_i32 = arith.constant 0 : i32
    %c0_i32_0 = arith.constant 0 : i32
    %c0_i32_1 = arith.constant 0 : i32
    return %arg1, %c0_i32, %c0_i32_0 : i32, i32, i32
  }
  func.func @transform_9(%arg0: i32, %arg1: i32) -> (i32, i32, i32) {
    %c0_i32 = arith.constant 0 : i32
    %c0_i32_0 = arith.constant 0 : i32
    %c0_i32_1 = arith.constant 0 : i32
    return %arg1, %c0_i32, %c0_i32_0 : i32, i32, i32
  }
  func.func @transform_10(%arg0: i32, %arg1: i32) -> (i32, i32) {
    %c0_i32 = arith.constant 0 : i32
    %c0_i32_0 = arith.constant 0 : i32
    %c0_i32_1 = arith.constant 0 : i32
    return %c0_i32, %c0_i32_0 : i32, i32
  }
  func.func @transform_11(%arg0: i32, %arg1: i32) -> (i32, i32) {
    %c0_i32 = arith.constant 0 : i32
    %c0_i32_0 = arith.constant 0 : i32
    %c0_i32_1 = arith.constant 0 : i32
    return %c0_i32, %c0_i32_0 : i32, i32
  }
  func.func @transform_12(%arg0: i32, %arg1: i32) -> (i32, i32) {
    %c0_i32 = arith.constant 0 : i32
    %c0_i32_0 = arith.constant 0 : i32
    return %c0_i32, %arg0 : i32, i32
  }
}

module attributes {stable_mosaic.version = 11 : i64} {
  func.func @diffusion_kernel(%arg0: i32, %arg1: i32, %arg2: memref<8x128xf32, #tpu.memory_space<vmem>>, %arg3: memref<1x128xf32, #tpu.memory_space<vmem>>, %arg4: memref<32x1xf32, #tpu.memory_space<vmem>>, %arg5: memref<32x1xf32, #tpu.memory_space<vmem>>, %arg6: memref<32x8xf32, #tpu.memory_space<vmem>>, %arg7: memref<32x32xf32, #tpu.memory_space<vmem>>, %arg8: memref<32x1xf32, #tpu.memory_space<vmem>>, %arg9: memref<1x32x32xf32, #tpu.memory_space<vmem>>, %arg10: memref<1x32x32xf32, #tpu.memory_space<vmem>>, %arg11: memref<1x32x2xf32, #tpu.memory_space<vmem>>, %arg12: memref<8x32xf32, #tpu.memory_space<vmem>>, %arg13: memref<8x1xf32, #tpu.memory_space<vmem>>, %arg14: memref<8x128xf32, #tpu.memory_space<vmem>>, %arg15: memref<32x128xf32, #tpu.memory_space<vmem>>) attributes {dimension_semantics = [#tpu.dimension_semantics<parallel>, #tpu.dimension_semantics<arbitrary>], iteration_bounds = array<i64: 1, 4>, scalar_prefetch = 0 : i64, scratch_operands = 1 : i64, tpu.core_type = #tpu.core_type<tc>, window_params = [{transform_indices = @transform_0, window_bounds = array<i64: 8, 128>}, {transform_indices = @transform_1, window_bounds = array<i64: 1, 128>}, {pipeline_mode = #tpu.pipeline_mode<synchronous>, transform_indices = @transform_2, window_bounds = array<i64: 32, 1>}, {pipeline_mode = #tpu.pipeline_mode<synchronous>, transform_indices = @transform_3, window_bounds = array<i64: 32, 1>}, {pipeline_mode = #tpu.pipeline_mode<synchronous>, transform_indices = @transform_4, window_bounds = array<i64: 32, 8>}, {pipeline_mode = #tpu.pipeline_mode<synchronous>, transform_indices = @transform_5, window_bounds = array<i64: 32, 32>}, {pipeline_mode = #tpu.pipeline_mode<synchronous>, transform_indices = @transform_6, window_bounds = array<i64: 32, 1>}, {transform_indices = @transform_7, window_bounds = array<i64: 1, 32, 32>}, {transform_indices = @transform_8, window_bounds = array<i64: 1, 32, 32>}, {transform_indices = @transform_9, window_bounds = array<i64: 1, 32, 2>}, {pipeline_mode = #tpu.pipeline_mode<synchronous>, transform_indices = @transform_10, window_bounds = array<i64: 8, 32>}, {pipeline_mode = #tpu.pipeline_mode<synchronous>, transform_indices = @transform_11, window_bounds = array<i64: 8, 1>}, {transform_indices = @transform_12, window_bounds = array<i64: 8, 128>}]} {
    %c0_i32 = arith.constant 0 : i32
    %0 = arith.cmpi eq, %arg1, %c0_i32 : i32
    %1 = arith.extui %0 : i1 to i32
    %c0_i32_0 = arith.constant 0 : i32
    %2 = arith.cmpi ne, %1, %c0_i32_0 : i32
    scf.if %2 {
      %c0_21 = arith.constant 0 : index
      %c0_22 = arith.constant 0 : index
      %47 = vector.load %arg2[%c0_21, %c0_22] : memref<8x128xf32, #tpu.memory_space<vmem>>, vector<8x128xf32>
      %c0_23 = arith.constant 0 : index
      %c0_24 = arith.constant 0 : index
      %48 = vector.load %arg3[%c0_23, %c0_24] : memref<1x128xf32, #tpu.memory_space<vmem>>, vector<1x128xf32>
      %c0_25 = arith.constant 0 : index
      %c0_26 = arith.constant 0 : index
      %49 = vector.load %arg4[%c0_25, %c0_26] : memref<32x1xf32, #tpu.memory_space<vmem>>, vector<32x1xf32>
      %50 = vector.broadcast %49 : vector<32x1xf32> to vector<32x128xf32>
      %51 = vector.broadcast %48 : vector<1x128xf32> to vector<32x128xf32>
      %52 = arith.mulf %50, %51 : vector<32x128xf32>
      %c0_27 = arith.constant 0 : index
      %c0_28 = arith.constant 0 : index
      %53 = vector.load %arg5[%c0_27, %c0_28] : memref<32x1xf32, #tpu.memory_space<vmem>>, vector<32x1xf32>
      %54 = vector.broadcast %53 : vector<32x1xf32> to vector<32x128xf32>
      %55 = arith.addf %52, %54 : vector<32x128xf32>
      %56 = arith.negf %55 : vector<32x128xf32>
      %57 = math.exp %56 : vector<32x128xf32>
      %cst_29 = arith.constant 1.000000e+00 : f32
      %58 = vector.broadcast %cst_29 : f32 to vector<32x128xf32>
      %59 = arith.addf %58, %57 : vector<32x128xf32>
      %60 = arith.divf %58, %59 : vector<32x128xf32>
      %61 = arith.mulf %55, %60 : vector<32x128xf32>
      %c0_30 = arith.constant 0 : index
      %c0_31 = arith.constant 0 : index
      %62 = vector.load %arg6[%c0_30, %c0_31] : memref<32x8xf32, #tpu.memory_space<vmem>>, vector<32x8xf32>
      %cst_32 = arith.constant dense<0.000000e+00> : vector<32x128xf32>
      %63 = tpu.matmul %62, %47, %cst_32 {dimension_numbers = #tpu.dot_dimension_numbers<[1], [0], [0], [1], [0, 0, 1, 1], [], []>} : vector<32x8xf32>, vector<8x128xf32>, vector<32x128xf32> -> vector<32x128xf32>
      %c0_33 = arith.constant 0 : index
      %c0_34 = arith.constant 0 : index
      %64 = vector.load %arg7[%c0_33, %c0_34] : memref<32x32xf32, #tpu.memory_space<vmem>>, vector<32x32xf32>
      %cst_35 = arith.constant dense<0.000000e+00> : vector<32x128xf32>
      %65 = tpu.matmul %64, %61, %cst_35 {dimension_numbers = #tpu.dot_dimension_numbers<[1], [0], [0], [1], [0, 0, 1, 1], [], []>} : vector<32x32xf32>, vector<32x128xf32>, vector<32x128xf32> -> vector<32x128xf32>
      %66 = arith.addf %63, %65 : vector<32x128xf32>
      %c0_36 = arith.constant 0 : index
      %c0_37 = arith.constant 0 : index
      %67 = vector.load %arg8[%c0_36, %c0_37] : memref<32x1xf32, #tpu.memory_space<vmem>>, vector<32x1xf32>
      %68 = vector.broadcast %67 : vector<32x1xf32> to vector<32x128xf32>
      %69 = arith.addf %66, %68 : vector<32x128xf32>
      %c0_38 = arith.constant 0 : index
      %c0_39 = arith.constant 0 : index
      %70 = vector.load %arg15[%c0_38, %c0_39] : memref<32x128xf32, #tpu.memory_space<vmem>>, vector<32x128xf32>
      tpu.vector_store %arg15[%c0_38, %c0_39], %69 {strides = array<i32>} : memref<32x128xf32, #tpu.memory_space<vmem>>, vector<32x128xf32>,
    } else {
    }
    %c0 = arith.constant 0 : index
    %c0_1 = arith.constant 0 : index
    %3 = vector.load %arg15[%c0, %c0_1] : memref<32x128xf32, #tpu.memory_space<vmem>>, vector<32x128xf32>
    %cst = arith.constant dense<0.000000e+00> : vector<128xf32>
    %4 = vector.multi_reduction <add>, %3, %cst [0] : vector<32x128xf32> to vector<128xf32>
    %5 = vector.shape_cast %4 : vector<128xf32> to vector<1x128xf32>
    %cst_2 = arith.constant 3.200000e+01 : f32
    %6 = vector.broadcast %cst_2 : f32 to vector<1x128xf32>
    %7 = arith.divf %5, %6 : vector<1x128xf32>
    %8 = vector.broadcast %7 : vector<1x128xf32> to vector<32x128xf32>
    %9 = arith.subf %3, %8 : vector<32x128xf32>
    %10 = arith.mulf %9, %9 : vector<32x128xf32>
    %cst_3 = arith.constant dense<0.000000e+00> : vector<128xf32>
    %11 = vector.multi_reduction <add>, %10, %cst_3 [0] : vector<32x128xf32> to vector<128xf32>
    %12 = vector.shape_cast %11 : vector<128xf32> to vector<1x128xf32>
    %cst_4 = arith.constant 3.200000e+01 : f32
    %13 = vector.broadcast %cst_4 : f32 to vector<1x128xf32>
    %14 = arith.divf %12, %13 : vector<1x128xf32>
    %15 = vector.broadcast %7 : vector<1x128xf32> to vector<32x128xf32>
    %16 = arith.subf %3, %15 : vector<32x128xf32>
    %cst_5 = arith.constant 9.99999974E-6 : f32
    %17 = vector.broadcast %cst_5 : f32 to vector<1x128xf32>
    %18 = arith.addf %14, %17 : vector<1x128xf32>
    %19 = math.rsqrt %18 : vector<1x128xf32>
    %20 = vector.broadcast %19 : vector<1x128xf32> to vector<32x128xf32>
    %21 = arith.mulf %16, %20 : vector<32x128xf32>
    %c0_6 = arith.constant 0 : index
    %c0_7 = arith.constant 0 : index
    %c0_8 = arith.constant 0 : index
    %22 = vector.load %arg11[%c0_6, %c0_7, %c0_8] : memref<1x32x2xf32, #tpu.memory_space<vmem>>, vector<1x32x2xf32>
    %23 = vector.shape_cast %22 : vector<1x32x2xf32> to vector<32x2xf32>
    %24 = vector.extract_strided_slice %23 {offsets = [0, 0], sizes = [32, 1], strides = [1, 1]} : vector<32x2xf32> to vector<32x1xf32>
    %25 = vector.extract_strided_slice %23 {offsets = [0, 1], sizes = [32, 1], strides = [1, 1]} : vector<32x2xf32> to vector<32x1xf32>
    %c0_9 = arith.constant 0 : index
    %c0_10 = arith.constant 0 : index
    %c0_11 = arith.constant 0 : index
    %26 = vector.load %arg9[%c0_9, %c0_10, %c0_11] : memref<1x32x32xf32, #tpu.memory_space<vmem>>, vector<1x32x32xf32>
    %27 = vector.shape_cast %26 : vector<1x32x32xf32> to vector<32x32xf32>
    %cst_12 = arith.constant dense<0.000000e+00> : vector<32x128xf32>
    %28 = tpu.matmul %27, %21, %cst_12 {dimension_numbers = #tpu.dot_dimension_numbers<[1], [0], [0], [1], [0, 0, 1, 1], [], []>} : vector<32x32xf32>, vector<32x128xf32>, vector<32x128xf32> -> vector<32x128xf32>
    %29 = vector.broadcast %24 : vector<32x1xf32> to vector<32x128xf32>
    %30 = arith.addf %28, %29 : vector<32x128xf32>
    %31 = arith.negf %30 : vector<32x128xf32>
    %32 = math.exp %31 : vector<32x128xf32>
    %cst_13 = arith.constant 1.000000e+00 : f32
    %33 = vector.broadcast %cst_13 : f32 to vector<32x128xf32>
    %34 = arith.addf %33, %32 : vector<32x128xf32>
    %35 = arith.divf %33, %34 : vector<32x128xf32>
    %36 = arith.mulf %30, %35 : vector<32x128xf32>
    %c0_14 = arith.constant 0 : index
    %c0_15 = arith.constant 0 : index
    %c0_16 = arith.constant 0 : index
    %37 = vector.load %arg10[%c0_14, %c0_15, %c0_16] : memref<1x32x32xf32, #tpu.memory_space<vmem>>, vector<1x32x32xf32>
    %38 = vector.shape_cast %37 : vector<1x32x32xf32> to vector<32x32xf32>
    %cst_17 = arith.constant dense<0.000000e+00> : vector<32x128xf32>
    %39 = tpu.matmul %38, %36, %cst_17 {dimension_numbers = #tpu.dot_dimension_numbers<[1], [0], [0], [1], [0, 0, 1, 1], [], []>} : vector<32x32xf32>, vector<32x128xf32>, vector<32x128xf32> -> vector<32x128xf32>
    %40 = arith.addf %3, %39 : vector<32x128xf32>
    %41 = vector.broadcast %25 : vector<32x1xf32> to vector<32x128xf32>
    %42 = arith.addf %40, %41 : vector<32x128xf32>
    %c0_18 = arith.constant 0 : index
    %c0_19 = arith.constant 0 : index
    %43 = vector.load %arg15[%c0_18, %c0_19] : memref<32x128xf32, #tpu.memory_space<vmem>>, vector<32x128xf32>
    tpu.vector_store %arg15[%c0_18, %c0_19], %42 {strides = array<i32>} : memref<32x128xf32, #tpu.memory_space<vmem>>, vector<32x128xf32>,
    %c3_i32 = arith.constant 3 : i32
    %44 = arith.cmpi eq, %arg1, %c3_i32 : i32
    %45 = arith.extui %44 : i1 to i32
    %c0_i32_20 = arith.constant 0 : i32
    %46 = arith.cmpi ne, %45, %c0_i32_20 : i32
    scf.if %46 {
      %cst_21 = arith.constant dense<0.000000e+00> : vector<128xf32>
      %47 = vector.multi_reduction <add>, %42, %cst_21 [0] : vector<32x128xf32> to vector<128xf32>
      %48 = vector.shape_cast %47 : vector<128xf32> to vector<1x128xf32>
      %cst_22 = arith.constant 3.200000e+01 : f32
      %49 = vector.broadcast %cst_22 : f32 to vector<1x128xf32>
      %50 = arith.divf %48, %49 : vector<1x128xf32>
      %51 = vector.broadcast %50 : vector<1x128xf32> to vector<32x128xf32>
      %52 = arith.subf %42, %51 : vector<32x128xf32>
      %53 = arith.mulf %52, %52 : vector<32x128xf32>
      %cst_23 = arith.constant dense<0.000000e+00> : vector<128xf32>
      %54 = vector.multi_reduction <add>, %53, %cst_23 [0] : vector<32x128xf32> to vector<128xf32>
      %55 = vector.shape_cast %54 : vector<128xf32> to vector<1x128xf32>
      %cst_24 = arith.constant 3.200000e+01 : f32
      %56 = vector.broadcast %cst_24 : f32 to vector<1x128xf32>
      %57 = arith.divf %55, %56 : vector<1x128xf32>
      %58 = vector.broadcast %50 : vector<1x128xf32> to vector<32x128xf32>
      %59 = arith.subf %42, %58 : vector<32x128xf32>
      %cst_25 = arith.constant 9.99999974E-6 : f32
      %60 = vector.broadcast %cst_25 : f32 to vector<1x128xf32>
      %61 = arith.addf %57, %60 : vector<1x128xf32>
      %62 = math.rsqrt %61 : vector<1x128xf32>
      %63 = vector.broadcast %62 : vector<1x128xf32> to vector<32x128xf32>
      %64 = arith.mulf %59, %63 : vector<32x128xf32>
      %c0_26 = arith.constant 0 : index
      %c0_27 = arith.constant 0 : index
      %65 = vector.load %arg12[%c0_26, %c0_27] : memref<8x32xf32, #tpu.memory_space<vmem>>, vector<8x32xf32>
      %cst_28 = arith.constant dense<0.000000e+00> : vector<8x128xf32>
      %66 = tpu.matmul %65, %64, %cst_28 {dimension_numbers = #tpu.dot_dimension_numbers<[1], [0], [0], [1], [0, 0, 1, 1], [], []>} : vector<8x32xf32>, vector<32x128xf32>, vector<8x128xf32> -> vector<8x128xf32>
      %c0_29 = arith.constant 0 : index
      %c0_30 = arith.constant 0 : index
      %67 = vector.load %arg13[%c0_29, %c0_30] : memref<8x1xf32, #tpu.memory_space<vmem>>, vector<8x1xf32>
      %68 = vector.broadcast %67 : vector<8x1xf32> to vector<8x128xf32>
      %69 = arith.addf %66, %68 : vector<8x128xf32>
      %c0_31 = arith.constant 0 : index
      %c0_32 = arith.constant 0 : index
      %70 = vector.load %arg14[%c0_31, %c0_32] : memref<8x128xf32, #tpu.memory_space<vmem>>, vector<8x128xf32>
      tpu.vector_store %arg14[%c0_31, %c0_32], %69 {strides = array<i32>} : memref<8x128xf32, #tpu.memory_space<vmem>>, vector<8x128xf32>,
    } else {
    }
    return
  }
  func.func @transform_0(%arg0: i32, %arg1: i32) -> (i32, i32) {
    %c0_i32 = arith.constant 0 : i32
    %c0_i32_0 = arith.constant 0 : i32
    return %c0_i32, %arg0 : i32, i32
  }
  func.func @transform_1(%arg0: i32, %arg1: i32) -> (i32, i32) {
    %c0_i32 = arith.constant 0 : i32
    %c0_i32_0 = arith.constant 0 : i32
    return %c0_i32, %arg0 : i32, i32
  }
  func.func @transform_2(%arg0: i32, %arg1: i32) -> (i32, i32) {
    %c0_i32 = arith.constant 0 : i32
    %c0_i32_0 = arith.constant 0 : i32
    %c0_i32_1 = arith.constant 0 : i32
    return %c0_i32, %c0_i32_0 : i32, i32
  }
  func.func @transform_3(%arg0: i32, %arg1: i32) -> (i32, i32) {
    %c0_i32 = arith.constant 0 : i32
    %c0_i32_0 = arith.constant 0 : i32
    %c0_i32_1 = arith.constant 0 : i32
    return %c0_i32, %c0_i32_0 : i32, i32
  }
  func.func @transform_4(%arg0: i32, %arg1: i32) -> (i32, i32) {
    %c0_i32 = arith.constant 0 : i32
    %c0_i32_0 = arith.constant 0 : i32
    %c0_i32_1 = arith.constant 0 : i32
    return %c0_i32, %c0_i32_0 : i32, i32
  }
  func.func @transform_5(%arg0: i32, %arg1: i32) -> (i32, i32) {
    %c0_i32 = arith.constant 0 : i32
    %c0_i32_0 = arith.constant 0 : i32
    %c0_i32_1 = arith.constant 0 : i32
    return %c0_i32, %c0_i32_0 : i32, i32
  }
  func.func @transform_6(%arg0: i32, %arg1: i32) -> (i32, i32) {
    %c0_i32 = arith.constant 0 : i32
    %c0_i32_0 = arith.constant 0 : i32
    %c0_i32_1 = arith.constant 0 : i32
    return %c0_i32, %c0_i32_0 : i32, i32
  }
  func.func @transform_7(%arg0: i32, %arg1: i32) -> (i32, i32, i32) {
    %c0_i32 = arith.constant 0 : i32
    %c0_i32_0 = arith.constant 0 : i32
    %c0_i32_1 = arith.constant 0 : i32
    return %arg1, %c0_i32, %c0_i32_0 : i32, i32, i32
  }
  func.func @transform_8(%arg0: i32, %arg1: i32) -> (i32, i32, i32) {
    %c0_i32 = arith.constant 0 : i32
    %c0_i32_0 = arith.constant 0 : i32
    %c0_i32_1 = arith.constant 0 : i32
    return %arg1, %c0_i32, %c0_i32_0 : i32, i32, i32
  }
  func.func @transform_9(%arg0: i32, %arg1: i32) -> (i32, i32, i32) {
    %c0_i32 = arith.constant 0 : i32
    %c0_i32_0 = arith.constant 0 : i32
    %c0_i32_1 = arith.constant 0 : i32
    return %arg1, %c0_i32, %c0_i32_0 : i32, i32, i32
  }
  func.func @transform_10(%arg0: i32, %arg1: i32) -> (i32, i32) {
    %c0_i32 = arith.constant 0 : i32
    %c0_i32_0 = arith.constant 0 : i32
    %c0_i32_1 = arith.constant 0 : i32
    return %c0_i32, %c0_i32_0 : i32, i32
  }
  func.func @transform_11(%arg0: i32, %arg1: i32) -> (i32, i32) {
    %c0_i32 = arith.constant 0 : i32
    %c0_i32_0 = arith.constant 0 : i32
    %c0_i32_1 = arith.constant 0 : i32
    return %c0_i32, %c0_i32_0 : i32, i32
  }
  func.func @transform_12(%arg0: i32, %arg1: i32) -> (i32, i32) {
    %c0_i32 = arith.constant 0 : i32
    %c0_i32_0 = arith.constant 0 : i32
    return %c0_i32, %arg0 : i32, i32
  }
}

</mosaic_0001>

<llo_original>
// kernel: tpu_custom_call.1
$region0: #{tpu_custom_call.1}
  #allocation0 [shape = 'u32[]', space=smem, size = 0x4, offset = 0x4, fixed_abs, tag = 'smem constant byte address 0x4 - core index']
  #allocation1 [shape = 'u32[144,128]{1,0:T(1,128)}', space=vmem, size = 0x12000, scoped, tag = 'internal scratch']
  #allocation2 [shape = 'f32[32,128]{1,0:T(8,128)}', space=vmem, size = 0x4000, scoped, tag = 'scratch operand']
  %s0 = inlined_call_operand.hbm [shape: f32[8,128], index: 0, kind: input, shape index: {}]
  %s1 = inlined_call_operand.hbm [shape: f32[1,128], index: 1, kind: input, shape index: {}]
  %s2 = inlined_call_operand.hbm [shape: f32[32,1], index: 2, kind: input, shape index: {}]
  %s3 = inlined_call_operand.hbm [shape: f32[32,1], index: 3, kind: input, shape index: {}]
  %s4 = inlined_call_operand.hbm [shape: f32[32,8], index: 4, kind: input, shape index: {}]
  %s5 = inlined_call_operand.hbm [shape: f32[32,32], index: 5, kind: input, shape index: {}]
  %s6 = inlined_call_operand.hbm [shape: f32[32,1], index: 6, kind: input, shape index: {}]
  %s7 = inlined_call_operand.hbm [shape: f32[4,32,32], index: 7, kind: input, shape index: {}]
  %s8 = inlined_call_operand.hbm [shape: f32[4,32,32], index: 8, kind: input, shape index: {}]
  %s9 = inlined_call_operand.hbm [shape: f32[4,32,2], index: 9, kind: input, shape index: {}]
  %s10 = inlined_call_operand.hbm [shape: f32[8,32], index: 10, kind: input, shape index: {}]
  %s11 = inlined_call_operand.hbm [shape: f32[8,1], index: 11, kind: input, shape index: {}]
  %s12 = inlined_call_operand.hbm [shape: f32[8,128], index: 12, kind: output, shape index: {}]
  %s13 = sld [smem:[#allocation0]]
  $region137: #{tpu_custom_call.1} parent=0
    _
  %s15 = ssub.s32 1, %s13
  %s16 = scalar_select 0, %s15, %s13
  $region1: #{tpu_custom_call.1} parent=0
    #allocation3 [shape = 'u8[4096]{0}', space=vmem, size = 0x1000, scoped, tag = 'input window, operand 0, single buffered']
    #allocation4 [shape = 's32[2]{0}', space=sflag, size = 0x8, scoped, tag = 'scoped memory for tpu_custom_call.1']
    #allocation5 [shape = 's32[2]{0}', space=sflag, size = 0x8, scoped, tag = 'scoped memory for tpu_custom_call.1']
    #allocation6 [shape = 'u8[512]{0}', space=vmem, size = 0x400, scoped, tag = 'input window, operand 1, single buffered']
    #allocation7 [shape = 's32[1]{0}', space=sflag, size = 0x4, scoped, tag = 'scoped memory for tpu_custom_call.1']
    #allocation8 [shape = 'u8[16384]{0}', space=vmem, size = 0x4000, scoped, tag = 'input window, operand 2, single buffered']
    #allocation9 [shape = 'u8[16384]{0}', space=vmem, size = 0x4000, scoped, tag = 'input window, operand 3, single buffered']
    #allocation10 [shape = 's32[1]{0}', space=sflag, size = 0x4, scoped, tag = 'scoped memory for tpu_custom_call.1']
    #allocation11 [shape = 'u8[16384]{0}', space=vmem, size = 0x4000, scoped, tag = 'input window, operand 4, single buffered']
    #allocation12 [shape = 'u8[16384]{0}', space=vmem, size = 0x4000, scoped, tag = 'input window, operand 5, single buffered']
    #allocation13 [shape = 's32[1]{0}', space=sflag, size = 0x4, scoped, tag = 'scoped memory for tpu_custom_call.1']
    #allocation14 [shape = 'u8[16384]{0}', space=vmem, size = 0x4000, scoped, tag = 'input window, operand 6, single buffered']
    #allocation15 [shape = 'u8[32768]{0}', space=vmem, size = 0x8000, scoped, tag = 'input window, operand 7']
    #allocation16 [shape = 's32[2]{0}', space=sflag, size = 0x8, scoped, tag = 'scoped memory for tpu_custom_call.1']
    #allocation17 [shape = 'u8[32768]{0}', space=vmem, size = 0x8000, scoped, tag = 'input window, operand 8']
    #allocation18 [shape = 'u8[32768]{0}', space=vmem, size = 0x8000, scoped, tag = 'input window, operand 9']
    #allocation19 [shape = 's32[2]{0}', space=sflag, size = 0x8, scoped, tag = 'scoped memory for tpu_custom_call.1']
    #allocation20 [shape = 'u8[4096]{0}', space=vmem, size = 0x1000, scoped, tag = 'input window, operand 10, single buffered']
    #allocation21 [shape = 'u8[4096]{0}', space=vmem, size = 0x1000, scoped, tag = 'input window, operand 11, single buffered']
    #allocation22 [shape = 's32[1]{0}', space=sflag, size = 0x4, scoped, tag = 'scoped memory for tpu_custom_call.1']
    #allocation23 [shape = 'u8[4096]{0}', space=vmem, size = 0x1000, scoped, tag = 'output window, operand 0, single buffered']
    %17 = vsyncpa [#allocation4], 0
    %18 = vsyncpa [#allocation7], 0
    %19 = vsyncpa [#allocation10], 0
    %20 = vsyncpa [#allocation13], 0
    %21 = vsyncpa [#allocation16], 0
    %s22 = scalar_lea.sflag [#allocation16], 1
    %23 = vsyncpa %s22, 0
    %24 = vsyncpa [#allocation19], 0
    %s25 = scalar_lea.sflag [#allocation19], 1
    %26 = vsyncpa %s25, 0
    %27 = vsyncpa [#allocation22], 0
    %28 = vsyncpa [#allocation5], 0
    loop: start=0, step=1, limit=6
    $region2: #{tpu_custom_call.1} parent=1 // loop_pre_header
      _
    $region3: #{tpu_custom_call.1} parent=1 // loop_header
      %s30 = sphi 0, %s34
      %p31 = scmp.ge.s32.totalorder %s30, 6
      %s37 = sphi 0, %s49
      %s38 = sphi 0, %s45
      %s39 = sphi 0, %s37
      %s40 = sphi 0, %s38
      %s41 = sphi 0, %s39
      %s42 = sphi 0, %s40
      %s52 = sphi 0, %s54
      %s55 = sphi 0, %s52
      %s56 = sphi 0, %s55
      %s72 = sphi 0, %s56
      %s78 = sphi 0, %s80
      %s81 = sphi 0, %s78
      %s82 = sphi 0, %s81
      %s98 = sphi 0, %s82
      %s102 = sphi 0, %s102
      %s104 = sphi 0, %s102
      %s105 = sphi 0, %s104
      %s119 = sphi 0, %s105
      %s123 = sphi 0, %s123
      %s125 = sphi 0, %s123
      %s126 = sphi 0, %s125
      %s140 = sphi 0, %s126
      %s144 = sphi 0, %s144
      %s146 = sphi 0, %s144
      %s147 = sphi 0, %s146
      %s161 = sphi 0, %s147
      %s165 = sphi 0, %s165
      %s167 = sphi 0, %s165
      %s168 = sphi 0, %s167
      %s182 = sphi 0, %s168
      %s186 = sphi 0, %s186
      %s188 = sphi 0, %s186
      %s189 = sphi 0, %s188
      %s203 = sphi 0, %s189
      %s209 = sphi 0, %s211
      %s212 = sphi 0, %s209
      %s213 = sphi 0, %s212
      %s229 = sphi 0, %s213
      %s235 = sphi 0, %s237
      %s238 = sphi 0, %s235
      %s239 = sphi 0, %s238
      %s255 = sphi 0, %s239
      %s261 = sphi 0, %s263
      %s264 = sphi 0, %s261
      %s265 = sphi 0, %s264
      %s281 = sphi 0, %s265
      %s285 = sphi 0, %s285
      %s287 = sphi 0, %s285
      %s288 = sphi 0, %s287
      %s302 = sphi 0, %s288
      %s306 = sphi 0, %s306
      %s308 = sphi 0, %s306
      %s309 = sphi 0, %s308
      %s323 = sphi 0, %s309
      %s329 = sphi 0, %s331
      %s332 = sphi 0, %s329
      %s333 = sphi 0, %s332
      %s349 = sphi 0, %s333
    $region4: #{tpu_custom_call.1} parent=1 // loop_header_branch
      %33 = sbr.rel (%p31) target = $region8
    $region5: #{tpu_custom_call.1} parent=1 // loop_body
      %s35 = ssub.s32 %s30, 1
      %s36 = ssub.s32 %s30, 2
      %s43 = sadd.s32 1, %s38
      %p44 = scmp.ge.s32.totalorder %s43, 4
      %s45 = scalar_select %p44, 0, %s43
      %s46 = sadd.s32 1, %s37
      %s47 = scalar_select %p44, %s46, %s37
      %p48 = scmp.ge.s32.totalorder %s47, 1
      %s49 = scalar_select %p48, 0, %s47
      %s50 = ssub.s32 %s37, %s49
      %p51 = scmp.eq.s32.totalorder %s50, 0
      %s53 = sadd.s32 %s52, 1
      %s54 = scalar_select %p51, %s52, %s53
      %p57 = pneg %p51
      %p58 = scmp.eq.s32.totalorder %s30, 3
      %p59 = por %p57, %p58
      %p60 = scmp.ne.s32.totalorder %s52, %s55
      %p61 = scmp.eq.s32.totalorder %s30, 0
      %p62 = por %p60, %p61
      %p63 = scmp.ne.s32.totalorder %s52, %s55
      %p64 = scmp.eq.s32.totalorder %s35, 3
      %p65 = por %p63, %p64
      %p66 = scmp.ne.s32.totalorder %s55, %s56
      %p67 = scmp.eq.s32.totalorder %s35, 0
      %p68 = por %p66, %p67
      %p69 = scmp.ne.s32.totalorder %s55, %s56
      %p70 = scmp.eq.s32.totalorder %s36, 3
      %p71 = por %p69, %p70
      %p73 = scmp.ne.s32.totalorder %s56, %s72
      %p74 = scmp.eq.s32.totalorder %s36, 0
      %p75 = por %p73, %p74
      %s76 = ssub.s32 %s37, %s49
      %p77 = scmp.eq.s32.totalorder %s76, 0
      %s79 = sadd.s32 %s78, 1
      %s80 = scalar_select %p77, %s78, %s79
      %p83 = pneg %p77
      %p84 = scmp.eq.s32.totalorder %s30, 3
      %p85 = por %p83, %p84
      %p86 = scmp.ne.s32.totalorder %s78, %s81
      %p87 = scmp.eq.s32.totalorder %s30, 0
      %p88 = por %p86, %p87
      %p89 = scmp.ne.s32.totalorder %s78, %s81
      %p90 = scmp.eq.s32.totalorder %s35, 3
      %p91 = por %p89, %p90
      %p92 = scmp.ne.s32.totalorder %s81, %s82
      %p93 = scmp.eq.s32.totalorder %s35, 0
      %p94 = por %p92, %p93
      %p95 = scmp.ne.s32.totalorder %s81, %s82
      %p96 = scmp.eq.s32.totalorder %s36, 3
      %p97 = por %p95, %p96
      %p99 = scmp.ne.s32.totalorder %s82, %s98
      %p100 = scmp.eq.s32.totalorder %s36, 0
      %p101 = por %p99, %p100
      %s103 = sadd.s32 %s102, 1
      %p106 = scmp.eq.s32.totalorder %s30, 3
      %p107 = scmp.ne.s32.totalorder %s102, %s104
      %p108 = scmp.eq.s32.totalorder %s30, 0
      %p109 = por %p107, %p108
      %p110 = scmp.ne.s32.totalorder %s102, %s104
      %p111 = scmp.eq.s32.totalorder %s35, 3
      %p112 = por %p110, %p111
      %p113 = scmp.ne.s32.totalorder %s104, %s105
      %p114 = scmp.eq.s32.totalorder %s35, 0
      %p115 = por %p113, %p114
      %p116 = scmp.ne.s32.totalorder %s104, %s105
      %p117 = scmp.eq.s32.totalorder %s36, 3
      %p118 = por %p116, %p117
      %p120 = scmp.ne.s32.totalorder %s105, %s119
      %p121 = scmp.eq.s32.totalorder %s36, 0
      %p122 = por %p120, %p121
      %s124 = sadd.s32 %s123, 1
      %p127 = scmp.eq.s32.totalorder %s30, 3
      %p128 = scmp.ne.s32.totalorder %s123, %s125
      %p129 = scmp.eq.s32.totalorder %s30, 0
      %p130 = por %p128, %p129
      %p131 = scmp.ne.s32.totalorder %s123, %s125
      %p132 = scmp.eq.s32.totalorder %s35, 3
      %p133 = por %p131, %p132
      %p134 = scmp.ne.s32.totalorder %s125, %s126
      %p135 = scmp.eq.s32.totalorder %s35, 0
      %p136 = por %p134, %p135
      %p137 = scmp.ne.s32.totalorder %s125, %s126
      %p138 = scmp.eq.s32.totalorder %s36, 3
      %p139 = por %p137, %p138
      %p141 = scmp.ne.s32.totalorder %s126, %s140
      %p142 = scmp.eq.s32.totalorder %s36, 0
      %p143 = por %p141, %p142
      %s145 = sadd.s32 %s144, 1
      %p148 = scmp.eq.s32.totalorder %s30, 3
      %p149 = scmp.ne.s32.totalorder %s144, %s146
      %p150 = scmp.eq.s32.totalorder %s30, 0
      %p151 = por %p149, %p150
      %p152 = scmp.ne.s32.totalorder %s144, %s146
      %p153 = scmp.eq.s32.totalorder %s35, 3
      %p154 = por %p152, %p153
      %p155 = scmp.ne.s32.totalorder %s146, %s147
      %p156 = scmp.eq.s32.totalorder %s35, 0
      %p157 = por %p155, %p156
      %p158 = scmp.ne.s32.totalorder %s146, %s147
      %p159 = scmp.eq.s32.totalorder %s36, 3
      %p160 = por %p158, %p159
      %p162 = scmp.ne.s32.totalorder %s147, %s161
      %p163 = scmp.eq.s32.totalorder %s36, 0
      %p164 = por %p162, %p163
      %s166 = sadd.s32 %s165, 1
      %p169 = scmp.eq.s32.totalorder %s30, 3
      %p170 = scmp.ne.s32.totalorder %s165, %s167
      %p171 = scmp.eq.s32.totalorder %s30, 0
      %p172 = por %p170, %p171
      %p173 = scmp.ne.s32.totalorder %s165, %s167
      %p174 = scmp.eq.s32.totalorder %s35, 3
      %p175 = por %p173, %p174
      %p176 = scmp.ne.s32.totalorder %s167, %s168
      %p177 = scmp.eq.s32.totalorder %s35, 0
      %p178 = por %p176, %p177
      %p179 = scmp.ne.s32.totalorder %s167, %s168
      %p180 = scmp.eq.s32.totalorder %s36, 3
      %p181 = por %p179, %p180
      %p183 = scmp.ne.s32.totalorder %s168, %s182
      %p184 = scmp.eq.s32.totalorder %s36, 0
      %p185 = por %p183, %p184
      %s187 = sadd.s32 %s186, 1
      %p190 = scmp.eq.s32.totalorder %s30, 3
      %p191 = scmp.ne.s32.totalorder %s186, %s188
      %p192 = scmp.eq.s32.totalorder %s30, 0
      %p193 = por %p191, %p192
      %p194 = scmp.ne.s32.totalorder %s186, %s188
      %p195 = scmp.eq.s32.totalorder %s35, 3
      %p196 = por %p194, %p195
      %p197 = scmp.ne.s32.totalorder %s188, %s189
      %p198 = scmp.eq.s32.totalorder %s35, 0
      %p199 = por %p197, %p198
      %p200 = scmp.ne.s32.totalorder %s188, %s189
      %p201 = scmp.eq.s32.totalorder %s36, 3
      %p202 = por %p200, %p201
      %p204 = scmp.ne.s32.totalorder %s189, %s203
      %p205 = scmp.eq.s32.totalorder %s36, 0
      %p206 = por %p204, %p205
      %s207 = ssub.s32 %s38, %s45
      %p208 = scmp.eq.s32.totalorder %s207, 0
      %s210 = sadd.s32 %s209, 1
      %s211 = scalar_select %p208, %s209, %s210
      %p214 = pneg %p208
      %p215 = scmp.eq.s32.totalorder %s30, 3
      %p216 = por %p214, %p215
      %p217 = scmp.ne.s32.totalorder %s209, %s212
      %p218 = scmp.eq.s32.totalorder %s30, 0
      %p219 = por %p217, %p218
      %p220 = scmp.ne.s32.totalorder %s209, %s212
      %p221 = scmp.eq.s32.totalorder %s35, 3
      %p222 = por %p220, %p221
      %p223 = scmp.ne.s32.totalorder %s212, %s213
      %p224 = scmp.eq.s32.totalorder %s35, 0
      %p225 = por %p223, %p224
      %p226 = scmp.ne.s32.totalorder %s212, %s213
      %p227 = scmp.eq.s32.totalorder %s36, 3
      %p228 = por %p226, %p227
      %p230 = scmp.ne.s32.totalorder %s213, %s229
      %p231 = scmp.eq.s32.totalorder %s36, 0
      %p232 = por %p230, %p231
      %s233 = ssub.s32 %s38, %s45
      %p234 = scmp.eq.s32.totalorder %s233, 0
      %s236 = sadd.s32 %s235, 1
      %s237 = scalar_select %p234, %s235, %s236
      %p240 = pneg %p234
      %p241 = scmp.eq.s32.totalorder %s30, 3
      %p242 = por %p240, %p241
      %p243 = scmp.ne.s32.totalorder %s235, %s238
      %p244 = scmp.eq.s32.totalorder %s30, 0
      %p245 = por %p243, %p244
      %p246 = scmp.ne.s32.totalorder %s235, %s238
      %p247 = scmp.eq.s32.totalorder %s35, 3
      %p248 = por %p246, %p247
      %p249 = scmp.ne.s32.totalorder %s238, %s239
      %p250 = scmp.eq.s32.totalorder %s35, 0
      %p251 = por %p249, %p250
      %p252 = scmp.ne.s32.totalorder %s238, %s239
      %p253 = scmp.eq.s32.totalorder %s36, 3
      %p254 = por %p252, %p253
      %p256 = scmp.ne.s32.totalorder %s239, %s255
      %p257 = scmp.eq.s32.totalorder %s36, 0
      %p258 = por %p256, %p257
      %s259 = ssub.s32 %s38, %s45
      %p260 = scmp.eq.s32.totalorder %s259, 0
      %s262 = sadd.s32 %s261, 1
      %s263 = scalar_select %p260, %s261, %s262
      %p266 = pneg %p260
      %p267 = scmp.eq.s32.totalorder %s30, 3
      %p268 = por %p266, %p267
      %p269 = scmp.ne.s32.totalorder %s261, %s264
      %p270 = scmp.eq.s32.totalorder %s30, 0
      %p271 = por %p269, %p270
      %p272 = scmp.ne.s32.totalorder %s261, %s264
      %p273 = scmp.eq.s32.totalorder %s35, 3
      %p274 = por %p272, %p273
      %p275 = scmp.ne.s32.totalorder %s264, %s265
      %p276 = scmp.eq.s32.totalorder %s35, 0
      %p277 = por %p275, %p276
      %p278 = scmp.ne.s32.totalorder %s264, %s265
      %p279 = scmp.eq.s32.totalorder %s36, 3
      %p280 = por %p278, %p279
      %p282 = scmp.ne.s32.totalorder %s265, %s281
      %p283 = scmp.eq.s32.totalorder %s36, 0
      %p284 = por %p282, %p283
      %s286 = sadd.s32 %s285, 1
      %p289 = scmp.eq.s32.totalorder %s30, 3
      %p290 = scmp.ne.s32.totalorder %s285, %s287
      %p291 = scmp.eq.s32.totalorder %s30, 0
      %p292 = por %p290, %p291
      %p293 = scmp.ne.s32.totalorder %s285, %s287
      %p294 = scmp.eq.s32.totalorder %s35, 3
      %p295 = por %p293, %p294
      %p296 = scmp.ne.s32.totalorder %s287, %s288
      %p297 = scmp.eq.s32.totalorder %s35, 0
      %p298 = por %p296, %p297
      %p299 = scmp.ne.s32.totalorder %s287, %s288
      %p300 = scmp.eq.s32.totalorder %s36, 3
      %p301 = por %p299, %p300
      %p303 = scmp.ne.s32.totalorder %s288, %s302
      %p304 = scmp.eq.s32.totalorder %s36, 0
      %p305 = por %p303, %p304
      %s307 = sadd.s32 %s306, 1
      %p310 = scmp.eq.s32.totalorder %s30, 3
      %p311 = scmp.ne.s32.totalorder %s306, %s308
      %p312 = scmp.eq.s32.totalorder %s30, 0
      %p313 = por %p311, %p312
      %p314 = scmp.ne.s32.totalorder %s306, %s308
      %p315 = scmp.eq.s32.totalorder %s35, 3
      %p316 = por %p314, %p315
      %p317 = scmp.ne.s32.totalorder %s308, %s309
      %p318 = scmp.eq.s32.totalorder %s35, 0
      %p319 = por %p317, %p318
      %p320 = scmp.ne.s32.totalorder %s308, %s309
      %p321 = scmp.eq.s32.totalorder %s36, 3
      %p322 = por %p320, %p321
      %p324 = scmp.ne.s32.totalorder %s309, %s323
      %p325 = scmp.eq.s32.totalorder %s36, 0
      %p326 = por %p324, %p325
      %s327 = ssub.s32 %s37, %s49
      %p328 = scmp.eq.s32.totalorder %s327, 0
      %s330 = sadd.s32 %s329, 1
      %s331 = scalar_select %p328, %s329, %s330
      %p334 = pneg %p328
      %p335 = scmp.eq.s32.totalorder %s30, 3
      %p336 = por %p334, %p335
      %p337 = scmp.ne.s32.totalorder %s329, %s332
      %p338 = scmp.eq.s32.totalorder %s30, 0
      %p339 = por %p337, %p338
      %p340 = scmp.ne.s32.totalorder %s329, %s332
      %p341 = scmp.eq.s32.totalorder %s35, 3
      %p342 = por %p340, %p341
      %p343 = scmp.ne.s32.totalorder %s332, %s333
      %p344 = scmp.eq.s32.totalorder %s35, 0
      %p345 = por %p343, %p344
      %p346 = scmp.ne.s32.totalorder %s332, %s333
      %p347 = scmp.eq.s32.totalorder %s36, 3
      %p348 = por %p346, %p347
      %p350 = scmp.ne.s32.totalorder %s333, %s349
      %p351 = scmp.eq.s32.totalorder %s36, 0
      %p352 = por %p350, %p351
      %p353 = scmp.le.s32.totalorder 1, %s30
      %p354 = scmp.lt.s32.totalorder %s30, 5
      %p355 = pnand %p353, %p354
      %p356 = pneg %p355
      // Predicated region
      $region9: #{tpu_custom_call.1} parent=5 // pred_check
        _
      $region10: #{tpu_custom_call.1} parent=5 // pred_check_branch
        %358 = sbr.rel (%p355) target = $region12
      $region11: #{tpu_custom_call.1} parent=5 // pred_region
        %s359 = ssub.s32 %s30, 1
        // Predicated region
        $region13: #{tpu_custom_call.1} parent=11 // pred_check
          %p360 = pneg %p68
        $region14: #{tpu_custom_call.1} parent=11 // pred_check_branch
          %362 = sbr.rel (%p360) target = $region16
        $region15: #{tpu_custom_call.1} parent=11 // pred_region
          %s364 = ssub.s32 128, 128
          %365 = vsyncadd [#allocation4], %s364
          %s366 = smul.addr %s39, 128
          %s367 = scalar_lea.hbm %s0, %s366
          %s369 = sshll.u32 [#allocation3], 4
          %s370 = int_to_ptr.vmem [resolvable:$true] %s369
          %372 = dma.hbm_to_vmem [thread:$0]  %s367, 128, %s370, [#allocation4]
        $region16: #{tpu_custom_call.1} parent=11 // pred_fallthru
          _
        // Predicated region
        $region17: #{tpu_custom_call.1} parent=11 // pred_check
          %p373 = pneg %p94
        $region18: #{tpu_custom_call.1} parent=11 // pred_check_branch
          %375 = sbr.rel (%p373) target = $region20
        $region19: #{tpu_custom_call.1} parent=11 // pred_region
          %s377 = ssub.s32 16, 16
          %378 = vsyncadd [#allocation7], %s377
          %s379 = smul.addr %s39, 16
          %s380 = scalar_lea.hbm %s1, %s379
          %s382 = sshll.u32 [#allocation6], 4
          %s383 = int_to_ptr.vmem [resolvable:$true] %s382
          %385 = dma.hbm_to_vmem [thread:$0]  %s380, 16, %s383, [#allocation7]
        $region20: #{tpu_custom_call.1} parent=11 // pred_fallthru
          _
        // Predicated region
        $region21: #{tpu_custom_call.1} parent=11 // pred_check
          %p386 = pneg %p115
        $region22: #{tpu_custom_call.1} parent=11 // pred_check_branch
          %388 = sbr.rel (%p386) target = $region24
        $region23: #{tpu_custom_call.1} parent=11 // pred_region
          %s390 = ssub.s32 512, 512
          %391 = vsyncadd [#allocation7], %s390
          %s392 = sshll.u32 [#allocation8], 4
          %s393 = int_to_ptr.vmem [resolvable:$true] %s392
          %398 = dma.hbm_to_vmem [thread:$0]  %s2, 512, %s393, [#allocation7], 128, 128, 8
        $region24: #{tpu_custom_call.1} parent=11 // pred_fallthru
          _
        // Predicated region
        $region25: #{tpu_custom_call.1} parent=11 // pred_check
          %p399 = pneg %p136
        $region26: #{tpu_custom_call.1} parent=11 // pred_check_branch
          %401 = sbr.rel (%p399) target = $region28
        $region27: #{tpu_custom_call.1} parent=11 // pred_region
          %s403 = ssub.s32 512, 512
          %404 = vsyncadd [#allocation10], %s403
          %s405 = sshll.u32 [#allocation9], 4
          %s406 = int_to_ptr.vmem [resolvable:$true] %s405
          %411 = dma.hbm_to_vmem [thread:$0]  %s3, 512, %s406, [#allocation10], 128, 128, 8
        $region28: #{tpu_custom_call.1} parent=11 // pred_fallthru
          _
        // Predicated region
        $region29: #{tpu_custom_call.1} parent=11 // pred_check
          %p412 = pneg %p157
        $region30: #{tpu_custom_call.1} parent=11 // pred_check_branch
          %414 = sbr.rel (%p412) target = $region32
        $region31: #{tpu_custom_call.1} parent=11 // pred_region
          %s416 = ssub.s32 512, 512
          %417 = vsyncadd [#allocation10], %s416
          %s418 = sshll.u32 [#allocation11], 4
          %s419 = int_to_ptr.vmem [resolvable:$true] %s418
          %424 = dma.hbm_to_vmem [thread:$0]  %s4, 512, %s419, [#allocation10], 128, 128, 8
        $region32: #{tpu_custom_call.1} parent=11 // pred_fallthru
          _
        // Predicated region
        $region33: #{tpu_custom_call.1} parent=11 // pred_check
          %p425 = pneg %p178
        $region34: #{tpu_custom_call.1} parent=11 // pred_check_branch
          %427 = sbr.rel (%p425) target = $region36
        $region35: #{tpu_custom_call.1} parent=11 // pred_region
          %s429 = ssub.s32 512, 512
          %430 = vsyncadd [#allocation13], %s429
          %s431 = sshll.u32 [#allocation12], 4
          %s432 = int_to_ptr.vmem [resolvable:$true] %s431
          %437 = dma.hbm_to_vmem [thread:$0]  %s5, 512, %s432, [#allocation13], 128, 128, 8
        $region36: #{tpu_custom_call.1} parent=11 // pred_fallthru
          _
        // Predicated region
        $region37: #{tpu_custom_call.1} parent=11 // pred_check
          %p438 = pneg %p199
        $region38: #{tpu_custom_call.1} parent=11 // pred_check_branch
          %440 = sbr.rel (%p438) target = $region40
        $region39: #{tpu_custom_call.1} parent=11 // pred_region
          %s442 = ssub.s32 512, 512
          %443 = vsyncadd [#allocation13], %s442
          %s444 = sshll.u32 [#allocation14], 4
          %s445 = int_to_ptr.vmem [resolvable:$true] %s444
          %450 = dma.hbm_to_vmem [thread:$0]  %s6, 512, %s445, [#allocation13], 128, 128, 8
        $region40: #{tpu_custom_call.1} parent=11 // pred_fallthru
          _
        // Predicated region
        $region41: #{tpu_custom_call.1} parent=11 // pred_check
          %p451 = pneg %p298
        $region42: #{tpu_custom_call.1} parent=11 // pred_check_branch
          %453 = sbr.rel (%p451) target = $region44
        $region43: #{tpu_custom_call.1} parent=11 // pred_region
          %s455 = ssub.s32 128, 128
          %456 = vsyncadd [#allocation19], %s455
          %s458 = sshll.u32 [#allocation20], 4
          %s459 = int_to_ptr.vmem [resolvable:$true] %s458
          %461 = dma.hbm_to_vmem [thread:$0]  %s10, 128, %s459, [#allocation19]
        $region44: #{tpu_custom_call.1} parent=11 // pred_fallthru
          _
        // Predicated region
        $region45: #{tpu_custom_call.1} parent=11 // pred_check
          %p462 = pneg %p319
        $region46: #{tpu_custom_call.1} parent=11 // pred_check_branch
          %464 = sbr.rel (%p462) target = $region48
        $region47: #{tpu_custom_call.1} parent=11 // pred_region
          %s466 = ssub.s32 128, 128
          %467 = vsyncadd [#allocation22], %s466
          %s469 = sshll.u32 [#allocation21], 4
          %s470 = int_to_ptr.vmem [resolvable:$true] %s469
          %472 = dma.hbm_to_vmem [thread:$0]  %s11, 128, %s470, [#allocation22]
        $region48: #{tpu_custom_call.1} parent=11 // pred_fallthru
          _
      $region12: #{tpu_custom_call.1} parent=5 // pred_fallthru
        _
      %p473 = scmp.lt.s32.totalorder %s30, 4
      // Predicated region
      $region49: #{tpu_custom_call.1} parent=5 // pred_check
        %p474 = pneg %p473
      $region50: #{tpu_custom_call.1} parent=5 // pred_check_branch
        %476 = sbr.rel (%p474) target = $region52
      $region51: #{tpu_custom_call.1} parent=5 // pred_region
        // Predicated region
        $region53: #{tpu_custom_call.1} parent=51 // pred_check
          %p477 = pneg %p219
        $region54: #{tpu_custom_call.1} parent=51 // pred_check_branch
          %479 = sbr.rel (%p477) target = $region56
        $region55: #{tpu_custom_call.1} parent=51 // pred_region
          %s480 = sand.u32 %s30, 1
          %s481 = scalar_lea.sflag [#allocation16], %s480
          %s482 = sand.u32 %s209, 1
          %s483 = smul.addr %s482, 32
          %s484 = scalar_lea.vmem [#allocation15], %s483
          %s486 = ssub.s32 512, 512
          %487 = vsyncadd %s481, %s486
          %s488 = smul.addr %s38, 4
          %s489 = smul.addr %s488, 128
          %s490 = scalar_lea.hbm %s7, %s489
          %s491 = sshll.u32 %s484, 4
          %s492 = int_to_ptr.vmem [resolvable:$true] %s491
          %497 = dma.hbm_to_vmem [thread:$0]  %s490, 512, %s492, %s481, 128, 128, 8
        $region56: #{tpu_custom_call.1} parent=51 // pred_fallthru
          _
        // Predicated region
        $region57: #{tpu_custom_call.1} parent=51 // pred_check
          %p498 = pneg %p245
        $region58: #{tpu_custom_call.1} parent=51 // pred_check_branch
          %500 = sbr.rel (%p498) target = $region60
        $region59: #{tpu_custom_call.1} parent=51 // pred_region
          %s501 = sand.u32 %s30, 1
          %s502 = scalar_lea.sflag [#allocation16], %s501
          %s503 = sand.u32 %s235, 1
          %s504 = smul.addr %s503, 32
          %s505 = scalar_lea.vmem [#allocation17], %s504
          %s507 = ssub.s32 512, 512
          %508 = vsyncadd %s502, %s507
          %s509 = smul.addr %s38, 4
          %s510 = smul.addr %s509, 128
          %s511 = scalar_lea.hbm %s8, %s510
          %s512 = sshll.u32 %s505, 4
          %s513 = int_to_ptr.vmem [resolvable:$true] %s512
          %518 = dma.hbm_to_vmem [thread:$0]  %s511, 512, %s513, %s502, 128, 128, 8
        $region60: #{tpu_custom_call.1} parent=51 // pred_fallthru
          _
        // Predicated region
        $region61: #{tpu_custom_call.1} parent=51 // pred_check
          %p519 = pneg %p271
        $region62: #{tpu_custom_call.1} parent=51 // pred_check_branch
          %521 = sbr.rel (%p519) target = $region64
        $region63: #{tpu_custom_call.1} parent=51 // pred_region
          %s522 = sand.u32 %s30, 1
          %s523 = scalar_lea.sflag [#allocation19], %s522
          %s524 = sand.u32 %s261, 1
          %s525 = smul.addr %s524, 32
          %s526 = scalar_lea.vmem [#allocation18], %s525
          %s528 = ssub.s32 512, 512
          %529 = vsyncadd %s523, %s528
          %s530 = smul.addr %s38, 4
          %s531 = smul.addr %s530, 128
          %s532 = scalar_lea.hbm %s9, %s531
          %s533 = sshll.u32 %s526, 4
          %s534 = int_to_ptr.vmem [resolvable:$true] %s533
          %539 = dma.hbm_to_vmem [thread:$0]  %s532, 512, %s534, %s523, 128, 128, 8
        $region64: #{tpu_custom_call.1} parent=51 // pred_fallthru
          _
      $region52: #{tpu_custom_call.1} parent=5 // pred_fallthru
        _
      %p540 = scmp.le.s32.totalorder 1, %s30
      %p541 = scmp.lt.s32.totalorder %s30, 5
      %p542 = pnand %p540, %p541
      %p543 = pneg %p542
      // Predicated region
      $region65: #{tpu_custom_call.1} parent=5 // pred_check
        _
      $region66: #{tpu_custom_call.1} parent=5 // pred_check_branch
        %545 = sbr.rel (%p542) target = $region68
      $region67: #{tpu_custom_call.1} parent=5 // pred_region
        %s546 = ssub.s32 %s30, 1
        // Predicated region
        $region69: #{tpu_custom_call.1} parent=67 // pred_check
          %p547 = pneg %p68
        $region70: #{tpu_custom_call.1} parent=67 // pred_check_branch
          %549 = sbr.rel (%p547) target = $region72
        $region71: #{tpu_custom_call.1} parent=67 // pred_region
          %550 = dma.done [#allocation4], 128
        $region72: #{tpu_custom_call.1} parent=67 // pred_fallthru
          _
        // Predicated region
        $region73: #{tpu_custom_call.1} parent=67 // pred_check
          %p551 = pneg %p94
        $region74: #{tpu_custom_call.1} parent=67 // pred_check_branch
          %553 = sbr.rel (%p551) target = $region76
        $region75: #{tpu_custom_call.1} parent=67 // pred_region
          %554 = dma.done [#allocation7], 16
        $region76: #{tpu_custom_call.1} parent=67 // pred_fallthru
          _
        // Predicated region
        $region77: #{tpu_custom_call.1} parent=67 // pred_check
          %p555 = pneg %p115
        $region78: #{tpu_custom_call.1} parent=67 // pred_check_branch
          %557 = sbr.rel (%p555) target = $region80
        $region79: #{tpu_custom_call.1} parent=67 // pred_region
          %558 = dma.done [#allocation7], 512
        $region80: #{tpu_custom_call.1} parent=67 // pred_fallthru
          _
        // Predicated region
        $region81: #{tpu_custom_call.1} parent=67 // pred_check
          %p559 = pneg %p136
        $region82: #{tpu_custom_call.1} parent=67 // pred_check_branch
          %561 = sbr.rel (%p559) target = $region84
        $region83: #{tpu_custom_call.1} parent=67 // pred_region
          %562 = dma.done [#allocation10], 512
        $region84: #{tpu_custom_call.1} parent=67 // pred_fallthru
          _
        // Predicated region
        $region85: #{tpu_custom_call.1} parent=67 // pred_check
          %p563 = pneg %p157
        $region86: #{tpu_custom_call.1} parent=67 // pred_check_branch
          %565 = sbr.rel (%p563) target = $region88
        $region87: #{tpu_custom_call.1} parent=67 // pred_region
          %566 = dma.done [#allocation10], 512
        $region88: #{tpu_custom_call.1} parent=67 // pred_fallthru
          _
        // Predicated region
        $region89: #{tpu_custom_call.1} parent=67 // pred_check
          %p567 = pneg %p178
        $region90: #{tpu_custom_call.1} parent=67 // pred_check_branch
          %569 = sbr.rel (%p567) target = $region92
        $region91: #{tpu_custom_call.1} parent=67 // pred_region
          %570 = dma.done [#allocation13], 512
        $region92: #{tpu_custom_call.1} parent=67 // pred_fallthru
          _
        // Predicated region
        $region93: #{tpu_custom_call.1} parent=67 // pred_check
          %p571 = pneg %p199
        $region94: #{tpu_custom_call.1} parent=67 // pred_check_branch
          %573 = sbr.rel (%p571) target = $region96
        $region95: #{tpu_custom_call.1} parent=67 // pred_region
          %574 = dma.done [#allocation13], 512
        $region96: #{tpu_custom_call.1} parent=67 // pred_fallthru
          _
        %s575 = sand.u32 %s35, 1
        %s576 = scalar_lea.sflag [#allocation16], %s575
        %s577 = sand.u32 %s212, 1
        %s578 = smul.addr %s577, 32
        %s579 = scalar_lea.vmem [#allocation15], %s578
        // Predicated region
        $region97: #{tpu_custom_call.1} parent=67 // pred_check
          %p580 = pneg %p225
        $region98: #{tpu_custom_call.1} parent=67 // pred_check_branch
          %582 = sbr.rel (%p580) target = $region100
        $region99: #{tpu_custom_call.1} parent=67 // pred_region
          %583 = dma.done %s576, 512
        $region100: #{tpu_custom_call.1} parent=67 // pred_fallthru
          _
        %s584 = sand.u32 %s35, 1
        %s585 = scalar_lea.sflag [#allocation16], %s584
        %s586 = sand.u32 %s238, 1
        %s587 = smul.addr %s586, 32
        %s588 = scalar_lea.vmem [#allocation17], %s587
        // Predicated region
        $region101: #{tpu_custom_call.1} parent=67 // pred_check
          %p589 = pneg %p251
        $region102: #{tpu_custom_call.1} parent=67 // pred_check_branch
          %591 = sbr.rel (%p589) target = $region104
        $region103: #{tpu_custom_call.1} parent=67 // pred_region
          %592 = dma.done %s585, 512
        $region104: #{tpu_custom_call.1} parent=67 // pred_fallthru
          _
        %s593 = sand.u32 %s35, 1
        %s594 = scalar_lea.sflag [#allocation19], %s593
        %s595 = sand.u32 %s264, 1
        %s596 = smul.addr %s595, 32
        %s597 = scalar_lea.vmem [#allocation18], %s596
        // Predicated region
        $region105: #{tpu_custom_call.1} parent=67 // pred_check
          %p598 = pneg %p277
        $region106: #{tpu_custom_call.1} parent=67 // pred_check_branch
          %600 = sbr.rel (%p598) target = $region108
        $region107: #{tpu_custom_call.1} parent=67 // pred_region
          %601 = dma.done %s594, 512
        $region108: #{tpu_custom_call.1} parent=67 // pred_fallthru
          _
        // Predicated region
        $region109: #{tpu_custom_call.1} parent=67 // pred_check
          %p602 = pneg %p298
        $region110: #{tpu_custom_call.1} parent=67 // pred_check_branch
          %604 = sbr.rel (%p602) target = $region112
        $region111: #{tpu_custom_call.1} parent=67 // pred_region
          %605 = dma.done [#allocation19], 128
        $region112: #{tpu_custom_call.1} parent=67 // pred_fallthru
          _
        // Predicated region
        $region113: #{tpu_custom_call.1} parent=67 // pred_check
          %p606 = pneg %p319
        $region114: #{tpu_custom_call.1} parent=67 // pred_check_branch
          %608 = sbr.rel (%p606) target = $region116
        $region115: #{tpu_custom_call.1} parent=67 // pred_region
          %609 = dma.done [#allocation22], 128
        $region116: #{tpu_custom_call.1} parent=67 // pred_fallthru
          _
        %p610 = pneg %p68
        %p611 = pneg %p65
        %p612 = pneg %p94
        %p613 = pneg %p91
        %p614 = pneg %p115
        %p615 = pneg %p112
        %p616 = pneg %p136
        %p617 = pneg %p133
        %p618 = pneg %p157
        %p619 = pneg %p154
        %p620 = pneg %p178
        %p621 = pneg %p175
        %p622 = pneg %p199
        %p623 = pneg %p196
        %s624 = sand.u32 %s35, 1
        %s625 = scalar_lea.sflag [#allocation16], %s624
        %s626 = sand.u32 %s212, 1
        %s627 = smul.addr %s626, 32
        %s628 = scalar_lea.vmem [#allocation15], %s627
        %p629 = pneg %p225
        %p630 = pneg %p222
        %s631 = sand.u32 %s35, 1
        %s632 = scalar_lea.sflag [#allocation16], %s631
        %s633 = sand.u32 %s238, 1
        %s634 = smul.addr %s633, 32
        %s635 = scalar_lea.vmem [#allocation17], %s634
        %p636 = pneg %p251
        %p637 = pneg %p248
        %s638 = sand.u32 %s35, 1
        %s639 = scalar_lea.sflag [#allocation19], %s638
        %s640 = sand.u32 %s264, 1
        %s641 = smul.addr %s640, 32
        %s642 = scalar_lea.vmem [#allocation18], %s641
        %p643 = pneg %p277
        %p644 = pneg %p274
        %p645 = pneg %p298
        %p646 = pneg %p295
        %p647 = pneg %p319
        %p648 = pneg %p316
        %p649 = pneg %p345
        %p650 = pneg %p342
        %p651 = scmp.eq.s32.totalorder %s40, 0
        // Predicated region
        $region117: #{tpu_custom_call.1} parent=67 // pred_check
          %p652 = pneg %p651
        $region118: #{tpu_custom_call.1} parent=67 // pred_check_branch
          %654 = sbr.rel (%p652) target = $region120
        $region119: #{tpu_custom_call.1} parent=67 // pred_region
          %v655 = vld [vmem:[#allocation3] sm:$0xff]
          %v656 = vld [vmem:[#allocation6] sm:$0x1]
          %v657 = vld [vmem:[#allocation8] sm:$0xff]
          %v658 = vld [vmem:[#allocation8 + $0x8] sm:$0xff]
          %v659 = vld [vmem:[#allocation8 + $0x10] sm:$0xff]
          %v660 = vld [vmem:[#allocation8 + $0x18] sm:$0xff]
          %662 = vset.pattern.permute.xlu0 0
          %663 = vperm.xlu0 %662, %v657
          %v664 = vpop.permute.xlu0 %663
          %667 = vset.pattern.permute.xlu0 0
          %668 = vperm.xlu0 %667, %v658
          %v669 = vpop.permute.xlu0 %668
          %672 = vset.pattern.permute.xlu0 0
          %673 = vperm.xlu0 %672, %v659
          %v674 = vpop.permute.xlu0 %673
          %677 = vset.pattern.permute.xlu0 0
          %678 = vperm.xlu0 %677, %v660
          %v679 = vpop.permute.xlu0 %678
          %v682 = vlaneseq
          %v683 = vshrl.u32 %v682, 7
          %v684 = vsub.s32 0, %v683
          %v685 = vrot.slane %v656, %v684
          %v687 = vmul.f32 %v664, %v685
          %v688 = vmul.f32 %v669, %v685
          %v689 = vmul.f32 %v674, %v685
          %v690 = vmul.f32 %v679, %v685
          %v691 = vld [vmem:[#allocation9] sm:$0xff]
          %v692 = vld [vmem:[#allocation9 + $0x8] sm:$0xff]
          %v693 = vld [vmem:[#allocation9 + $0x10] sm:$0xff]
          %v694 = vld [vmem:[#allocation9 + $0x18] sm:$0xff]
          %696 = vset.pattern.permute.xlu0 0
          %697 = vperm.xlu0 %696, %v691
          %v698 = vpop.permute.xlu0 %697
          %701 = vset.pattern.permute.xlu0 0
          %702 = vperm.xlu0 %701, %v692
          %v703 = vpop.permute.xlu0 %702
          %706 = vset.pattern.permute.xlu0 0
          %707 = vperm.xlu0 %706, %v693
          %v708 = vpop.permute.xlu0 %707
          %711 = vset.pattern.permute.xlu0 0
          %712 = vperm.xlu0 %711, %v694
          %v713 = vpop.permute.xlu0 %712
          %v715 = vadd.f32 %v687, %v698
          %v716 = vadd.f32 %v688, %v703
          %v717 = vadd.f32 %v689, %v708
          %v718 = vadd.f32 %v690, %v713
          %v719 = vxor.u32 %v715, 2147483648
          %v720 = vxor.u32 %v716, 2147483648
          %v721 = vxor.u32 %v717, 2147483648
          %v722 = vxor.u32 %v718, 2147483648
          %v723 = vmul.f32 %v719, 1.442695
          %v724 = vpow.pop %v723
          %v725 = vmul.f32 %v720, 1.442695
          %v726 = vpow.pop %v725
          %v727 = vmul.f32 %v721, 1.442695
          %v728 = vpow.pop %v727
          %v729 = vmul.f32 %v722, 1.442695
          %v730 = vpow.pop %v729
          %v731 = vadd.f32 %v724, 1.0
          %v732 = vadd.f32 %v726, 1.0
          %v733 = vadd.f32 %v728, 1.0
          %v734 = vadd.f32 %v730, 1.0
          %v735 = vrcp.pop %v731
          %v736 = vmul.f32 1.0, %v735
          %v737 = vrcp.pop %v732
          %v738 = vmul.f32 1.0, %v737
          %v739 = vrcp.pop %v733
          %v740 = vmul.f32 1.0, %v739
          %v741 = vrcp.pop %v734
          %v742 = vmul.f32 1.0, %v741
          %v743 = vmul.f32 %v715, %v736
          %v744 = vmul.f32 %v716, %v738
          %v745 = vmul.f32 %v717, %v740
          %v746 = vmul.f32 %v718, %v742
          %v747 = vld [vmem:[#allocation11] sm:$0xff]
          %v748 = vld [vmem:[#allocation11 + $0x8] sm:$0xff]
          %v749 = vld [vmem:[#allocation11 + $0x10] sm:$0xff]
          %v750 = vld [vmem:[#allocation11 + $0x18] sm:$0xff]
          %v751 = vld [vmem:[#allocation12] sm:$0xff]
          %v752 = vld [vmem:[#allocation12 + $0x8] sm:$0xff]
          %v753 = vld [vmem:[#allocation12 + $0x10] sm:$0xff]
          %v754 = vld [vmem:[#allocation12 + $0x18] sm:$0xff]
          %vm755 = vcmask 261120
          %v757 = vsel %vm755, %v751, 0
          %v760 = vsel %vm755, %v752, 0
          %v763 = vsel %vm755, %v753, 0
          %v766 = vsel %vm755, %v754, 0
          %768 = vmatprep.subr.mxu0 0.0
          %769 = vmatpush1.msra.mxu0 %v743
          %770 = vmatprep.subr.mxu0 0.0
          %771 = vmatpush1.msra.mxu0 %v744
          %772 = vmatprep.subr.mxu0 0.0
          %773 = vmatpush1.msra.mxu0 %v745
          %774 = vmatprep.subr.mxu0 0.0
          %775 = vmatpush1.msra.mxu0 %v746
          %776 = vmatprep.subr.mxu0 0.0
          %777 = vmatpush1.msra.mxu0 0.0
          %778 = vmatprep.subr.mxu0 0.0
          %779 = vmatpush1.msra.mxu0 0.0
          %780 = vmatprep.subr.mxu0 0.0
          %781 = vmatpush1.msra.mxu0 0.0
          %782 = vmatprep.subr.mxu0 0.0
          %783 = vmatpush1.msra.mxu0 0.0
          %784 = vmatprep.subr.mxu0 0.0
          %785 = vmatpush1.msra.mxu0 0.0
          %786 = vmatprep.subr.mxu0 0.0
          %787 = vmatpush1.msra.mxu0 0.0
          %788 = vmatprep.subr.mxu0 0.0
          %789 = vmatpush1.msra.mxu0 0.0
          %790 = vmatprep.subr.mxu0 0.0
          %791 = vmatpush1.msra.mxu0 0.0
          %792 = vmatprep.subr.mxu0 0.0
          %793 = vmatpush1.msra.mxu0 0.0
          %794 = vmatprep.subr.mxu0 0.0
          %795 = vmatpush1.msra.mxu0 0.0
          %796 = vmatprep.subr.mxu0 0.0
          %797 = vmatpush1.msra.mxu0 0.0
          %798 = vmatprep.subr.mxu0 0.0
          %799 = vmatpush1.msra.mxu0 0.0
          %800 = vmatprep.subr.mxu0 0.0
          %801 = vmatpush1.msra.mxu0 0.0
          %802 = vmatprep.subr.mxu0 0.0
          %803 = vmatpush1.msra.mxu0 0.0
          %804 = vmatprep.subr.mxu0 0.0
          %805 = vmatpush1.msra.mxu0 0.0
          %806 = vmatprep.subr.mxu0 0.0
          %807 = vmatpush1.msra.mxu0 0.0
          %808 = vmatprep.subr.mxu0 0.0
          %809 = vmatpush1.msra.mxu0 0.0
          %810 = vmatprep.subr.mxu0 0.0
          %811 = vmatpush1.msra.mxu0 0.0
          %812 = vmatprep.subr.mxu0 0.0
          %813 = vmatpush1.msra.mxu0 0.0
          %814 = vmatprep.subr.mxu0 0.0
          %815 = vmatpush1.msra.mxu0 0.0
          %816 = vmatprep.subr.mxu0 0.0
          %817 = vmatpush1.msra.mxu0 0.0
          %818 = vmatprep.subr.mxu0 0.0
          %819 = vmatpush1.msra.mxu0 0.0
          %820 = vmatprep.subr.mxu0 0.0
          %821 = vmatpush1.msra.mxu0 0.0
          %822 = vmatprep.subr.mxu0 0.0
          %823 = vmatpush1.msra.mxu0 0.0
          %824 = vmatprep.subr.mxu0 0.0
          %825 = vmatpush1.msra.mxu0 0.0
          %826 = vmatprep.subr.mxu0 0.0
          %827 = vmatpush1.msra.mxu0 0.0
          %828 = vmatprep.subr.mxu0 0.0
          %829 = vmatpush1.msra.mxu0 0.0
          %830 = vmatprep.subr.mxu0 0.0
          %831 = vmatpush1.msra.mxu0 0.0
          %832 = vmatprep.mubr.f32.mxu0 0.0
          %833 = vmatmul.mubr.f32.gmra.mrb[0].mxu0 %v757
          %v834 = vpop.f32.mrb[0].mxu0
          %v835 = vadd.f32 0.0, %v834
          %v836 = vpop.f32.mrb[0].mxu0
          %837 = vmatprep.mubr.f32.mxu0 0.0
          %838 = vmatmul.mubr.f32.gmra.mrb[0].mxu0 %v760
          %v839 = vpop.f32.mrb[0].mxu0
          %v840 = vadd.f32 0.0, %v839
          %v841 = vpop.f32.mrb[0].mxu0
          %842 = vmatprep.mubr.f32.mxu0 0.0
          %843 = vmatmul.mubr.f32.gmra.mrb[0].mxu0 %v763
          %v844 = vpop.f32.mrb[0].mxu0
          %v845 = vadd.f32 0.0, %v844
          %v846 = vpop.f32.mrb[0].mxu0
          %847 = vmatprep.mubr.f32.mxu0 0.0
          %848 = vmatmul.mubr.f32.gmra.mrb[0].mxu0 %v766
          %v849 = vpop.f32.mrb[0].mxu0
          %v850 = vadd.f32 0.0, %v849
          %v851 = vpop.f32.mrb[0].mxu0
          %852 = vdwg.mxu0
          %vm853 = vcmask 64512
          %v855 = vsel %vm853, %v747, 0
          %v858 = vsel %vm853, %v748, 0
          %v861 = vsel %vm853, %v749, 0
          %v864 = vsel %vm853, %v750, 0
          %866 = vmatprep.subr.mxu0 0.0
          %867 = vmatpush1.msra.mxu0 %v655
          %868 = vmatprep.subr.mxu0 0.0
          %869 = vmatpush1.msra.mxu0 0.0
          %870 = vmatprep.subr.mxu0 0.0
          %871 = vmatpush1.msra.mxu0 0.0
          %872 = vmatprep.subr.mxu0 0.0
          %873 = vmatpush1.msra.mxu0 0.0
          %874 = vmatprep.subr.mxu0 0.0
          %875 = vmatpush1.msra.mxu0 0.0
          %876 = vmatprep.subr.mxu0 0.0
          %877 = vmatpush1.msra.mxu0 0.0
          %878 = vmatprep.subr.mxu0 0.0
          %879 = vmatpush1.msra.mxu0 0.0
          %880 = vmatprep.subr.mxu0 0.0
          %881 = vmatpush1.msra.mxu0 0.0
          %882 = vmatprep.subr.mxu0 0.0
          %883 = vmatpush1.msra.mxu0 0.0
          %884 = vmatprep.subr.mxu0 0.0
          %885 = vmatpush1.msra.mxu0 0.0
          %886 = vmatprep.subr.mxu0 0.0
          %887 = vmatpush1.msra.mxu0 0.0
          %888 = vmatprep.subr.mxu0 0.0
          %889 = vmatpush1.msra.mxu0 0.0
          %890 = vmatprep.subr.mxu0 0.0
          %891 = vmatpush1.msra.mxu0 0.0
          %892 = vmatprep.subr.mxu0 0.0
          %893 = vmatpush1.msra.mxu0 0.0
          %894 = vmatprep.subr.mxu0 0.0
          %895 = vmatpush1.msra.mxu0 0.0
          %896 = vmatprep.subr.mxu0 0.0
          %897 = vmatpush1.msra.mxu0 0.0
          %898 = vmatprep.subr.mxu0 0.0
          %899 = vmatpush1.msra.mxu0 0.0
          %900 = vmatprep.subr.mxu0 0.0
          %901 = vmatpush1.msra.mxu0 0.0
          %902 = vmatprep.subr.mxu0 0.0
          %903 = vmatpush1.msra.mxu0 0.0
          %904 = vmatprep.subr.mxu0 0.0
          %905 = vmatpush1.msra.mxu0 0.0
          %906 = vmatprep.subr.mxu0 0.0
          %907 = vmatpush1.msra.mxu0 0.0
          %908 = vmatprep.subr.mxu0 0.0
          %909 = vmatpush1.msra.mxu0 0.0
          %910 = vmatprep.subr.mxu0 0.0
          %911 = vmatpush1.msra.mxu0 0.0
          %912 = vmatprep.subr.mxu0 0.0
          %913 = vmatpush1.msra.mxu0 0.0
          %914 = vmatprep.subr.mxu0 0.0
          %915 = vmatpush1.msra.mxu0 0.0
          %916 = vmatprep.subr.mxu0 0.0
          %917 = vmatpush1.msra.mxu0 0.0
          %918 = vmatprep.subr.mxu0 0.0
          %919 = vmatpush1.msra.mxu0 0.0
          %920 = vmatprep.subr.mxu0 0.0
          %921 = vmatpush1.msra.mxu0 0.0
          %922 = vmatprep.subr.mxu0 0.0
          %923 = vmatpush1.msra.mxu0 0.0
          %924 = vmatprep.subr.mxu0 0.0
          %925 = vmatpush1.msra.mxu0 0.0
          %926 = vmatprep.subr.mxu0 0.0
          %927 = vmatpush1.msra.mxu0 0.0
          %928 = vmatprep.subr.mxu0 0.0
          %929 = vmatpush1.msra.mxu0 0.0
          %930 = vmatprep.mubr.f32.mxu0 0.0
          %931 = vmatmul.mubr.f32.gmra.mrb[0].mxu0 %v855
          %v932 = vpop.f32.mrb[0].mxu0
          %v933 = vadd.f32 %v835, %v932
          %v934 = vpop.f32.mrb[0].mxu0
          %935 = vmatprep.mubr.f32.mxu0 0.0
          %936 = vmatmul.mubr.f32.gmra.mrb[0].mxu0 %v858
          %v937 = vpop.f32.mrb[0].mxu0
          %v938 = vadd.f32 %v840, %v937
          %v939 = vpop.f32.mrb[0].mxu0
          %940 = vmatprep.mubr.f32.mxu0 0.0
          %941 = vmatmul.mubr.f32.gmra.mrb[0].mxu0 %v861
          %v942 = vpop.f32.mrb[0].mxu0
          %v943 = vadd.f32 %v845, %v942
          %v944 = vpop.f32.mrb[0].mxu0
          %945 = vmatprep.mubr.f32.mxu0 0.0
          %946 = vmatmul.mubr.f32.gmra.mrb[0].mxu0 %v864
          %v947 = vpop.f32.mrb[0].mxu0
          %v948 = vadd.f32 %v850, %v947
          %v949 = vpop.f32.mrb[0].mxu0
          %950 = vdwg.mxu0
          %v951 = vld [vmem:[#allocation14] sm:$0xff]
          %v952 = vld [vmem:[#allocation14 + $0x8] sm:$0xff]
          %v953 = vld [vmem:[#allocation14 + $0x10] sm:$0xff]
          %v954 = vld [vmem:[#allocation14 + $0x18] sm:$0xff]
          %956 = vset.pattern.permute.xlu0 0
          %957 = vperm.xlu0 %956, %v951
          %v958 = vpop.permute.xlu0 %957
          %961 = vset.pattern.permute.xlu0 0
          %962 = vperm.xlu0 %961, %v952
          %v963 = vpop.permute.xlu0 %962
          %966 = vset.pattern.permute.xlu0 0
          %967 = vperm.xlu0 %966, %v953
          %v968 = vpop.permute.xlu0 %967
          %971 = vset.pattern.permute.xlu0 0
          %972 = vperm.xlu0 %971, %v954
          %v973 = vpop.permute.xlu0 %972
          %v975 = vadd.f32 %v933, %v958
          %v976 = vadd.f32 %v938, %v963
          %v977 = vadd.f32 %v943, %v968
          %v978 = vadd.f32 %v948, %v973
          %979 = vst [vmem:[#allocation2] sm:$0xff] %v975
          %980 = vst [vmem:[#allocation2 + $0x8] sm:$0xff] %v976
          %981 = vst [vmem:[#allocation2 + $0x10] sm:$0xff] %v977
          %982 = vst [vmem:[#allocation2 + $0x18] sm:$0xff] %v978
        $region120: #{tpu_custom_call.1} parent=67 // pred_fallthru
          _
        %v983 = vld [vmem:[#allocation2] sm:$0xff]
        %v984 = vld [vmem:[#allocation2 + $0x8] sm:$0xff]
        %v985 = vld [vmem:[#allocation2 + $0x10] sm:$0xff]
        %v986 = vld [vmem:[#allocation2 + $0x18] sm:$0xff]
        %v987 = vadd.f32 %v983, %v984
        %v988 = vadd.f32 %v987, %v985
        %v989 = vadd.f32 %v988, %v986
        %v990 = vrot.slane %v989, 4
        %v991 = vadd.f32 %v989, %v990
        %v992 = vrot.slane %v991, 2
        %v993 = vadd.f32 %v991, %v992
        %v994 = vrot.slane %v993, 1
        %v995 = vadd.f32 %v993, %v994
        %v996 = vrcp.pop 32.0
        %v997 = vmul.f32 %v995, %v996
        %v998 = vsub.f32 %v983, %v997
        %v999 = vsub.f32 %v984, %v997
        %v1000 = vsub.f32 %v985, %v997
        %v1001 = vsub.f32 %v986, %v997
        %v1002 = vmul.f32 %v998, %v998
        %v1003 = vmul.f32 %v999, %v999
        %v1004 = vmul.f32 %v1000, %v1000
        %v1005 = vmul.f32 %v1001, %v1001
        %v1006 = vadd.f32 %v1002, %v1003
        %v1007 = vadd.f32 %v1006, %v1004
        %v1008 = vadd.f32 %v1007, %v1005
        %v1009 = vrot.slane %v1008, 4
        %v1010 = vadd.f32 %v1008, %v1009
        %v1011 = vrot.slane %v1010, 2
        %v1012 = vadd.f32 %v1010, %v1011
        %v1013 = vrot.slane %v1012, 1
        %v1014 = vadd.f32 %v1012, %v1013
        %v1015 = vmul.f32 %v1014, %v996
        %v1016 = vadd.f32 %v1015, 1e-05
        %v1017 = vrsqrt.pop %v1016
        %v1018 = vmul.f32 %v998, %v1017
        %v1019 = vmul.f32 %v999, %v1017
        %v1020 = vmul.f32 %v1000, %v1017
        %v1021 = vmul.f32 %v1001, %v1017
        %v1022 = vld [vmem:[%s597] sm:$0xff]
        %v1023 = vld [vmem:[%s597 + $0x8] sm:$0xff]
        %v1024 = vld [vmem:[%s597 + $0x10] sm:$0xff]
        %v1025 = vld [vmem:[%s597 + $0x18] sm:$0xff]
        %v1026 = vld [vmem:[%s579] sm:$0xff]
        %v1027 = vld [vmem:[%s579 + $0x8] sm:$0xff]
        %v1028 = vld [vmem:[%s579 + $0x10] sm:$0xff]
        %v1029 = vld [vmem:[%s579 + $0x18] sm:$0xff]
        %1031 = vset.pattern.permute.xlu0 0
        %1032 = vperm.xlu0 %1031, %v1022
        %v1033 = vpop.permute.xlu0 %1032
        %1036 = vset.pattern.permute.xlu0 0
        %1037 = vperm.xlu0 %1036, %v1023
        %v1038 = vpop.permute.xlu0 %1037
        %1041 = vset.pattern.permute.xlu0 0
        %1042 = vperm.xlu0 %1041, %v1024
        %v1043 = vpop.permute.xlu0 %1042
        %1046 = vset.pattern.permute.xlu0 0
        %1047 = vperm.xlu0 %1046, %v1025
        %v1048 = vpop.permute.xlu0 %1047
        %vm1050 = vcmask 261120
        %v1052 = vsel %vm1050, %v1026, 0
        %v1055 = vsel %vm1050, %v1027, 0
        %v1058 = vsel %vm1050, %v1028, 0
        %v1061 = vsel %vm1050, %v1029, 0
        %1063 = vmatprep.subr.mxu0 0.0
        %1064 = vmatpush1.msra.mxu0 %v1018
        %1065 = vmatprep.subr.mxu0 0.0
        %1066 = vmatpush1.msra.mxu0 %v1019
        %1067 = vmatprep.subr.mxu0 0.0
        %1068 = vmatpush1.msra.mxu0 %v1020
        %1069 = vmatprep.subr.mxu0 0.0
        %1070 = vmatpush1.msra.mxu0 %v1021
        %1071 = vmatprep.subr.mxu0 0.0
        %1072 = vmatpush1.msra.mxu0 0.0
        %1073 = vmatprep.subr.mxu0 0.0
        %1074 = vmatpush1.msra.mxu0 0.0
        %1075 = vmatprep.subr.mxu0 0.0
        %1076 = vmatpush1.msra.mxu0 0.0
        %1077 = vmatprep.subr.mxu0 0.0
        %1078 = vmatpush1.msra.mxu0 0.0
        %1079 = vmatprep.subr.mxu0 0.0
        %1080 = vmatpush1.msra.mxu0 0.0
        %1081 = vmatprep.subr.mxu0 0.0
        %1082 = vmatpush1.msra.mxu0 0.0
        %1083 = vmatprep.subr.mxu0 0.0
        %1084 = vmatpush1.msra.mxu0 0.0
        %1085 = vmatprep.subr.mxu0 0.0
        %1086 = vmatpush1.msra.mxu0 0.0
        %1087 = vmatprep.subr.mxu0 0.0
        %1088 = vmatpush1.msra.mxu0 0.0
        %1089 = vmatprep.subr.mxu0 0.0
        %1090 = vmatpush1.msra.mxu0 0.0
        %1091 = vmatprep.subr.mxu0 0.0
        %1092 = vmatpush1.msra.mxu0 0.0
        %1093 = vmatprep.subr.mxu0 0.0
        %1094 = vmatpush1.msra.mxu0 0.0
        %1095 = vmatprep.subr.mxu0 0.0
        %1096 = vmatpush1.msra.mxu0 0.0
        %1097 = vmatprep.subr.mxu0 0.0
        %1098 = vmatpush1.msra.mxu0 0.0
        %1099 = vmatprep.subr.mxu0 0.0
        %1100 = vmatpush1.msra.mxu0 0.0
        %1101 = vmatprep.subr.mxu0 0.0
        %1102 = vmatpush1.msra.mxu0 0.0
        %1103 = vmatprep.subr.mxu0 0.0
        %1104 = vmatpush1.msra.mxu0 0.0
        %1105 = vmatprep.subr.mxu0 0.0
        %1106 = vmatpush1.msra.mxu0 0.0
        %1107 = vmatprep.subr.mxu0 0.0
        %1108 = vmatpush1.msra.mxu0 0.0
        %1109 = vmatprep.subr.mxu0 0.0
        %1110 = vmatpush1.msra.mxu0 0.0
        %1111 = vmatprep.subr.mxu0 0.0
        %1112 = vmatpush1.msra.mxu0 0.0
        %1113 = vmatprep.subr.mxu0 0.0
        %1114 = vmatpush1.msra.mxu0 0.0
        %1115 = vmatprep.subr.mxu0 0.0
        %1116 = vmatpush1.msra.mxu0 0.0
        %1117 = vmatprep.subr.mxu0 0.0
        %1118 = vmatpush1.msra.mxu0 0.0
        %1119 = vmatprep.subr.mxu0 0.0
        %1120 = vmatpush1.msra.mxu0 0.0
        %1121 = vmatprep.subr.mxu0 0.0
        %1122 = vmatpush1.msra.mxu0 0.0
        %1123 = vmatprep.subr.mxu0 0.0
        %1124 = vmatpush1.msra.mxu0 0.0
        %1125 = vmatprep.subr.mxu0 0.0
        %1126 = vmatpush1.msra.mxu0 0.0
        %1127 = vmatprep.mubr.f32.mxu0 0.0
        %1128 = vmatmul.mubr.f32.gmra.mrb[0].mxu0 %v1052
        %v1129 = vpop.f32.mrb[0].mxu0
        %v1130 = vadd.f32 %v1033, %v1129
        %v1131 = vpop.f32.mrb[0].mxu0
        %1132 = vmatprep.mubr.f32.mxu0 0.0
        %1133 = vmatmul.mubr.f32.gmra.mrb[0].mxu0 %v1055
        %v1134 = vpop.f32.mrb[0].mxu0
        %v1135 = vadd.f32 %v1038, %v1134
        %v1136 = vpop.f32.mrb[0].mxu0
        %1137 = vmatprep.mubr.f32.mxu0 0.0
        %1138 = vmatmul.mubr.f32.gmra.mrb[0].mxu0 %v1058
        %v1139 = vpop.f32.mrb[0].mxu0
        %v1140 = vadd.f32 %v1043, %v1139
        %v1141 = vpop.f32.mrb[0].mxu0
        %1142 = vmatprep.mubr.f32.mxu0 0.0
        %1143 = vmatmul.mubr.f32.gmra.mrb[0].mxu0 %v1061
        %v1144 = vpop.f32.mrb[0].mxu0
        %v1145 = vadd.f32 %v1048, %v1144
        %v1146 = vpop.f32.mrb[0].mxu0
        %1147 = vdwg.mxu0
        %v1148 = vxor.u32 %v1130, 2147483648
        %v1149 = vxor.u32 %v1135, 2147483648
        %v1150 = vxor.u32 %v1140, 2147483648
        %v1151 = vxor.u32 %v1145, 2147483648
        %v1152 = vmul.f32 %v1148, 1.442695
        %v1153 = vpow.pop %v1152
        %v1154 = vmul.f32 %v1149, 1.442695
        %v1155 = vpow.pop %v1154
        %v1156 = vmul.f32 %v1150, 1.442695
        %v1157 = vpow.pop %v1156
        %v1158 = vmul.f32 %v1151, 1.442695
        %v1159 = vpow.pop %v1158
        %v1160 = vadd.f32 %v1153, 1.0
        %v1161 = vadd.f32 %v1155, 1.0
        %v1162 = vadd.f32 %v1157, 1.0
        %v1163 = vadd.f32 %v1159, 1.0
        %v1164 = vrcp.pop %v1160
        %v1165 = vmul.f32 1.0, %v1164
        %v1166 = vrcp.pop %v1161
        %v1167 = vmul.f32 1.0, %v1166
        %v1168 = vrcp.pop %v1162
        %v1169 = vmul.f32 1.0, %v1168
        %v1170 = vrcp.pop %v1163
        %v1171 = vmul.f32 1.0, %v1170
        %v1172 = vmul.f32 %v1130, %v1165
        %v1173 = vmul.f32 %v1135, %v1167
        %v1174 = vmul.f32 %v1140, %v1169
        %v1175 = vmul.f32 %v1145, %v1171
        %v1176 = vld [vmem:[%s588] sm:$0xff]
        %v1177 = vld [vmem:[%s588 + $0x8] sm:$0xff]
        %v1178 = vld [vmem:[%s588 + $0x10] sm:$0xff]
        %v1179 = vld [vmem:[%s588 + $0x18] sm:$0xff]
        %v1181 = vsel %vm1050, %v1176, 0
        %v1184 = vsel %vm1050, %v1177, 0
        %v1187 = vsel %vm1050, %v1178, 0
        %v1190 = vsel %vm1050, %v1179, 0
        %1192 = vmatprep.subr.mxu0 0.0
        %1193 = vmatpush1.msra.mxu0 %v1172
        %1194 = vmatprep.subr.mxu0 0.0
        %1195 = vmatpush1.msra.mxu0 %v1173
        %1196 = vmatprep.subr.mxu0 0.0
        %1197 = vmatpush1.msra.mxu0 %v1174
        %1198 = vmatprep.subr.mxu0 0.0
        %1199 = vmatpush1.msra.mxu0 %v1175
        %1200 = vmatprep.subr.mxu0 0.0
        %1201 = vmatpush1.msra.mxu0 0.0
        %1202 = vmatprep.subr.mxu0 0.0
        %1203 = vmatpush1.msra.mxu0 0.0
        %1204 = vmatprep.subr.mxu0 0.0
        %1205 = vmatpush1.msra.mxu0 0.0
        %1206 = vmatprep.subr.mxu0 0.0
        %1207 = vmatpush1.msra.mxu0 0.0
        %1208 = vmatprep.subr.mxu0 0.0
        %1209 = vmatpush1.msra.mxu0 0.0
        %1210 = vmatprep.subr.mxu0 0.0
        %1211 = vmatpush1.msra.mxu0 0.0
        %1212 = vmatprep.subr.mxu0 0.0
        %1213 = vmatpush1.msra.mxu0 0.0
        %1214 = vmatprep.subr.mxu0 0.0
        %1215 = vmatpush1.msra.mxu0 0.0
        %1216 = vmatprep.subr.mxu0 0.0
        %1217 = vmatpush1.msra.mxu0 0.0
        %1218 = vmatprep.subr.mxu0 0.0
        %1219 = vmatpush1.msra.mxu0 0.0
        %1220 = vmatprep.subr.mxu0 0.0
        %1221 = vmatpush1.msra.mxu0 0.0
        %1222 = vmatprep.subr.mxu0 0.0
        %1223 = vmatpush1.msra.mxu0 0.0
        %1224 = vmatprep.subr.mxu0 0.0
        %1225 = vmatpush1.msra.mxu0 0.0
        %1226 = vmatprep.subr.mxu0 0.0
        %1227 = vmatpush1.msra.mxu0 0.0
        %1228 = vmatprep.subr.mxu0 0.0
        %1229 = vmatpush1.msra.mxu0 0.0
        %1230 = vmatprep.subr.mxu0 0.0
        %1231 = vmatpush1.msra.mxu0 0.0
        %1232 = vmatprep.subr.mxu0 0.0
        %1233 = vmatpush1.msra.mxu0 0.0
        %1234 = vmatprep.subr.mxu0 0.0
        %1235 = vmatpush1.msra.mxu0 0.0
        %1236 = vmatprep.subr.mxu0 0.0
        %1237 = vmatpush1.msra.mxu0 0.0
        %1238 = vmatprep.subr.mxu0 0.0
        %1239 = vmatpush1.msra.mxu0 0.0
        %1240 = vmatprep.subr.mxu0 0.0
        %1241 = vmatpush1.msra.mxu0 0.0
        %1242 = vmatprep.subr.mxu0 0.0
        %1243 = vmatpush1.msra.mxu0 0.0
        %1244 = vmatprep.subr.mxu0 0.0
        %1245 = vmatpush1.msra.mxu0 0.0
        %1246 = vmatprep.subr.mxu0 0.0
        %1247 = vmatpush1.msra.mxu0 0.0
        %1248 = vmatprep.subr.mxu0 0.0
        %1249 = vmatpush1.msra.mxu0 0.0
        %1250 = vmatprep.subr.mxu0 0.0
        %1251 = vmatpush1.msra.mxu0 0.0
        %1252 = vmatprep.subr.mxu0 0.0
        %1253 = vmatpush1.msra.mxu0 0.0
        %1254 = vmatprep.subr.mxu0 0.0
        %1255 = vmatpush1.msra.mxu0 0.0
        %1256 = vmatprep.mubr.f32.mxu0 0.0
        %1257 = vmatmul.mubr.f32.gmra.mrb[0].mxu0 %v1181
        %v1258 = vpop.f32.mrb[0].mxu0
        %v1259 = vadd.f32 0.0, %v1258
        %v1260 = vpop.f32.mrb[0].mxu0
        %1261 = vmatprep.mubr.f32.mxu0 0.0
        %1262 = vmatmul.mubr.f32.gmra.mrb[0].mxu0 %v1184
        %v1263 = vpop.f32.mrb[0].mxu0
        %v1264 = vadd.f32 0.0, %v1263
        %v1265 = vpop.f32.mrb[0].mxu0
        %1266 = vmatprep.mubr.f32.mxu0 0.0
        %1267 = vmatmul.mubr.f32.gmra.mrb[0].mxu0 %v1187
        %v1268 = vpop.f32.mrb[0].mxu0
        %v1269 = vadd.f32 0.0, %v1268
        %v1270 = vpop.f32.mrb[0].mxu0
        %1271 = vmatprep.mubr.f32.mxu0 0.0
        %1272 = vmatmul.mubr.f32.gmra.mrb[0].mxu0 %v1190
        %v1273 = vpop.f32.mrb[0].mxu0
        %v1274 = vadd.f32 0.0, %v1273
        %v1275 = vpop.f32.mrb[0].mxu0
        %1276 = vdwg.mxu0
        %v1277 = vadd.f32 %v983, %v1259
        %v1278 = vadd.f32 %v984, %v1264
        %v1279 = vadd.f32 %v985, %v1269
        %v1280 = vadd.f32 %v986, %v1274
        %1281 = vset.pattern.permute.xlu0 1
        %1282 = vperm.xlu0 %1281, %v1022
        %v1283 = vpop.permute.xlu0 %1282
        %1285 = vset.pattern.permute.xlu0 1
        %1286 = vperm.xlu0 %1285, %v1023
        %v1287 = vpop.permute.xlu0 %1286
        %1289 = vset.pattern.permute.xlu0 1
        %1290 = vperm.xlu0 %1289, %v1024
        %v1291 = vpop.permute.xlu0 %1290
        %1293 = vset.pattern.permute.xlu0 1
        %1294 = vperm.xlu0 %1293, %v1025
        %v1295 = vpop.permute.xlu0 %1294
        %v1297 = vadd.f32 %v1277, %v1283
        %v1298 = vadd.f32 %v1278, %v1287
        %v1299 = vadd.f32 %v1279, %v1291
        %v1300 = vadd.f32 %v1280, %v1295
        %1301 = vst [vmem:[#allocation2] sm:$0xff] %v1297
        %1302 = vst [vmem:[#allocation2 + $0x8] sm:$0xff] %v1298
        %1303 = vst [vmem:[#allocation2 + $0x10] sm:$0xff] %v1299
        %1304 = vst [vmem:[#allocation2 + $0x18] sm:$0xff] %v1300
        %p1305 = scmp.eq.s32.totalorder %s40, 3
        // Predicated region
        $region121: #{tpu_custom_call.1} parent=67 // pred_check
          %p1306 = pneg %p1305
        $region122: #{tpu_custom_call.1} parent=67 // pred_check_branch
          %1308 = sbr.rel (%p1306) target = $region124
        $region123: #{tpu_custom_call.1} parent=67 // pred_region
          %v1309 = vadd.f32 %v1297, %v1298
          %v1310 = vadd.f32 %v1309, %v1299
          %v1311 = vadd.f32 %v1310, %v1300
          %v1312 = vrot.slane %v1311, 4
          %v1313 = vadd.f32 %v1311, %v1312
          %v1314 = vrot.slane %v1313, 2
          %v1315 = vadd.f32 %v1313, %v1314
          %v1316 = vrot.slane %v1315, 1
          %v1317 = vadd.f32 %v1315, %v1316
          %v1318 = vmul.f32 %v1317, %v996
          %v1319 = vsub.f32 %v1297, %v1318
          %v1320 = vsub.f32 %v1298, %v1318
          %v1321 = vsub.f32 %v1299, %v1318
          %v1322 = vsub.f32 %v1300, %v1318
          %v1323 = vmul.f32 %v1319, %v1319
          %v1324 = vmul.f32 %v1320, %v1320
          %v1325 = vmul.f32 %v1321, %v1321
          %v1326 = vmul.f32 %v1322, %v1322
          %v1327 = vadd.f32 %v1323, %v1324
          %v1328 = vadd.f32 %v1327, %v1325
          %v1329 = vadd.f32 %v1328, %v1326
          %v1330 = vrot.slane %v1329, 4
          %v1331 = vadd.f32 %v1329, %v1330
          %v1332 = vrot.slane %v1331, 2
          %v1333 = vadd.f32 %v1331, %v1332
          %v1334 = vrot.slane %v1333, 1
          %v1335 = vadd.f32 %v1333, %v1334
          %v1336 = vmul.f32 %v1335, %v996
          %v1337 = vadd.f32 %v1336, 1e-05
          %v1338 = vrsqrt.pop %v1337
          %v1339 = vmul.f32 %v1319, %v1338
          %v1340 = vmul.f32 %v1320, %v1338
          %v1341 = vmul.f32 %v1321, %v1338
          %v1342 = vmul.f32 %v1322, %v1338
          %v1343 = vld [vmem:[#allocation20] sm:$0xff]
          %v1344 = vld [vmem:[#allocation21] sm:$0xff]
          %1346 = vset.pattern.permute.xlu0 0
          %1347 = vperm.xlu0 %1346, %v1344
          %v1348 = vpop.permute.xlu0 %1347
          %v1351 = vsel %vm1050, %v1343, 0
          %1353 = vmatprep.subr.mxu0 0.0
          %1354 = vmatpush1.msra.mxu0 %v1339
          %1355 = vmatprep.subr.mxu0 0.0
          %1356 = vmatpush1.msra.mxu0 %v1340
          %1357 = vmatprep.subr.mxu0 0.0
          %1358 = vmatpush1.msra.mxu0 %v1341
          %1359 = vmatprep.subr.mxu0 0.0
          %1360 = vmatpush1.msra.mxu0 %v1342
          %1361 = vmatprep.subr.mxu0 0.0
          %1362 = vmatpush1.msra.mxu0 0.0
          %1363 = vmatprep.subr.mxu0 0.0
          %1364 = vmatpush1.msra.mxu0 0.0
          %1365 = vmatprep.subr.mxu0 0.0
          %1366 = vmatpush1.msra.mxu0 0.0
          %1367 = vmatprep.subr.mxu0 0.0
          %1368 = vmatpush1.msra.mxu0 0.0
          %1369 = vmatprep.subr.mxu0 0.0
          %1370 = vmatpush1.msra.mxu0 0.0
          %1371 = vmatprep.subr.mxu0 0.0
          %1372 = vmatpush1.msra.mxu0 0.0
          %1373 = vmatprep.subr.mxu0 0.0
          %1374 = vmatpush1.msra.mxu0 0.0
          %1375 = vmatprep.subr.mxu0 0.0
          %1376 = vmatpush1.msra.mxu0 0.0
          %1377 = vmatprep.subr.mxu0 0.0
          %1378 = vmatpush1.msra.mxu0 0.0
          %1379 = vmatprep.subr.mxu0 0.0
          %1380 = vmatpush1.msra.mxu0 0.0
          %1381 = vmatprep.subr.mxu0 0.0
          %1382 = vmatpush1.msra.mxu0 0.0
          %1383 = vmatprep.subr.mxu0 0.0
          %1384 = vmatpush1.msra.mxu0 0.0
          %1385 = vmatprep.subr.mxu0 0.0
          %1386 = vmatpush1.msra.mxu0 0.0
          %1387 = vmatprep.subr.mxu0 0.0
          %1388 = vmatpush1.msra.mxu0 0.0
          %1389 = vmatprep.subr.mxu0 0.0
          %1390 = vmatpush1.msra.mxu0 0.0
          %1391 = vmatprep.subr.mxu0 0.0
          %1392 = vmatpush1.msra.mxu0 0.0
          %1393 = vmatprep.subr.mxu0 0.0
          %1394 = vmatpush1.msra.mxu0 0.0
          %1395 = vmatprep.subr.mxu0 0.0
          %1396 = vmatpush1.msra.mxu0 0.0
          %1397 = vmatprep.subr.mxu0 0.0
          %1398 = vmatpush1.msra.mxu0 0.0
          %1399 = vmatprep.subr.mxu0 0.0
          %1400 = vmatpush1.msra.mxu0 0.0
          %1401 = vmatprep.subr.mxu0 0.0
          %1402 = vmatpush1.msra.mxu0 0.0
          %1403 = vmatprep.subr.mxu0 0.0
          %1404 = vmatpush1.msra.mxu0 0.0
          %1405 = vmatprep.subr.mxu0 0.0
          %1406 = vmatpush1.msra.mxu0 0.0
          %1407 = vmatprep.subr.mxu0 0.0
          %1408 = vmatpush1.msra.mxu0 0.0
          %1409 = vmatprep.subr.mxu0 0.0
          %1410 = vmatpush1.msra.mxu0 0.0
          %1411 = vmatprep.subr.mxu0 0.0
          %1412 = vmatpush1.msra.mxu0 0.0
          %1413 = vmatprep.subr.mxu0 0.0
          %1414 = vmatpush1.msra.mxu0 0.0
          %1415 = vmatprep.subr.mxu0 0.0
          %1416 = vmatpush1.msra.mxu0 0.0
          %1417 = vmatprep.mubr.f32.mxu0 0.0
          %1418 = vmatmul.mubr.f32.gmra.mrb[0].mxu0 %v1351
          %v1419 = vpop.f32.mrb[0].mxu0
          %v1420 = vadd.f32 %v1348, %v1419
          %v1421 = vpop.f32.mrb[0].mxu0
          %1422 = vdwg.mxu0
          %1423 = vst [vmem:[#allocation23] sm:$0xff] %v1420
        $region124: #{tpu_custom_call.1} parent=67 // pred_fallthru
          _
        // Predicated region
        $region125: #{tpu_custom_call.1} parent=67 // pred_check
          %p1424 = pneg %p342
        $region126: #{tpu_custom_call.1} parent=67 // pred_check_branch
          %1426 = sbr.rel (%p1424) target = $region128
        $region127: #{tpu_custom_call.1} parent=67 // pred_region
          %s1428 = ssub.s32 128, 128
          %1429 = vsyncadd [#allocation5], %s1428
          %s1430 = smul.addr %s39, 128
          %s1431 = scalar_lea.hbm %s12, %s1430
          %s1433 = sshll.u32 [#allocation23], 4
          %s1434 = int_to_ptr.vmem [resolvable:$true] %s1433
          %1436 = dma.vmem_to_hbm [thread:$0]  %s1434, 128, %s1431, [#allocation5]
        $region128: #{tpu_custom_call.1} parent=67 // pred_fallthru
          _
        // Predicated region
        $region129: #{tpu_custom_call.1} parent=67 // pred_check
          %p1437 = pneg %p342
        $region130: #{tpu_custom_call.1} parent=67 // pred_check_branch
          %1439 = sbr.rel (%p1437) target = $region132
        $region131: #{tpu_custom_call.1} parent=67 // pred_region
          %1440 = dma.done [#allocation5], 128
        $region132: #{tpu_custom_call.1} parent=67 // pred_fallthru
          _
      $region68: #{tpu_custom_call.1} parent=5 // pred_fallthru
        _
      %p1441 = scmp.le.s32.totalorder 2, %s30
      // Predicated region
      $region133: #{tpu_custom_call.1} parent=5 // pred_check
        %p1442 = pneg %p1441
      $region134: #{tpu_custom_call.1} parent=5 // pred_check_branch
        %1444 = sbr.rel (%p1442) target = $region136
      $region135: #{tpu_custom_call.1} parent=5 // pred_region
        %s1445 = ssub.s32 %s30, 2
      $region136: #{tpu_custom_call.1} parent=5 // pred_fallthru
        _
    $region6: #{tpu_custom_call.1} parent=1 // loop_footer
      %s34 = sadd.s32 1, %s30
    $region7: #{tpu_custom_call.1} parent=1 // loop_footer_branch
      %29 = sbr.rel target = $region3
    $region8: #{tpu_custom_call.1} parent=1 // loop_exit
      _
    %1446 = vsyncpa [#allocation4], 1
    %s1447 = scalar_lea.sflag [#allocation4], 1
    %1448 = vsyncpa %s1447, 1
    %1449 = vsyncpa [#allocation7], 1
    %1450 = vsyncpa [#allocation10], 1
    %1451 = vsyncpa [#allocation13], 1
    %1452 = vsyncpa [#allocation16], 1
    %s1453 = scalar_lea.sflag [#allocation16], 1
    %1454 = vsyncpa %s1453, 1
    %1455 = vsyncpa [#allocation19], 1
    %s1456 = scalar_lea.sflag [#allocation19], 1
    %1457 = vsyncpa %s1456, 1
    %1458 = vsyncpa [#allocation22], 1
    %1459 = vsyncpa [#allocation5], 1
    %s1460 = scalar_lea.sflag [#allocation5], 1
    %1461 = vsyncpa %s1460, 1

// kernel: tpu_custom_call.1
$region0: #{tpu_custom_call.1}
  #allocation0 [shape = 'u32[]', space=smem, size = 0x4, offset = 0x4, fixed_abs, tag = 'smem constant byte address 0x4 - core index']
  #allocation1 [shape = 'u32[144,128]{1,0:T(1,128)}', space=vmem, size = 0x12000, scoped, tag = 'internal scratch']
  #allocation2 [shape = 'f32[32,128]{1,0:T(8,128)}', space=vmem, size = 0x4000, scoped, tag = 'scratch operand']
  %s0 = inlined_call_operand.hbm [shape: f32[8,128], index: 0, kind: input, shape index: {}]
  %s1 = inlined_call_operand.hbm [shape: f32[1,128], index: 1, kind: input, shape index: {}]
  %s2 = inlined_call_operand.hbm [shape: f32[32,1], index: 2, kind: input, shape index: {}]
  %s3 = inlined_call_operand.hbm [shape: f32[32,1], index: 3, kind: input, shape index: {}]
  %s4 = inlined_call_operand.hbm [shape: f32[32,8], index: 4, kind: input, shape index: {}]
  %s5 = inlined_call_operand.hbm [shape: f32[32,32], index: 5, kind: input, shape index: {}]
  %s6 = inlined_call_operand.hbm [shape: f32[32,1], index: 6, kind: input, shape index: {}]
  %s7 = inlined_call_operand.hbm [shape: f32[4,32,32], index: 7, kind: input, shape index: {}]
  %s8 = inlined_call_operand.hbm [shape: f32[4,32,32], index: 8, kind: input, shape index: {}]
  %s9 = inlined_call_operand.hbm [shape: f32[4,32,2], index: 9, kind: input, shape index: {}]
  %s10 = inlined_call_operand.hbm [shape: f32[8,32], index: 10, kind: input, shape index: {}]
  %s11 = inlined_call_operand.hbm [shape: f32[8,1], index: 11, kind: input, shape index: {}]
  %s12 = inlined_call_operand.hbm [shape: f32[8,128], index: 12, kind: output, shape index: {}]
  %s13 = sld [smem:[#allocation0]]
  $region137: #{tpu_custom_call.1} parent=0
    _
  %s15 = ssub.s32 1, %s13
  %s16 = scalar_select 0, %s15, %s13
  $region1: #{tpu_custom_call.1} parent=0
    #allocation3 [shape = 'u8[4096]{0}', space=vmem, size = 0x1000, scoped, tag = 'input window, operand 0, single buffered']
    #allocation4 [shape = 's32[2]{0}', space=sflag, size = 0x8, scoped, tag = 'scoped memory for tpu_custom_call.1']
    #allocation5 [shape = 's32[2]{0}', space=sflag, size = 0x8, scoped, tag = 'scoped memory for tpu_custom_call.1']
    #allocation6 [shape = 'u8[512]{0}', space=vmem, size = 0x400, scoped, tag = 'input window, operand 1, single buffered']
    #allocation7 [shape = 's32[1]{0}', space=sflag, size = 0x4, scoped, tag = 'scoped memory for tpu_custom_call.1']
    #allocation8 [shape = 'u8[16384]{0}', space=vmem, size = 0x4000, scoped, tag = 'input window, operand 2, single buffered']
    #allocation9 [shape = 'u8[16384]{0}', space=vmem, size = 0x4000, scoped, tag = 'input window, operand 3, single buffered']
    #allocation10 [shape = 's32[1]{0}', space=sflag, size = 0x4, scoped, tag = 'scoped memory for tpu_custom_call.1']
    #allocation11 [shape = 'u8[16384]{0}', space=vmem, size = 0x4000, scoped, tag = 'input window, operand 4, single buffered']
    #allocation12 [shape = 'u8[16384]{0}', space=vmem, size = 0x4000, scoped, tag = 'input window, operand 5, single buffered']
    #allocation13 [shape = 's32[1]{0}', space=sflag, size = 0x4, scoped, tag = 'scoped memory for tpu_custom_call.1']
    #allocation14 [shape = 'u8[16384]{0}', space=vmem, size = 0x4000, scoped, tag = 'input window, operand 6, single buffered']
    #allocation15 [shape = 'u8[32768]{0}', space=vmem, size = 0x8000, scoped, tag = 'input window, operand 7']
    #allocation16 [shape = 's32[2]{0}', space=sflag, size = 0x8, scoped, tag = 'scoped memory for tpu_custom_call.1']
    #allocation17 [shape = 'u8[32768]{0}', space=vmem, size = 0x8000, scoped, tag = 'input window, operand 8']
    #allocation18 [shape = 'u8[32768]{0}', space=vmem, size = 0x8000, scoped, tag = 'input window, operand 9']
    #allocation19 [shape = 's32[2]{0}', space=sflag, size = 0x8, scoped, tag = 'scoped memory for tpu_custom_call.1']
    #allocation20 [shape = 'u8[4096]{0}', space=vmem, size = 0x1000, scoped, tag = 'input window, operand 10, single buffered']
    #allocation21 [shape = 'u8[4096]{0}', space=vmem, size = 0x1000, scoped, tag = 'input window, operand 11, single buffered']
    #allocation22 [shape = 's32[1]{0}', space=sflag, size = 0x4, scoped, tag = 'scoped memory for tpu_custom_call.1']
    #allocation23 [shape = 'u8[4096]{0}', space=vmem, size = 0x1000, scoped, tag = 'output window, operand 0, single buffered']
    %17 = vsyncpa [#allocation4], 0
    %18 = vsyncpa [#allocation7], 0
    %19 = vsyncpa [#allocation10], 0
    %20 = vsyncpa [#allocation13], 0
    %21 = vsyncpa [#allocation16], 0
    %s22 = scalar_lea.sflag [#allocation16], 1
    %23 = vsyncpa %s22, 0
    %24 = vsyncpa [#allocation19], 0
    %s25 = scalar_lea.sflag [#allocation19], 1
    %26 = vsyncpa %s25, 0
    %27 = vsyncpa [#allocation22], 0
    %28 = vsyncpa [#allocation5], 0
    loop: start=0, step=1, limit=6
    $region2: #{tpu_custom_call.1} parent=1 // loop_pre_header
      _
    $region3: #{tpu_custom_call.1} parent=1 // loop_header
      %s30 = sphi 0, %s34
      %p31 = scmp.ge.s32.totalorder %s30, 6
      %s37 = sphi 0, %s49
      %s38 = sphi 0, %s45
      %s39 = sphi 0, %s37
      %s40 = sphi 0, %s38
      %s41 = sphi 0, %s39
      %s42 = sphi 0, %s40
      %s52 = sphi 0, %s54
      %s55 = sphi 0, %s52
      %s56 = sphi 0, %s55
      %s72 = sphi 0, %s56
      %s78 = sphi 0, %s80
      %s81 = sphi 0, %s78
      %s82 = sphi 0, %s81
      %s98 = sphi 0, %s82
      %s102 = sphi 0, %s102
      %s104 = sphi 0, %s102
      %s105 = sphi 0, %s104
      %s119 = sphi 0, %s105
      %s123 = sphi 0, %s123
      %s125 = sphi 0, %s123
      %s126 = sphi 0, %s125
      %s140 = sphi 0, %s126
      %s144 = sphi 0, %s144
      %s146 = sphi 0, %s144
      %s147 = sphi 0, %s146
      %s161 = sphi 0, %s147
      %s165 = sphi 0, %s165
      %s167 = sphi 0, %s165
      %s168 = sphi 0, %s167
      %s182 = sphi 0, %s168
      %s186 = sphi 0, %s186
      %s188 = sphi 0, %s186
      %s189 = sphi 0, %s188
      %s203 = sphi 0, %s189
      %s209 = sphi 0, %s211
      %s212 = sphi 0, %s209
      %s213 = sphi 0, %s212
      %s229 = sphi 0, %s213
      %s235 = sphi 0, %s237
      %s238 = sphi 0, %s235
      %s239 = sphi 0, %s238
      %s255 = sphi 0, %s239
      %s261 = sphi 0, %s263
      %s264 = sphi 0, %s261
      %s265 = sphi 0, %s264
      %s281 = sphi 0, %s265
      %s285 = sphi 0, %s285
      %s287 = sphi 0, %s285
      %s288 = sphi 0, %s287
      %s302 = sphi 0, %s288
      %s306 = sphi 0, %s306
      %s308 = sphi 0, %s306
      %s309 = sphi 0, %s308
      %s323 = sphi 0, %s309
      %s329 = sphi 0, %s331
      %s332 = sphi 0, %s329
      %s333 = sphi 0, %s332
      %s349 = sphi 0, %s333
    $region4: #{tpu_custom_call.1} parent=1 // loop_header_branch
      %33 = sbr.rel (%p31) target = $region8
    $region5: #{tpu_custom_call.1} parent=1 // loop_body
      %s35 = ssub.s32 %s30, 1
      %s36 = ssub.s32 %s30, 2
      %s43 = sadd.s32 1, %s38
      %p44 = scmp.ge.s32.totalorder %s43, 4
      %s45 = scalar_select %p44, 0, %s43
      %s46 = sadd.s32 1, %s37
      %s47 = scalar_select %p44, %s46, %s37
      %p48 = scmp.ge.s32.totalorder %s47, 1
      %s49 = scalar_select %p48, 0, %s47
      %s50 = ssub.s32 %s37, %s49
      %p51 = scmp.eq.s32.totalorder %s50, 0
      %s53 = sadd.s32 %s52, 1
      %s54 = scalar_select %p51, %s52, %s53
      %p57 = pneg %p51
      %p58 = scmp.eq.s32.totalorder %s30, 3
      %p59 = por %p57, %p58
      %p60 = scmp.ne.s32.totalorder %s52, %s55
      %p61 = scmp.eq.s32.totalorder %s30, 0
      %p62 = por %p60, %p61
      %p63 = scmp.ne.s32.totalorder %s52, %s55
      %p64 = scmp.eq.s32.totalorder %s35, 3
      %p65 = por %p63, %p64
      %p66 = scmp.ne.s32.totalorder %s55, %s56
      %p67 = scmp.eq.s32.totalorder %s35, 0
      %p68 = por %p66, %p67
      %p69 = scmp.ne.s32.totalorder %s55, %s56
      %p70 = scmp.eq.s32.totalorder %s36, 3
      %p71 = por %p69, %p70
      %p73 = scmp.ne.s32.totalorder %s56, %s72
      %p74 = scmp.eq.s32.totalorder %s36, 0
      %p75 = por %p73, %p74
      %s76 = ssub.s32 %s37, %s49
      %p77 = scmp.eq.s32.totalorder %s76, 0
      %s79 = sadd.s32 %s78, 1
      %s80 = scalar_select %p77, %s78, %s79
      %p83 = pneg %p77
      %p84 = scmp.eq.s32.totalorder %s30, 3
      %p85 = por %p83, %p84
      %p86 = scmp.ne.s32.totalorder %s78, %s81
      %p87 = scmp.eq.s32.totalorder %s30, 0
      %p88 = por %p86, %p87
      %p89 = scmp.ne.s32.totalorder %s78, %s81
      %p90 = scmp.eq.s32.totalorder %s35, 3
      %p91 = por %p89, %p90
      %p92 = scmp.ne.s32.totalorder %s81, %s82
      %p93 = scmp.eq.s32.totalorder %s35, 0
      %p94 = por %p92, %p93
      %p95 = scmp.ne.s32.totalorder %s81, %s82
      %p96 = scmp.eq.s32.totalorder %s36, 3
      %p97 = por %p95, %p96
      %p99 = scmp.ne.s32.totalorder %s82, %s98
      %p100 = scmp.eq.s32.totalorder %s36, 0
      %p101 = por %p99, %p100
      %s103 = sadd.s32 %s102, 1
      %p106 = scmp.eq.s32.totalorder %s30, 3
      %p107 = scmp.ne.s32.totalorder %s102, %s104
      %p108 = scmp.eq.s32.totalorder %s30, 0
      %p109 = por %p107, %p108
      %p110 = scmp.ne.s32.totalorder %s102, %s104
      %p111 = scmp.eq.s32.totalorder %s35, 3
      %p112 = por %p110, %p111
      %p113 = scmp.ne.s32.totalorder %s104, %s105
      %p114 = scmp.eq.s32.totalorder %s35, 0
      %p115 = por %p113, %p114
      %p116 = scmp.ne.s32.totalorder %s104, %s105
      %p117 = scmp.eq.s32.totalorder %s36, 3
      %p118 = por %p116, %p117
      %p120 = scmp.ne.s32.totalorder %s105, %s119
      %p121 = scmp.eq.s32.totalorder %s36, 0
      %p122 = por %p120, %p121
      %s124 = sadd.s32 %s123, 1
      %p127 = scmp.eq.s32.totalorder %s30, 3
      %p128 = scmp.ne.s32.totalorder %s123, %s125
      %p129 = scmp.eq.s32.totalorder %s30, 0
      %p130 = por %p128, %p129
      %p131 = scmp.ne.s32.totalorder %s123, %s125
      %p132 = scmp.eq.s32.totalorder %s35, 3
      %p133 = por %p131, %p132
      %p134 = scmp.ne.s32.totalorder %s125, %s126
      %p135 = scmp.eq.s32.totalorder %s35, 0
      %p136 = por %p134, %p135
      %p137 = scmp.ne.s32.totalorder %s125, %s126
      %p138 = scmp.eq.s32.totalorder %s36, 3
      %p139 = por %p137, %p138
      %p141 = scmp.ne.s32.totalorder %s126, %s140
      %p142 = scmp.eq.s32.totalorder %s36, 0
      %p143 = por %p141, %p142
      %s145 = sadd.s32 %s144, 1
      %p148 = scmp.eq.s32.totalorder %s30, 3
      %p149 = scmp.ne.s32.totalorder %s144, %s146
      %p150 = scmp.eq.s32.totalorder %s30, 0
      %p151 = por %p149, %p150
      %p152 = scmp.ne.s32.totalorder %s144, %s146
      %p153 = scmp.eq.s32.totalorder %s35, 3
      %p154 = por %p152, %p153
      %p155 = scmp.ne.s32.totalorder %s146, %s147
      %p156 = scmp.eq.s32.totalorder %s35, 0
      %p157 = por %p155, %p156
      %p158 = scmp.ne.s32.totalorder %s146, %s147
      %p159 = scmp.eq.s32.totalorder %s36, 3
      %p160 = por %p158, %p159
      %p162 = scmp.ne.s32.totalorder %s147, %s161
      %p163 = scmp.eq.s32.totalorder %s36, 0
      %p164 = por %p162, %p163
      %s166 = sadd.s32 %s165, 1
      %p169 = scmp.eq.s32.totalorder %s30, 3
      %p170 = scmp.ne.s32.totalorder %s165, %s167
      %p171 = scmp.eq.s32.totalorder %s30, 0
      %p172 = por %p170, %p171
      %p173 = scmp.ne.s32.totalorder %s165, %s167
      %p174 = scmp.eq.s32.totalorder %s35, 3
      %p175 = por %p173, %p174
      %p176 = scmp.ne.s32.totalorder %s167, %s168
      %p177 = scmp.eq.s32.totalorder %s35, 0
      %p178 = por %p176, %p177
      %p179 = scmp.ne.s32.totalorder %s167, %s168
      %p180 = scmp.eq.s32.totalorder %s36, 3
      %p181 = por %p179, %p180
      %p183 = scmp.ne.s32.totalorder %s168, %s182
      %p184 = scmp.eq.s32.totalorder %s36, 0
      %p185 = por %p183, %p184
      %s187 = sadd.s32 %s186, 1
      %p190 = scmp.eq.s32.totalorder %s30, 3
      %p191 = scmp.ne.s32.totalorder %s186, %s188
      %p192 = scmp.eq.s32.totalorder %s30, 0
      %p193 = por %p191, %p192
      %p194 = scmp.ne.s32.totalorder %s186, %s188
      %p195 = scmp.eq.s32.totalorder %s35, 3
      %p196 = por %p194, %p195
      %p197 = scmp.ne.s32.totalorder %s188, %s189
      %p198 = scmp.eq.s32.totalorder %s35, 0
      %p199 = por %p197, %p198
      %p200 = scmp.ne.s32.totalorder %s188, %s189
      %p201 = scmp.eq.s32.totalorder %s36, 3
      %p202 = por %p200, %p201
      %p204 = scmp.ne.s32.totalorder %s189, %s203
      %p205 = scmp.eq.s32.totalorder %s36, 0
      %p206 = por %p204, %p205
      %s207 = ssub.s32 %s38, %s45
      %p208 = scmp.eq.s32.totalorder %s207, 0
      %s210 = sadd.s32 %s209, 1
      %s211 = scalar_select %p208, %s209, %s210
      %p214 = pneg %p208
      %p215 = scmp.eq.s32.totalorder %s30, 3
      %p216 = por %p214, %p215
      %p217 = scmp.ne.s32.totalorder %s209, %s212
      %p218 = scmp.eq.s32.totalorder %s30, 0
      %p219 = por %p217, %p218
      %p220 = scmp.ne.s32.totalorder %s209, %s212
      %p221 = scmp.eq.s32.totalorder %s35, 3
      %p222 = por %p220, %p221
      %p223 = scmp.ne.s32.totalorder %s212, %s213
      %p224 = scmp.eq.s32.totalorder %s35, 0
      %p225 = por %p223, %p224
      %p226 = scmp.ne.s32.totalorder %s212, %s213
      %p227 = scmp.eq.s32.totalorder %s36, 3
      %p228 = por %p226, %p227
      %p230 = scmp.ne.s32.totalorder %s213, %s229
      %p231 = scmp.eq.s32.totalorder %s36, 0
      %p232 = por %p230, %p231
      %s233 = ssub.s32 %s38, %s45
      %p234 = scmp.eq.s32.totalorder %s233, 0
      %s236 = sadd.s32 %s235, 1
      %s237 = scalar_select %p234, %s235, %s236
      %p240 = pneg %p234
      %p241 = scmp.eq.s32.totalorder %s30, 3
      %p242 = por %p240, %p241
      %p243 = scmp.ne.s32.totalorder %s235, %s238
      %p244 = scmp.eq.s32.totalorder %s30, 0
      %p245 = por %p243, %p244
      %p246 = scmp.ne.s32.totalorder %s235, %s238
      %p247 = scmp.eq.s32.totalorder %s35, 3
      %p248 = por %p246, %p247
      %p249 = scmp.ne.s32.totalorder %s238, %s239
      %p250 = scmp.eq.s32.totalorder %s35, 0
      %p251 = por %p249, %p250
      %p252 = scmp.ne.s32.totalorder %s238, %s239
      %p253 = scmp.eq.s32.totalorder %s36, 3
      %p254 = por %p252, %p253
      %p256 = scmp.ne.s32.totalorder %s239, %s255
      %p257 = scmp.eq.s32.totalorder %s36, 0
      %p258 = por %p256, %p257
      %s259 = ssub.s32 %s38, %s45
      %p260 = scmp.eq.s32.totalorder %s259, 0
      %s262 = sadd.s32 %s261, 1
      %s263 = scalar_select %p260, %s261, %s262
      %p266 = pneg %p260
      %p267 = scmp.eq.s32.totalorder %s30, 3
      %p268 = por %p266, %p267
      %p269 = scmp.ne.s32.totalorder %s261, %s264
      %p270 = scmp.eq.s32.totalorder %s30, 0
      %p271 = por %p269, %p270
      %p272 = scmp.ne.s32.totalorder %s261, %s264
      %p273 = scmp.eq.s32.totalorder %s35, 3
      %p274 = por %p272, %p273
      %p275 = scmp.ne.s32.totalorder %s264, %s265
      %p276 = scmp.eq.s32.totalorder %s35, 0
      %p277 = por %p275, %p276
      %p278 = scmp.ne.s32.totalorder %s264, %s265
      %p279 = scmp.eq.s32.totalorder %s36, 3
      %p280 = por %p278, %p279
      %p282 = scmp.ne.s32.totalorder %s265, %s281
      %p283 = scmp.eq.s32.totalorder %s36, 0
      %p284 = por %p282, %p283
      %s286 = sadd.s32 %s285, 1
      %p289 = scmp.eq.s32.totalorder %s30, 3
      %p290 = scmp.ne.s32.totalorder %s285, %s287
      %p291 = scmp.eq.s32.totalorder %s30, 0
      %p292 = por %p290, %p291
      %p293 = scmp.ne.s32.totalorder %s285, %s287
      %p294 = scmp.eq.s32.totalorder %s35, 3
      %p295 = por %p293, %p294
      %p296 = scmp.ne.s32.totalorder %s287, %s288
      %p297 = scmp.eq.s32.totalorder %s35, 0
      %p298 = por %p296, %p297
      %p299 = scmp.ne.s32.totalorder %s287, %s288
      %p300 = scmp.eq.s32.totalorder %s36, 3
      %p301 = por %p299, %p300
      %p303 = scmp.ne.s32.totalorder %s288, %s302
      %p304 = scmp.eq.s32.totalorder %s36, 0
      %p305 = por %p303, %p304
      %s307 = sadd.s32 %s306, 1
      %p310 = scmp.eq.s32.totalorder %s30, 3
      %p311 = scmp.ne.s32.totalorder %s306, %s308
      %p312 = scmp.eq.s32.totalorder %s30, 0
      %p313 = por %p311, %p312
      %p314 = scmp.ne.s32.totalorder %s306, %s308
      %p315 = scmp.eq.s32.totalorder %s35, 3
      %p316 = por %p314, %p315
      %p317 = scmp.ne.s32.totalorder %s308, %s309
      %p318 = scmp.eq.s32.totalorder %s35, 0
      %p319 = por %p317, %p318
      %p320 = scmp.ne.s32.totalorder %s308, %s309
      %p321 = scmp.eq.s32.totalorder %s36, 3
      %p322 = por %p320, %p321
      %p324 = scmp.ne.s32.totalorder %s309, %s323
      %p325 = scmp.eq.s32.totalorder %s36, 0
      %p326 = por %p324, %p325
      %s327 = ssub.s32 %s37, %s49
      %p328 = scmp.eq.s32.totalorder %s327, 0
      %s330 = sadd.s32 %s329, 1
      %s331 = scalar_select %p328, %s329, %s330
      %p334 = pneg %p328
      %p335 = scmp.eq.s32.totalorder %s30, 3
      %p336 = por %p334, %p335
      %p337 = scmp.ne.s32.totalorder %s329, %s332
      %p338 = scmp.eq.s32.totalorder %s30, 0
      %p339 = por %p337, %p338
      %p340 = scmp.ne.s32.totalorder %s329, %s332
      %p341 = scmp.eq.s32.totalorder %s35, 3
      %p342 = por %p340, %p341
      %p343 = scmp.ne.s32.totalorder %s332, %s333
      %p344 = scmp.eq.s32.totalorder %s35, 0
      %p345 = por %p343, %p344
      %p346 = scmp.ne.s32.totalorder %s332, %s333
      %p347 = scmp.eq.s32.totalorder %s36, 3
      %p348 = por %p346, %p347
      %p350 = scmp.ne.s32.totalorder %s333, %s349
      %p351 = scmp.eq.s32.totalorder %s36, 0
      %p352 = por %p350, %p351
      %p353 = scmp.le.s32.totalorder 1, %s30
      %p354 = scmp.lt.s32.totalorder %s30, 5
      %p355 = pnand %p353, %p354
      %p356 = pneg %p355
      // Predicated region
      $region9: #{tpu_custom_call.1} parent=5 // pred_check
        _
      $region10: #{tpu_custom_call.1} parent=5 // pred_check_branch
        %358 = sbr.rel (%p355) target = $region12
      $region11: #{tpu_custom_call.1} parent=5 // pred_region
        %s359 = ssub.s32 %s30, 1
        // Predicated region
        $region13: #{tpu_custom_call.1} parent=11 // pred_check
          %p360 = pneg %p68
        $region14: #{tpu_custom_call.1} parent=11 // pred_check_branch
          %362 = sbr.rel (%p360) target = $region16
        $region15: #{tpu_custom_call.1} parent=11 // pred_region
          %s364 = ssub.s32 128, 128
          %365 = vsyncadd [#allocation4], %s364
          %s366 = smul.addr %s39, 128
          %s367 = scalar_lea.hbm %s0, %s366
          %s369 = sshll.u32 [#allocation3], 4
          %s370 = int_to_ptr.vmem [resolvable:$true] %s369
          %372 = dma.hbm_to_vmem [thread:$0]  %s367, 128, %s370, [#allocation4]
        $region16: #{tpu_custom_call.1} parent=11 // pred_fallthru
          _
        // Predicated region
        $region17: #{tpu_custom_call.1} parent=11 // pred_check
          %p373 = pneg %p94
        $region18: #{tpu_custom_call.1} parent=11 // pred_check_branch
          %375 = sbr.rel (%p373) target = $region20
        $region19: #{tpu_custom_call.1} parent=11 // pred_region
          %s377 = ssub.s32 16, 16
          %378 = vsyncadd [#allocation7], %s377
          %s379 = smul.addr %s39, 16
          %s380 = scalar_lea.hbm %s1, %s379
          %s382 = sshll.u32 [#allocation6], 4
          %s383 = int_to_ptr.vmem [resolvable:$true] %s382
          %385 = dma.hbm_to_vmem [thread:$0]  %s380, 16, %s383, [#allocation7]
        $region20: #{tpu_custom_call.1} parent=11 // pred_fallthru
          _
        // Predicated region
        $region21: #{tpu_custom_call.1} parent=11 // pred_check
          %p386 = pneg %p115
        $region22: #{tpu_custom_call.1} parent=11 // pred_check_branch
          %388 = sbr.rel (%p386) target = $region24
        $region23: #{tpu_custom_call.1} parent=11 // pred_region
          %s390 = ssub.s32 512, 512
          %391 = vsyncadd [#allocation7], %s390
          %s392 = sshll.u32 [#allocation8], 4
          %s393 = int_to_ptr.vmem [resolvable:$true] %s392
          %398 = dma.hbm_to_vmem [thread:$0]  %s2, 512, %s393, [#allocation7], 128, 128, 8
        $region24: #{tpu_custom_call.1} parent=11 // pred_fallthru
          _
        // Predicated region
        $region25: #{tpu_custom_call.1} parent=11 // pred_check
          %p399 = pneg %p136
        $region26: #{tpu_custom_call.1} parent=11 // pred_check_branch
          %401 = sbr.rel (%p399) target = $region28
        $region27: #{tpu_custom_call.1} parent=11 // pred_region
          %s403 = ssub.s32 512, 512
          %404 = vsyncadd [#allocation10], %s403
          %s405 = sshll.u32 [#allocation9], 4
          %s406 = int_to_ptr.vmem [resolvable:$true] %s405
          %411 = dma.hbm_to_vmem [thread:$0]  %s3, 512, %s406, [#allocation10], 128, 128, 8
        $region28: #{tpu_custom_call.1} parent=11 // pred_fallthru
          _
        // Predicated region
        $region29: #{tpu_custom_call.1} parent=11 // pred_check
          %p412 = pneg %p157
        $region30: #{tpu_custom_call.1} parent=11 // pred_check_branch
          %414 = sbr.rel (%p412) target = $region32
        $region31: #{tpu_custom_call.1} parent=11 // pred_region
          %s416 = ssub.s32 512, 512
          %417 = vsyncadd [#allocation10], %s416
          %s418 = sshll.u32 [#allocation11], 4
          %s419 = int_to_ptr.vmem [resolvable:$true] %s418
          %424 = dma.hbm_to_vmem [thread:$0]  %s4, 512, %s419, [#allocation10], 128, 128, 8
        $region32: #{tpu_custom_call.1} parent=11 // pred_fallthru
          _
        // Predicated region
        $region33: #{tpu_custom_call.1} parent=11 // pred_check
          %p425 = pneg %p178
        $region34: #{tpu_custom_call.1} parent=11 // pred_check_branch
          %427 = sbr.rel (%p425) target = $region36
        $region35: #{tpu_custom_call.1} parent=11 // pred_region
          %s429 = ssub.s32 512, 512
          %430 = vsyncadd [#allocation13], %s429
          %s431 = sshll.u32 [#allocation12], 4
          %s432 = int_to_ptr.vmem [resolvable:$true] %s431
          %437 = dma.hbm_to_vmem [thread:$0]  %s5, 512, %s432, [#allocation13], 128, 128, 8
        $region36: #{tpu_custom_call.1} parent=11 // pred_fallthru
          _
        // Predicated region
        $region37: #{tpu_custom_call.1} parent=11 // pred_check
          %p438 = pneg %p199
        $region38: #{tpu_custom_call.1} parent=11 // pred_check_branch
          %440 = sbr.rel (%p438) target = $region40
        $region39: #{tpu_custom_call.1} parent=11 // pred_region
          %s442 = ssub.s32 512, 512
          %443 = vsyncadd [#allocation13], %s442
          %s444 = sshll.u32 [#allocation14], 4
          %s445 = int_to_ptr.vmem [resolvable:$true] %s444
          %450 = dma.hbm_to_vmem [thread:$0]  %s6, 512, %s445, [#allocation13], 128, 128, 8
        $region40: #{tpu_custom_call.1} parent=11 // pred_fallthru
          _
        // Predicated region
        $region41: #{tpu_custom_call.1} parent=11 // pred_check
          %p451 = pneg %p298
        $region42: #{tpu_custom_call.1} parent=11 // pred_check_branch
          %453 = sbr.rel (%p451) target = $region44
        $region43: #{tpu_custom_call.1} parent=11 // pred_region
          %s455 = ssub.s32 128, 128
          %456 = vsyncadd [#allocation19], %s455
          %s458 = sshll.u32 [#allocation20], 4
          %s459 = int_to_ptr.vmem [resolvable:$true] %s458
          %461 = dma.hbm_to_vmem [thread:$0]  %s10, 128, %s459, [#allocation19]
        $region44: #{tpu_custom_call.1} parent=11 // pred_fallthru
          _
        // Predicated region
        $region45: #{tpu_custom_call.1} parent=11 // pred_check
          %p462 = pneg %p319
        $region46: #{tpu_custom_call.1} parent=11 // pred_check_branch
          %464 = sbr.rel (%p462) target = $region48
        $region47: #{tpu_custom_call.1} parent=11 // pred_region
          %s466 = ssub.s32 128, 128
          %467 = vsyncadd [#allocation22], %s466
          %s469 = sshll.u32 [#allocation21], 4
          %s470 = int_to_ptr.vmem [resolvable:$true] %s469
          %472 = dma.hbm_to_vmem [thread:$0]  %s11, 128, %s470, [#allocation22]
        $region48: #{tpu_custom_call.1} parent=11 // pred_fallthru
          _
      $region12: #{tpu_custom_call.1} parent=5 // pred_fallthru
        _
      %p473 = scmp.lt.s32.totalorder %s30, 4
      // Predicated region
      $region49: #{tpu_custom_call.1} parent=5 // pred_check
        %p474 = pneg %p473
      $region50: #{tpu_custom_call.1} parent=5 // pred_check_branch
        %476 = sbr.rel (%p474) target = $region52
      $region51: #{tpu_custom_call.1} parent=5 // pred_region
        // Predicated region
        $region53: #{tpu_custom_call.1} parent=51 // pred_check
          %p477 = pneg %p219
        $region54: #{tpu_custom_call.1} parent=51 // pred_check_branch
          %479 = sbr.rel (%p477) target = $region56
        $region55: #{tpu_custom_call.1} parent=51 // pred_region
          %s480 = sand.u32 %s30, 1
          %s481 = scalar_lea.sflag [#allocation16], %s480
          %s482 = sand.u32 %s209, 1
          %s483 = smul.addr %s482, 32
          %s484 = scalar_lea.vmem [#allocation15], %s483
          %s486 = ssub.s32 512, 512
          %487 = vsyncadd %s481, %s486
          %s488 = smul.addr %s38, 4
          %s489 = smul.addr %s488, 128
          %s490 = scalar_lea.hbm %s7, %s489
          %s491 = sshll.u32 %s484, 4
          %s492 = int_to_ptr.vmem [resolvable:$true] %s491
          %497 = dma.hbm_to_vmem [thread:$0]  %s490, 512, %s492, %s481, 128, 128, 8
        $region56: #{tpu_custom_call.1} parent=51 // pred_fallthru
          _
        // Predicated region
        $region57: #{tpu_custom_call.1} parent=51 // pred_check
          %p498 = pneg %p245
        $region58: #{tpu_custom_call.1} parent=51 // pred_check_branch
          %500 = sbr.rel (%p498) target = $region60
        $region59: #{tpu_custom_call.1} parent=51 // pred_region
          %s501 = sand.u32 %s30, 1
          %s502 = scalar_lea.sflag [#allocation16], %s501
          %s503 = sand.u32 %s235, 1
          %s504 = smul.addr %s503, 32
          %s505 = scalar_lea.vmem [#allocation17], %s504
          %s507 = ssub.s32 512, 512
          %508 = vsyncadd %s502, %s507
          %s509 = smul.addr %s38, 4
          %s510 = smul.addr %s509, 128
          %s511 = scalar_lea.hbm %s8, %s510
          %s512 = sshll.u32 %s505, 4
          %s513 = int_to_ptr.vmem [resolvable:$true] %s512
          %518 = dma.hbm_to_vmem [thread:$0]  %s511, 512, %s513, %s502, 128, 128, 8
        $region60: #{tpu_custom_call.1} parent=51 // pred_fallthru
          _
        // Predicated region
        $region61: #{tpu_custom_call.1} parent=51 // pred_check
          %p519 = pneg %p271
        $region62: #{tpu_custom_call.1} parent=51 // pred_check_branch
          %521 = sbr.rel (%p519) target = $region64
        $region63: #{tpu_custom_call.1} parent=51 // pred_region
          %s522 = sand.u32 %s30, 1
          %s523 = scalar_lea.sflag [#allocation19], %s522
          %s524 = sand.u32 %s261, 1
          %s525 = smul.addr %s524, 32
          %s526 = scalar_lea.vmem [#allocation18], %s525
          %s528 = ssub.s32 512, 512
          %529 = vsyncadd %s523, %s528
          %s530 = smul.addr %s38, 4
          %s531 = smul.addr %s530, 128
          %s532 = scalar_lea.hbm %s9, %s531
          %s533 = sshll.u32 %s526, 4
          %s534 = int_to_ptr.vmem [resolvable:$true] %s533
          %539 = dma.hbm_to_vmem [thread:$0]  %s532, 512, %s534, %s523, 128, 128, 8
        $region64: #{tpu_custom_call.1} parent=51 // pred_fallthru
          _
      $region52: #{tpu_custom_call.1} parent=5 // pred_fallthru
        _
      %p540 = scmp.le.s32.totalorder 1, %s30
      %p541 = scmp.lt.s32.totalorder %s30, 5
      %p542 = pnand %p540, %p541
      %p543 = pneg %p542
      // Predicated region
      $region65: #{tpu_custom_call.1} parent=5 // pred_check
        _
      $region66: #{tpu_custom_call.1} parent=5 // pred_check_branch
        %545 = sbr.rel (%p542) target = $region68
      $region67: #{tpu_custom_call.1} parent=5 // pred_region
        %s546 = ssub.s32 %s30, 1
        // Predicated region
        $region69: #{tpu_custom_call.1} parent=67 // pred_check
          %p547 = pneg %p68
        $region70: #{tpu_custom_call.1} parent=67 // pred_check_branch
          %549 = sbr.rel (%p547) target = $region72
        $region71: #{tpu_custom_call.1} parent=67 // pred_region
          %550 = dma.done [#allocation4], 128
        $region72: #{tpu_custom_call.1} parent=67 // pred_fallthru
          _
        // Predicated region
        $region73: #{tpu_custom_call.1} parent=67 // pred_check
          %p551 = pneg %p94
        $region74: #{tpu_custom_call.1} parent=67 // pred_check_branch
          %553 = sbr.rel (%p551) target = $region76
        $region75: #{tpu_custom_call.1} parent=67 // pred_region
          %554 = dma.done [#allocation7], 16
        $region76: #{tpu_custom_call.1} parent=67 // pred_fallthru
          _
        // Predicated region
        $region77: #{tpu_custom_call.1} parent=67 // pred_check
          %p555 = pneg %p115
        $region78: #{tpu_custom_call.1} parent=67 // pred_check_branch
          %557 = sbr.rel (%p555) target = $region80
        $region79: #{tpu_custom_call.1} parent=67 // pred_region
          %558 = dma.done [#allocation7], 512
        $region80: #{tpu_custom_call.1} parent=67 // pred_fallthru
          _
        // Predicated region
        $region81: #{tpu_custom_call.1} parent=67 // pred_check
          %p559 = pneg %p136
        $region82: #{tpu_custom_call.1} parent=67 // pred_check_branch
          %561 = sbr.rel (%p559) target = $region84
        $region83: #{tpu_custom_call.1} parent=67 // pred_region
          %562 = dma.done [#allocation10], 512
        $region84: #{tpu_custom_call.1} parent=67 // pred_fallthru
          _
        // Predicated region
        $region85: #{tpu_custom_call.1} parent=67 // pred_check
          %p563 = pneg %p157
        $region86: #{tpu_custom_call.1} parent=67 // pred_check_branch
          %565 = sbr.rel (%p563) target = $region88
        $region87: #{tpu_custom_call.1} parent=67 // pred_region
          %566 = dma.done [#allocation10], 512
        $region88: #{tpu_custom_call.1} parent=67 // pred_fallthru
          _
        // Predicated region
        $region89: #{tpu_custom_call.1} parent=67 // pred_check
          %p567 = pneg %p178
        $region90: #{tpu_custom_call.1} parent=67 // pred_check_branch
          %569 = sbr.rel (%p567) target = $region92
        $region91: #{tpu_custom_call.1} parent=67 // pred_region
          %570 = dma.done [#allocation13], 512
        $region92: #{tpu_custom_call.1} parent=67 // pred_fallthru
          _
        // Predicated region
        $region93: #{tpu_custom_call.1} parent=67 // pred_check
          %p571 = pneg %p199
        $region94: #{tpu_custom_call.1} parent=67 // pred_check_branch
          %573 = sbr.rel (%p571) target = $region96
        $region95: #{tpu_custom_call.1} parent=67 // pred_region
          %574 = dma.done [#allocation13], 512
        $region96: #{tpu_custom_call.1} parent=67 // pred_fallthru
          _
        %s575 = sand.u32 %s35, 1
        %s576 = scalar_lea.sflag [#allocation16], %s575
        %s577 = sand.u32 %s212, 1
        %s578 = smul.addr %s577, 32
        %s579 = scalar_lea.vmem [#allocation15], %s578
        // Predicated region
        $region97: #{tpu_custom_call.1} parent=67 // pred_check
          %p580 = pneg %p225
        $region98: #{tpu_custom_call.1} parent=67 // pred_check_branch
          %582 = sbr.rel (%p580) target = $region100
        $region99: #{tpu_custom_call.1} parent=67 // pred_region
          %583 = dma.done %s576, 512
        $region100: #{tpu_custom_call.1} parent=67 // pred_fallthru
          _
        %s584 = sand.u32 %s35, 1
        %s585 = scalar_lea.sflag [#allocation16], %s584
        %s586 = sand.u32 %s238, 1
        %s587 = smul.addr %s586, 32
        %s588 = scalar_lea.vmem [#allocation17], %s587
        // Predicated region
        $region101: #{tpu_custom_call.1} parent=67 // pred_check
          %p589 = pneg %p251
        $region102: #{tpu_custom_call.1} parent=67 // pred_check_branch
          %591 = sbr.rel (%p589) target = $region104
        $region103: #{tpu_custom_call.1} parent=67 // pred_region
          %592 = dma.done %s585, 512
        $region104: #{tpu_custom_call.1} parent=67 // pred_fallthru
          _
        %s593 = sand.u32 %s35, 1
        %s594 = scalar_lea.sflag [#allocation19], %s593
        %s595 = sand.u32 %s264, 1
        %s596 = smul.addr %s595, 32
        %s597 = scalar_lea.vmem [#allocation18], %s596
        // Predicated region
        $region105: #{tpu_custom_call.1} parent=67 // pred_check
          %p598 = pneg %p277
        $region106: #{tpu_custom_call.1} parent=67 // pred_check_branch
          %600 = sbr.rel (%p598) target = $region108
        $region107: #{tpu_custom_call.1} parent=67 // pred_region
          %601 = dma.done %s594, 512
        $region108: #{tpu_custom_call.1} parent=67 // pred_fallthru
          _
        // Predicated region
        $region109: #{tpu_custom_call.1} parent=67 // pred_check
          %p602 = pneg %p298
        $region110: #{tpu_custom_call.1} parent=67 // pred_check_branch
          %604 = sbr.rel (%p602) target = $region112
        $region111: #{tpu_custom_call.1} parent=67 // pred_region
          %605 = dma.done [#allocation19], 128
        $region112: #{tpu_custom_call.1} parent=67 // pred_fallthru
          _
        // Predicated region
        $region113: #{tpu_custom_call.1} parent=67 // pred_check
          %p606 = pneg %p319
        $region114: #{tpu_custom_call.1} parent=67 // pred_check_branch
          %608 = sbr.rel (%p606) target = $region116
        $region115: #{tpu_custom_call.1} parent=67 // pred_region
          %609 = dma.done [#allocation22], 128
        $region116: #{tpu_custom_call.1} parent=67 // pred_fallthru
          _
        %p610 = pneg %p68
        %p611 = pneg %p65
        %p612 = pneg %p94
        %p613 = pneg %p91
        %p614 = pneg %p115
        %p615 = pneg %p112
        %p616 = pneg %p136
        %p617 = pneg %p133
        %p618 = pneg %p157
        %p619 = pneg %p154
        %p620 = pneg %p178
        %p621 = pneg %p175
        %p622 = pneg %p199
        %p623 = pneg %p196
        %s624 = sand.u32 %s35, 1
        %s625 = scalar_lea.sflag [#allocation16], %s624
        %s626 = sand.u32 %s212, 1
        %s627 = smul.addr %s626, 32
        %s628 = scalar_lea.vmem [#allocation15], %s627
        %p629 = pneg %p225
        %p630 = pneg %p222
        %s631 = sand.u32 %s35, 1
        %s632 = scalar_lea.sflag [#allocation16], %s631
        %s633 = sand.u32 %s238, 1
        %s634 = smul.addr %s633, 32
        %s635 = scalar_lea.vmem [#allocation17], %s634
        %p636 = pneg %p251
        %p637 = pneg %p248
        %s638 = sand.u32 %s35, 1
        %s639 = scalar_lea.sflag [#allocation19], %s638
        %s640 = sand.u32 %s264, 1
        %s641 = smul.addr %s640, 32
        %s642 = scalar_lea.vmem [#allocation18], %s641
        %p643 = pneg %p277
        %p644 = pneg %p274
        %p645 = pneg %p298
        %p646 = pneg %p295
        %p647 = pneg %p319
        %p648 = pneg %p316
        %p649 = pneg %p345
        %p650 = pneg %p342
        %p651 = scmp.eq.s32.totalorder %s40, 0
        // Predicated region
        $region117: #{tpu_custom_call.1} parent=67 // pred_check
          %p652 = pneg %p651
        $region118: #{tpu_custom_call.1} parent=67 // pred_check_branch
          %654 = sbr.rel (%p652) target = $region120
        $region119: #{tpu_custom_call.1} parent=67 // pred_region
          %v655 = vld [vmem:[#allocation3] sm:$0xff]
          %v656 = vld [vmem:[#allocation6] sm:$0x1]
          %v657 = vld [vmem:[#allocation8] sm:$0xff]
          %v658 = vld [vmem:[#allocation8 + $0x8] sm:$0xff]
          %v659 = vld [vmem:[#allocation8 + $0x10] sm:$0xff]
          %v660 = vld [vmem:[#allocation8 + $0x18] sm:$0xff]
          %662 = vset.pattern.permute.xlu0 0
          %663 = vperm.xlu0 %662, %v657
          %v664 = vpop.permute.xlu0 %663
          %667 = vset.pattern.permute.xlu0 0
          %668 = vperm.xlu0 %667, %v658
          %v669 = vpop.permute.xlu0 %668
          %672 = vset.pattern.permute.xlu0 0
          %673 = vperm.xlu0 %672, %v659
          %v674 = vpop.permute.xlu0 %673
          %677 = vset.pattern.permute.xlu0 0
          %678 = vperm.xlu0 %677, %v660
          %v679 = vpop.permute.xlu0 %678
          %v682 = vlaneseq
          %v683 = vshrl.u32 %v682, 7
          %v684 = vsub.s32 0, %v683
          %v685 = vrot.slane %v656, %v684
          %v687 = vmul.f32 %v664, %v685
          %v688 = vmul.f32 %v669, %v685
          %v689 = vmul.f32 %v674, %v685
          %v690 = vmul.f32 %v679, %v685
          %v691 = vld [vmem:[#allocation9] sm:$0xff]
          %v692 = vld [vmem:[#allocation9 + $0x8] sm:$0xff]
          %v693 = vld [vmem:[#allocation9 + $0x10] sm:$0xff]
          %v694 = vld [vmem:[#allocation9 + $0x18] sm:$0xff]
          %696 = vset.pattern.permute.xlu0 0
          %697 = vperm.xlu0 %696, %v691
          %v698 = vpop.permute.xlu0 %697
          %701 = vset.pattern.permute.xlu0 0
          %702 = vperm.xlu0 %701, %v692
          %v703 = vpop.permute.xlu0 %702
          %706 = vset.pattern.permute.xlu0 0
          %707 = vperm.xlu0 %706, %v693
          %v708 = vpop.permute.xlu0 %707
          %711 = vset.pattern.permute.xlu0 0
          %712 = vperm.xlu0 %711, %v694
          %v713 = vpop.permute.xlu0 %712
          %v715 = vadd.f32 %v687, %v698
          %v716 = vadd.f32 %v688, %v703
          %v717 = vadd.f32 %v689, %v708
          %v718 = vadd.f32 %v690, %v713
          %v719 = vxor.u32 %v715, 2147483648
          %v720 = vxor.u32 %v716, 2147483648
          %v721 = vxor.u32 %v717, 2147483648
          %v722 = vxor.u32 %v718, 2147483648
          %v723 = vmul.f32 %v719, 1.442695
          %v724 = vpow.pop %v723
          %v725 = vmul.f32 %v720, 1.442695
          %v726 = vpow.pop %v725
          %v727 = vmul.f32 %v721, 1.442695
          %v728 = vpow.pop %v727
          %v729 = vmul.f32 %v722, 1.442695
          %v730 = vpow.pop %v729
          %v731 = vadd.f32 %v724, 1.0
          %v732 = vadd.f32 %v726, 1.0
          %v733 = vadd.f32 %v728, 1.0
          %v734 = vadd.f32 %v730, 1.0
          %v735 = vrcp.pop %v731
          %v736 = vmul.f32 1.0, %v735
          %v737 = vrcp.pop %v732
          %v738 = vmul.f32 1.0, %v737
          %v739 = vrcp.pop %v733
          %v740 = vmul.f32 1.0, %v739
          %v741 = vrcp.pop %v734
          %v742 = vmul.f32 1.0, %v741
          %v743 = vmul.f32 %v715, %v736
          %v744 = vmul.f32 %v716, %v738
          %v745 = vmul.f32 %v717, %v740
          %v746 = vmul.f32 %v718, %v742
          %v747 = vld [vmem:[#allocation11] sm:$0xff]
          %v748 = vld [vmem:[#allocation11 + $0x8] sm:$0xff]
          %v749 = vld [vmem:[#allocation11 + $0x10] sm:$0xff]
          %v750 = vld [vmem:[#allocation11 + $0x18] sm:$0xff]
          %v751 = vld [vmem:[#allocation12] sm:$0xff]
          %v752 = vld [vmem:[#allocation12 + $0x8] sm:$0xff]
          %v753 = vld [vmem:[#allocation12 + $0x10] sm:$0xff]
          %v754 = vld [vmem:[#allocation12 + $0x18] sm:$0xff]
          %vm755 = vcmask 261120
          %v757 = vsel %vm755, %v751, 0
          %v760 = vsel %vm755, %v752, 0
          %v763 = vsel %vm755, %v753, 0
          %v766 = vsel %vm755, %v754, 0
          %768 = vmatprep.subr.mxu0 0.0
          %769 = vmatpush1.msra.mxu0 %v743
          %770 = vmatprep.subr.mxu0 0.0
          %771 = vmatpush1.msra.mxu0 %v744
          %772 = vmatprep.subr.mxu0 0.0
          %773 = vmatpush1.msra.mxu0 %v745
          %774 = vmatprep.subr.mxu0 0.0
          %775 = vmatpush1.msra.mxu0 %v746
          %776 = vmatprep.subr.mxu0 0.0
          %777 = vmatpush1.msra.mxu0 0.0
          %778 = vmatprep.subr.mxu0 0.0
          %779 = vmatpush1.msra.mxu0 0.0
          %780 = vmatprep.subr.mxu0 0.0
          %781 = vmatpush1.msra.mxu0 0.0
          %782 = vmatprep.subr.mxu0 0.0
          %783 = vmatpush1.msra.mxu0 0.0
          %784 = vmatprep.subr.mxu0 0.0
          %785 = vmatpush1.msra.mxu0 0.0
          %786 = vmatprep.subr.mxu0 0.0
          %787 = vmatpush1.msra.mxu0 0.0
          %788 = vmatprep.subr.mxu0 0.0
          %789 = vmatpush1.msra.mxu0 0.0
          %790 = vmatprep.subr.mxu0 0.0
          %791 = vmatpush1.msra.mxu0 0.0
          %792 = vmatprep.subr.mxu0 0.0
          %793 = vmatpush1.msra.mxu0 0.0
          %794 = vmatprep.subr.mxu0 0.0
          %795 = vmatpush1.msra.mxu0 0.0
          %796 = vmatprep.subr.mxu0 0.0
          %797 = vmatpush1.msra.mxu0 0.0
          %798 = vmatprep.subr.mxu0 0.0
          %799 = vmatpush1.msra.mxu0 0.0
          %800 = vmatprep.subr.mxu0 0.0
          %801 = vmatpush1.msra.mxu0 0.0
          %802 = vmatprep.subr.mxu0 0.0
          %803 = vmatpush1.msra.mxu0 0.0
          %804 = vmatprep.subr.mxu0 0.0
          %805 = vmatpush1.msra.mxu0 0.0
          %806 = vmatprep.subr.mxu0 0.0
          %807 = vmatpush1.msra.mxu0 0.0
          %808 = vmatprep.subr.mxu0 0.0
          %809 = vmatpush1.msra.mxu0 0.0
          %810 = vmatprep.subr.mxu0 0.0
          %811 = vmatpush1.msra.mxu0 0.0
          %812 = vmatprep.subr.mxu0 0.0
          %813 = vmatpush1.msra.mxu0 0.0
          %814 = vmatprep.subr.mxu0 0.0
          %815 = vmatpush1.msra.mxu0 0.0
          %816 = vmatprep.subr.mxu0 0.0
          %817 = vmatpush1.msra.mxu0 0.0
          %818 = vmatprep.subr.mxu0 0.0
          %819 = vmatpush1.msra.mxu0 0.0
          %820 = vmatprep.subr.mxu0 0.0
          %821 = vmatpush1.msra.mxu0 0.0
          %822 = vmatprep.subr.mxu0 0.0
          %823 = vmatpush1.msra.mxu0 0.0
          %824 = vmatprep.subr.mxu0 0.0
          %825 = vmatpush1.msra.mxu0 0.0
          %826 = vmatprep.subr.mxu0 0.0
          %827 = vmatpush1.msra.mxu0 0.0
          %828 = vmatprep.subr.mxu0 0.0
          %829 = vmatpush1.msra.mxu0 0.0
          %830 = vmatprep.subr.mxu0 0.0
          %831 = vmatpush1.msra.mxu0 0.0
          %832 = vmatprep.mubr.f32.mxu0 0.0
          %833 = vmatmul.mubr.f32.gmra.mrb[0].mxu0 %v757
          %v834 = vpop.f32.mrb[0].mxu0
          %v835 = vadd.f32 0.0, %v834
          %v836 = vpop.f32.mrb[0].mxu0
          %837 = vmatprep.mubr.f32.mxu0 0.0
          %838 = vmatmul.mubr.f32.gmra.mrb[0].mxu0 %v760
          %v839 = vpop.f32.mrb[0].mxu0
          %v840 = vadd.f32 0.0, %v839
          %v841 = vpop.f32.mrb[0].mxu0
          %842 = vmatprep.mubr.f32.mxu0 0.0
          %843 = vmatmul.mubr.f32.gmra.mrb[0].mxu0 %v763
          %v844 = vpop.f32.mrb[0].mxu0
          %v845 = vadd.f32 0.0, %v844
          %v846 = vpop.f32.mrb[0].mxu0
          %847 = vmatprep.mubr.f32.mxu0 0.0
          %848 = vmatmul.mubr.f32.gmra.mrb[0].mxu0 %v766
          %v849 = vpop.f32.mrb[0].mxu0
          %v850 = vadd.f32 0.0, %v849
          %v851 = vpop.f32.mrb[0].mxu0
          %852 = vdwg.mxu0
          %vm853 = vcmask 64512
          %v855 = vsel %vm853, %v747, 0
          %v858 = vsel %vm853, %v748, 0
          %v861 = vsel %vm853, %v749, 0
          %v864 = vsel %vm853, %v750, 0
          %866 = vmatprep.subr.mxu0 0.0
          %867 = vmatpush1.msra.mxu0 %v655
          %868 = vmatprep.subr.mxu0 0.0
          %869 = vmatpush1.msra.mxu0 0.0
          %870 = vmatprep.subr.mxu0 0.0
          %871 = vmatpush1.msra.mxu0 0.0
          %872 = vmatprep.subr.mxu0 0.0
          %873 = vmatpush1.msra.mxu0 0.0
          %874 = vmatprep.subr.mxu0 0.0
          %875 = vmatpush1.msra.mxu0 0.0
          %876 = vmatprep.subr.mxu0 0.0
          %877 = vmatpush1.msra.mxu0 0.0
          %878 = vmatprep.subr.mxu0 0.0
          %879 = vmatpush1.msra.mxu0 0.0
          %880 = vmatprep.subr.mxu0 0.0
          %881 = vmatpush1.msra.mxu0 0.0
          %882 = vmatprep.subr.mxu0 0.0
          %883 = vmatpush1.msra.mxu0 0.0
          %884 = vmatprep.subr.mxu0 0.0
          %885 = vmatpush1.msra.mxu0 0.0
          %886 = vmatprep.subr.mxu0 0.0
          %887 = vmatpush1.msra.mxu0 0.0
          %888 = vmatprep.subr.mxu0 0.0
          %889 = vmatpush1.msra.mxu0 0.0
          %890 = vmatprep.subr.mxu0 0.0
          %891 = vmatpush1.msra.mxu0 0.0
          %892 = vmatprep.subr.mxu0 0.0
          %893 = vmatpush1.msra.mxu0 0.0
          %894 = vmatprep.subr.mxu0 0.0
          %895 = vmatpush1.msra.mxu0 0.0
          %896 = vmatprep.subr.mxu0 0.0
          %897 = vmatpush1.msra.mxu0 0.0
          %898 = vmatprep.subr.mxu0 0.0
          %899 = vmatpush1.msra.mxu0 0.0
          %900 = vmatprep.subr.mxu0 0.0
          %901 = vmatpush1.msra.mxu0 0.0
          %902 = vmatprep.subr.mxu0 0.0
          %903 = vmatpush1.msra.mxu0 0.0
          %904 = vmatprep.subr.mxu0 0.0
          %905 = vmatpush1.msra.mxu0 0.0
          %906 = vmatprep.subr.mxu0 0.0
          %907 = vmatpush1.msra.mxu0 0.0
          %908 = vmatprep.subr.mxu0 0.0
          %909 = vmatpush1.msra.mxu0 0.0
          %910 = vmatprep.subr.mxu0 0.0
          %911 = vmatpush1.msra.mxu0 0.0
          %912 = vmatprep.subr.mxu0 0.0
          %913 = vmatpush1.msra.mxu0 0.0
          %914 = vmatprep.subr.mxu0 0.0
          %915 = vmatpush1.msra.mxu0 0.0
          %916 = vmatprep.subr.mxu0 0.0
          %917 = vmatpush1.msra.mxu0 0.0
          %918 = vmatprep.subr.mxu0 0.0
          %919 = vmatpush1.msra.mxu0 0.0
          %920 = vmatprep.subr.mxu0 0.0
          %921 = vmatpush1.msra.mxu0 0.0
          %922 = vmatprep.subr.mxu0 0.0
          %923 = vmatpush1.msra.mxu0 0.0
          %924 = vmatprep.subr.mxu0 0.0
          %925 = vmatpush1.msra.mxu0 0.0
          %926 = vmatprep.subr.mxu0 0.0
          %927 = vmatpush1.msra.mxu0 0.0
          %928 = vmatprep.subr.mxu0 0.0
          %929 = vmatpush1.msra.mxu0 0.0
          %930 = vmatprep.mubr.f32.mxu0 0.0
          %931 = vmatmul.mubr.f32.gmra.mrb[0].mxu0 %v855
          %v932 = vpop.f32.mrb[0].mxu0
          %v933 = vadd.f32 %v835, %v932
          %v934 = vpop.f32.mrb[0].mxu0
          %935 = vmatprep.mubr.f32.mxu0 0.0
          %936 = vmatmul.mubr.f32.gmra.mrb[0].mxu0 %v858
          %v937 = vpop.f32.mrb[0].mxu0
          %v938 = vadd.f32 %v840, %v937
          %v939 = vpop.f32.mrb[0].mxu0
          %940 = vmatprep.mubr.f32.mxu0 0.0
          %941 = vmatmul.mubr.f32.gmra.mrb[0].mxu0 %v861
          %v942 = vpop.f32.mrb[0].mxu0
          %v943 = vadd.f32 %v845, %v942
          %v944 = vpop.f32.mrb[0].mxu0
          %945 = vmatprep.mubr.f32.mxu0 0.0
          %946 = vmatmul.mubr.f32.gmra.mrb[0].mxu0 %v864
          %v947 = vpop.f32.mrb[0].mxu0
          %v948 = vadd.f32 %v850, %v947
          %v949 = vpop.f32.mrb[0].mxu0
          %950 = vdwg.mxu0
          %v951 = vld [vmem:[#allocation14] sm:$0xff]
          %v952 = vld [vmem:[#allocation14 + $0x8] sm:$0xff]
          %v953 = vld [vmem:[#allocation14 + $0x10] sm:$0xff]
          %v954 = vld [vmem:[#allocation14 + $0x18] sm:$0xff]
          %956 = vset.pattern.permute.xlu0 0
          %957 = vperm.xlu0 %956, %v951
          %v958 = vpop.permute.xlu0 %957
          %961 = vset.pattern.permute.xlu0 0
          %962 = vperm.xlu0 %961, %v952
          %v963 = vpop.permute.xlu0 %962
          %966 = vset.pattern.permute.xlu0 0
          %967 = vperm.xlu0 %966, %v953
          %v968 = vpop.permute.xlu0 %967
          %971 = vset.pattern.permute.xlu0 0
          %972 = vperm.xlu0 %971, %v954
          %v973 = vpop.permute.xlu0 %972
          %v975 = vadd.f32 %v933, %v958
          %v976 = vadd.f32 %v938, %v963
          %v977 = vadd.f32 %v943, %v968
          %v978 = vadd.f32 %v948, %v973
          %979 = vst [vmem:[#allocation2] sm:$0xff] %v975
          %980 = vst [vmem:[#allocation2 + $0x8] sm:$0xff] %v976
          %981 = vst [vmem:[#allocation2 + $0x10] sm:$0xff] %v977
          %982 = vst [vmem:[#allocation2 + $0x18] sm:$0xff] %v978
        $region120: #{tpu_custom_call.1} parent=67 // pred_fallthru
          _
        %v983 = vld [vmem:[#allocation2] sm:$0xff]
        %v984 = vld [vmem:[#allocation2 + $0x8] sm:$0xff]
        %v985 = vld [vmem:[#allocation2 + $0x10] sm:$0xff]
        %v986 = vld [vmem:[#allocation2 + $0x18] sm:$0xff]
        %v987 = vadd.f32 %v983, %v984
        %v988 = vadd.f32 %v987, %v985
        %v989 = vadd.f32 %v988, %v986
        %v990 = vrot.slane %v989, 4
        %v991 = vadd.f32 %v989, %v990
        %v992 = vrot.slane %v991, 2
        %v993 = vadd.f32 %v991, %v992
        %v994 = vrot.slane %v993, 1
        %v995 = vadd.f32 %v993, %v994
        %v996 = vrcp.pop 32.0
        %v997 = vmul.f32 %v995, %v996
        %v998 = vsub.f32 %v983, %v997
        %v999 = vsub.f32 %v984, %v997
        %v1000 = vsub.f32 %v985, %v997
        %v1001 = vsub.f32 %v986, %v997
        %v1002 = vmul.f32 %v998, %v998
        %v1003 = vmul.f32 %v999, %v999
        %v1004 = vmul.f32 %v1000, %v1000
        %v1005 = vmul.f32 %v1001, %v1001
        %v1006 = vadd.f32 %v1002, %v1003
        %v1007 = vadd.f32 %v1006, %v1004
        %v1008 = vadd.f32 %v1007, %v1005
        %v1009 = vrot.slane %v1008, 4
        %v1010 = vadd.f32 %v1008, %v1009
        %v1011 = vrot.slane %v1010, 2
        %v1012 = vadd.f32 %v1010, %v1011
        %v1013 = vrot.slane %v1012, 1
        %v1014 = vadd.f32 %v1012, %v1013
        %v1015 = vmul.f32 %v1014, %v996
        %v1016 = vadd.f32 %v1015, 1e-05
        %v1017 = vrsqrt.pop %v1016
        %v1018 = vmul.f32 %v998, %v1017
        %v1019 = vmul.f32 %v999, %v1017
        %v1020 = vmul.f32 %v1000, %v1017
        %v1021 = vmul.f32 %v1001, %v1017
        %v1022 = vld [vmem:[%s597] sm:$0xff]
        %v1023 = vld [vmem:[%s597 + $0x8] sm:$0xff]
        %v1024 = vld [vmem:[%s597 + $0x10] sm:$0xff]
        %v1025 = vld [vmem:[%s597 + $0x18] sm:$0xff]
        %v1026 = vld [vmem:[%s579] sm:$0xff]
        %v1027 = vld [vmem:[%s579 + $0x8] sm:$0xff]
        %v1028 = vld [vmem:[%s579 + $0x10] sm:$0xff]
        %v1029 = vld [vmem:[%s579 + $0x18] sm:$0xff]
        %1031 = vset.pattern.permute.xlu0 0
        %1032 = vperm.xlu0 %1031, %v1022
        %v1033 = vpop.permute.xlu0 %1032
        %1036 = vset.pattern.permute.xlu0 0
        %1037 = vperm.xlu0 %1036, %v1023
        %v1038 = vpop.permute.xlu0 %1037
        %1041 = vset.pattern.permute.xlu0 0
        %1042 = vperm.xlu0 %1041, %v1024
        %v1043 = vpop.permute.xlu0 %1042
        %1046 = vset.pattern.permute.xlu0 0
        %1047 = vperm.xlu0 %1046, %v1025
        %v1048 = vpop.permute.xlu0 %1047
        %vm1050 = vcmask 261120
        %v1052 = vsel %vm1050, %v1026, 0
        %v1055 = vsel %vm1050, %v1027, 0
        %v1058 = vsel %vm1050, %v1028, 0
        %v1061 = vsel %vm1050, %v1029, 0
        %1063 = vmatprep.subr.mxu0 0.0
        %1064 = vmatpush1.msra.mxu0 %v1018
        %1065 = vmatprep.subr.mxu0 0.0
        %1066 = vmatpush1.msra.mxu0 %v1019
        %1067 = vmatprep.subr.mxu0 0.0
        %1068 = vmatpush1.msra.mxu0 %v1020
        %1069 = vmatprep.subr.mxu0 0.0
        %1070 = vmatpush1.msra.mxu0 %v1021
        %1071 = vmatprep.subr.mxu0 0.0
        %1072 = vmatpush1.msra.mxu0 0.0
        %1073 = vmatprep.subr.mxu0 0.0
        %1074 = vmatpush1.msra.mxu0 0.0
        %1075 = vmatprep.subr.mxu0 0.0
        %1076 = vmatpush1.msra.mxu0 0.0
        %1077 = vmatprep.subr.mxu0 0.0
        %1078 = vmatpush1.msra.mxu0 0.0
        %1079 = vmatprep.subr.mxu0 0.0
        %1080 = vmatpush1.msra.mxu0 0.0
        %1081 = vmatprep.subr.mxu0 0.0
        %1082 = vmatpush1.msra.mxu0 0.0
        %1083 = vmatprep.subr.mxu0 0.0
        %1084 = vmatpush1.msra.mxu0 0.0
        %1085 = vmatprep.subr.mxu0 0.0
        %1086 = vmatpush1.msra.mxu0 0.0
        %1087 = vmatprep.subr.mxu0 0.0
        %1088 = vmatpush1.msra.mxu0 0.0
        %1089 = vmatprep.subr.mxu0 0.0
        %1090 = vmatpush1.msra.mxu0 0.0
        %1091 = vmatprep.subr.mxu0 0.0
        %1092 = vmatpush1.msra.mxu0 0.0
        %1093 = vmatprep.subr.mxu0 0.0
        %1094 = vmatpush1.msra.mxu0 0.0
        %1095 = vmatprep.subr.mxu0 0.0
        %1096 = vmatpush1.msra.mxu0 0.0
        %1097 = vmatprep.subr.mxu0 0.0
        %1098 = vmatpush1.msra.mxu0 0.0
        %1099 = vmatprep.subr.mxu0 0.0
        %1100 = vmatpush1.msra.mxu0 0.0
        %1101 = vmatprep.subr.mxu0 0.0
        %1102 = vmatpush1.msra.mxu0 0.0
        %1103 = vmatprep.subr.mxu0 0.0
        %1104 = vmatpush1.msra.mxu0 0.0
        %1105 = vmatprep.subr.mxu0 0.0
        %1106 = vmatpush1.msra.mxu0 0.0
        %1107 = vmatprep.subr.mxu0 0.0
        %1108 = vmatpush1.msra.mxu0 0.0
        %1109 = vmatprep.subr.mxu0 0.0
        %1110 = vmatpush1.msra.mxu0 0.0
        %1111 = vmatprep.subr.mxu0 0.0
        %1112 = vmatpush1.msra.mxu0 0.0
        %1113 = vmatprep.subr.mxu0 0.0
        %1114 = vmatpush1.msra.mxu0 0.0
        %1115 = vmatprep.subr.mxu0 0.0
        %1116 = vmatpush1.msra.mxu0 0.0
        %1117 = vmatprep.subr.mxu0 0.0
        %1118 = vmatpush1.msra.mxu0 0.0
        %1119 = vmatprep.subr.mxu0 0.0
        %1120 = vmatpush1.msra.mxu0 0.0
        %1121 = vmatprep.subr.mxu0 0.0
        %1122 = vmatpush1.msra.mxu0 0.0
        %1123 = vmatprep.subr.mxu0 0.0
        %1124 = vmatpush1.msra.mxu0 0.0
        %1125 = vmatprep.subr.mxu0 0.0
        %1126 = vmatpush1.msra.mxu0 0.0
        %1127 = vmatprep.mubr.f32.mxu0 0.0
        %1128 = vmatmul.mubr.f32.gmra.mrb[0].mxu0 %v1052
        %v1129 = vpop.f32.mrb[0].mxu0
        %v1130 = vadd.f32 %v1033, %v1129
        %v1131 = vpop.f32.mrb[0].mxu0
        %1132 = vmatprep.mubr.f32.mxu0 0.0
        %1133 = vmatmul.mubr.f32.gmra.mrb[0].mxu0 %v1055
        %v1134 = vpop.f32.mrb[0].mxu0
        %v1135 = vadd.f32 %v1038, %v1134
        %v1136 = vpop.f32.mrb[0].mxu0
        %1137 = vmatprep.mubr.f32.mxu0 0.0
        %1138 = vmatmul.mubr.f32.gmra.mrb[0].mxu0 %v1058
        %v1139 = vpop.f32.mrb[0].mxu0
        %v1140 = vadd.f32 %v1043, %v1139
        %v1141 = vpop.f32.mrb[0].mxu0
        %1142 = vmatprep.mubr.f32.mxu0 0.0
        %1143 = vmatmul.mubr.f32.gmra.mrb[0].mxu0 %v1061
        %v1144 = vpop.f32.mrb[0].mxu0
        %v1145 = vadd.f32 %v1048, %v1144
        %v1146 = vpop.f32.mrb[0].mxu0
        %1147 = vdwg.mxu0
        %v1148 = vxor.u32 %v1130, 2147483648
        %v1149 = vxor.u32 %v1135, 2147483648
        %v1150 = vxor.u32 %v1140, 2147483648
        %v1151 = vxor.u32 %v1145, 2147483648
        %v1152 = vmul.f32 %v1148, 1.442695
        %v1153 = vpow.pop %v1152
        %v1154 = vmul.f32 %v1149, 1.442695
        %v1155 = vpow.pop %v1154
        %v1156 = vmul.f32 %v1150, 1.442695
        %v1157 = vpow.pop %v1156
        %v1158 = vmul.f32 %v1151, 1.442695
        %v1159 = vpow.pop %v1158
        %v1160 = vadd.f32 %v1153, 1.0
        %v1161 = vadd.f32 %v1155, 1.0
        %v1162 = vadd.f32 %v1157, 1.0
        %v1163 = vadd.f32 %v1159, 1.0
        %v1164 = vrcp.pop %v1160
        %v1165 = vmul.f32 1.0, %v1164
        %v1166 = vrcp.pop %v1161
        %v1167 = vmul.f32 1.0, %v1166
        %v1168 = vrcp.pop %v1162
        %v1169 = vmul.f32 1.0, %v1168
        %v1170 = vrcp.pop %v1163
        %v1171 = vmul.f32 1.0, %v1170
        %v1172 = vmul.f32 %v1130, %v1165
        %v1173 = vmul.f32 %v1135, %v1167
        %v1174 = vmul.f32 %v1140, %v1169
        %v1175 = vmul.f32 %v1145, %v1171
        %v1176 = vld [vmem:[%s588] sm:$0xff]
        %v1177 = vld [vmem:[%s588 + $0x8] sm:$0xff]
        %v1178 = vld [vmem:[%s588 + $0x10] sm:$0xff]
        %v1179 = vld [vmem:[%s588 + $0x18] sm:$0xff]
        %v1181 = vsel %vm1050, %v1176, 0
        %v1184 = vsel %vm1050, %v1177, 0
        %v1187 = vsel %vm1050, %v1178, 0
        %v1190 = vsel %vm1050, %v1179, 0
        %1192 = vmatprep.subr.mxu0 0.0
        %1193 = vmatpush1.msra.mxu0 %v1172
        %1194 = vmatprep.subr.mxu0 0.0
        %1195 = vmatpush1.msra.mxu0 %v1173
        %1196 = vmatprep.subr.mxu0 0.0
        %1197 = vmatpush1.msra.mxu0 %v1174
        %1198 = vmatprep.subr.mxu0 0.0
        %1199 = vmatpush1.msra.mxu0 %v1175
        %1200 = vmatprep.subr.mxu0 0.0
        %1201 = vmatpush1.msra.mxu0 0.0
        %1202 = vmatprep.subr.mxu0 0.0
        %1203 = vmatpush1.msra.mxu0 0.0
        %1204 = vmatprep.subr.mxu0 0.0
        %1205 = vmatpush1.msra.mxu0 0.0
        %1206 = vmatprep.subr.mxu0 0.0
        %1207 = vmatpush1.msra.mxu0 0.0
        %1208 = vmatprep.subr.mxu0 0.0
        %1209 = vmatpush1.msra.mxu0 0.0
        %1210 = vmatprep.subr.mxu0 0.0
        %1211 = vmatpush1.msra.mxu0 0.0
        %1212 = vmatprep.subr.mxu0 0.0
        %1213 = vmatpush1.msra.mxu0 0.0
        %1214 = vmatprep.subr.mxu0 0.0
        %1215 = vmatpush1.msra.mxu0 0.0
        %1216 = vmatprep.subr.mxu0 0.0
        %1217 = vmatpush1.msra.mxu0 0.0
        %1218 = vmatprep.subr.mxu0 0.0
        %1219 = vmatpush1.msra.mxu0 0.0
        %1220 = vmatprep.subr.mxu0 0.0
        %1221 = vmatpush1.msra.mxu0 0.0
        %1222 = vmatprep.subr.mxu0 0.0
        %1223 = vmatpush1.msra.mxu0 0.0
        %1224 = vmatprep.subr.mxu0 0.0
        %1225 = vmatpush1.msra.mxu0 0.0
        %1226 = vmatprep.subr.mxu0 0.0
        %1227 = vmatpush1.msra.mxu0 0.0
        %1228 = vmatprep.subr.mxu0 0.0
        %1229 = vmatpush1.msra.mxu0 0.0
        %1230 = vmatprep.subr.mxu0 0.0
        %1231 = vmatpush1.msra.mxu0 0.0
        %1232 = vmatprep.subr.mxu0 0.0
        %1233 = vmatpush1.msra.mxu0 0.0
        %1234 = vmatprep.subr.mxu0 0.0
        %1235 = vmatpush1.msra.mxu0 0.0
        %1236 = vmatprep.subr.mxu0 0.0
        %1237 = vmatpush1.msra.mxu0 0.0
        %1238 = vmatprep.subr.mxu0 0.0
        %1239 = vmatpush1.msra.mxu0 0.0
        %1240 = vmatprep.subr.mxu0 0.0
        %1241 = vmatpush1.msra.mxu0 0.0
        %1242 = vmatprep.subr.mxu0 0.0
        %1243 = vmatpush1.msra.mxu0 0.0
        %1244 = vmatprep.subr.mxu0 0.0
        %1245 = vmatpush1.msra.mxu0 0.0
        %1246 = vmatprep.subr.mxu0 0.0
        %1247 = vmatpush1.msra.mxu0 0.0
        %1248 = vmatprep.subr.mxu0 0.0
        %1249 = vmatpush1.msra.mxu0 0.0
        %1250 = vmatprep.subr.mxu0 0.0
        %1251 = vmatpush1.msra.mxu0 0.0
        %1252 = vmatprep.subr.mxu0 0.0
        %1253 = vmatpush1.msra.mxu0 0.0
        %1254 = vmatprep.subr.mxu0 0.0
        %1255 = vmatpush1.msra.mxu0 0.0
        %1256 = vmatprep.mubr.f32.mxu0 0.0
        %1257 = vmatmul.mubr.f32.gmra.mrb[0].mxu0 %v1181
        %v1258 = vpop.f32.mrb[0].mxu0
        %v1259 = vadd.f32 0.0, %v1258
        %v1260 = vpop.f32.mrb[0].mxu0
        %1261 = vmatprep.mubr.f32.mxu0 0.0
        %1262 = vmatmul.mubr.f32.gmra.mrb[0].mxu0 %v1184
        %v1263 = vpop.f32.mrb[0].mxu0
        %v1264 = vadd.f32 0.0, %v1263
        %v1265 = vpop.f32.mrb[0].mxu0
        %1266 = vmatprep.mubr.f32.mxu0 0.0
        %1267 = vmatmul.mubr.f32.gmra.mrb[0].mxu0 %v1187
        %v1268 = vpop.f32.mrb[0].mxu0
        %v1269 = vadd.f32 0.0, %v1268
        %v1270 = vpop.f32.mrb[0].mxu0
        %1271 = vmatprep.mubr.f32.mxu0 0.0
        %1272 = vmatmul.mubr.f32.gmra.mrb[0].mxu0 %v1190
        %v1273 = vpop.f32.mrb[0].mxu0
        %v1274 = vadd.f32 0.0, %v1273
        %v1275 = vpop.f32.mrb[0].mxu0
        %1276 = vdwg.mxu0
        %v1277 = vadd.f32 %v983, %v1259
        %v1278 = vadd.f32 %v984, %v1264
        %v1279 = vadd.f32 %v985, %v1269
        %v1280 = vadd.f32 %v986, %v1274
        %1281 = vset.pattern.permute.xlu0 1
        %1282 = vperm.xlu0 %1281, %v1022
        %v1283 = vpop.permute.xlu0 %1282
        %1285 = vset.pattern.permute.xlu0 1
        %1286 = vperm.xlu0 %1285, %v1023
        %v1287 = vpop.permute.xlu0 %1286
        %1289 = vset.pattern.permute.xlu0 1
        %1290 = vperm.xlu0 %1289, %v1024
        %v1291 = vpop.permute.xlu0 %1290
        %1293 = vset.pattern.permute.xlu0 1
        %1294 = vperm.xlu0 %1293, %v1025
        %v1295 = vpop.permute.xlu0 %1294
        %v1297 = vadd.f32 %v1277, %v1283
        %v1298 = vadd.f32 %v1278, %v1287
        %v1299 = vadd.f32 %v1279, %v1291
        %v1300 = vadd.f32 %v1280, %v1295
        %1301 = vst [vmem:[#allocation2] sm:$0xff] %v1297
        %1302 = vst [vmem:[#allocation2 + $0x8] sm:$0xff] %v1298
        %1303 = vst [vmem:[#allocation2 + $0x10] sm:$0xff] %v1299
        %1304 = vst [vmem:[#allocation2 + $0x18] sm:$0xff] %v1300
        %p1305 = scmp.eq.s32.totalorder %s40, 3
        // Predicated region
        $region121: #{tpu_custom_call.1} parent=67 // pred_check
          %p1306 = pneg %p1305
        $region122: #{tpu_custom_call.1} parent=67 // pred_check_branch
          %1308 = sbr.rel (%p1306) target = $region124
        $region123: #{tpu_custom_call.1} parent=67 // pred_region
          %v1309 = vadd.f32 %v1297, %v1298
          %v1310 = vadd.f32 %v1309, %v1299
          %v1311 = vadd.f32 %v1310, %v1300
          %v1312 = vrot.slane %v1311, 4
          %v1313 = vadd.f32 %v1311, %v1312
          %v1314 = vrot.slane %v1313, 2
          %v1315 = vadd.f32 %v1313, %v1314
          %v1316 = vrot.slane %v1315, 1
          %v1317 = vadd.f32 %v1315, %v1316
          %v1318 = vmul.f32 %v1317, %v996
          %v1319 = vsub.f32 %v1297, %v1318
          %v1320 = vsub.f32 %v1298, %v1318
          %v1321 = vsub.f32 %v1299, %v1318
          %v1322 = vsub.f32 %v1300, %v1318
          %v1323 = vmul.f32 %v1319, %v1319
          %v1324 = vmul.f32 %v1320, %v1320
          %v1325 = vmul.f32 %v1321, %v1321
          %v1326 = vmul.f32 %v1322, %v1322
          %v1327 = vadd.f32 %v1323, %v1324
          %v1328 = vadd.f32 %v1327, %v1325
          %v1329 = vadd.f32 %v1328, %v1326
          %v1330 = vrot.slane %v1329, 4
          %v1331 = vadd.f32 %v1329, %v1330
          %v1332 = vrot.slane %v1331, 2
          %v1333 = vadd.f32 %v1331, %v1332
          %v1334 = vrot.slane %v1333, 1
          %v1335 = vadd.f32 %v1333, %v1334
          %v1336 = vmul.f32 %v1335, %v996
          %v1337 = vadd.f32 %v1336, 1e-05
          %v1338 = vrsqrt.pop %v1337
          %v1339 = vmul.f32 %v1319, %v1338
          %v1340 = vmul.f32 %v1320, %v1338
          %v1341 = vmul.f32 %v1321, %v1338
          %v1342 = vmul.f32 %v1322, %v1338
          %v1343 = vld [vmem:[#allocation20] sm:$0xff]
          %v1344 = vld [vmem:[#allocation21] sm:$0xff]
          %1346 = vset.pattern.permute.xlu0 0
          %1347 = vperm.xlu0 %1346, %v1344
          %v1348 = vpop.permute.xlu0 %1347
          %v1351 = vsel %vm1050, %v1343, 0
          %1353 = vmatprep.subr.mxu0 0.0
          %1354 = vmatpush1.msra.mxu0 %v1339
          %1355 = vmatprep.subr.mxu0 0.0
          %1356 = vmatpush1.msra.mxu0 %v1340
          %1357 = vmatprep.subr.mxu0 0.0
          %1358 = vmatpush1.msra.mxu0 %v1341
          %1359 = vmatprep.subr.mxu0 0.0
          %1360 = vmatpush1.msra.mxu0 %v1342
          %1361 = vmatprep.subr.mxu0 0.0
          %1362 = vmatpush1.msra.mxu0 0.0
          %1363 = vmatprep.subr.mxu0 0.0
          %1364 = vmatpush1.msra.mxu0 0.0
          %1365 = vmatprep.subr.mxu0 0.0
          %1366 = vmatpush1.msra.mxu0 0.0
          %1367 = vmatprep.subr.mxu0 0.0
          %1368 = vmatpush1.msra.mxu0 0.0
          %1369 = vmatprep.subr.mxu0 0.0
          %1370 = vmatpush1.msra.mxu0 0.0
          %1371 = vmatprep.subr.mxu0 0.0
          %1372 = vmatpush1.msra.mxu0 0.0
          %1373 = vmatprep.subr.mxu0 0.0
          %1374 = vmatpush1.msra.mxu0 0.0
          %1375 = vmatprep.subr.mxu0 0.0
          %1376 = vmatpush1.msra.mxu0 0.0
          %1377 = vmatprep.subr.mxu0 0.0
          %1378 = vmatpush1.msra.mxu0 0.0
          %1379 = vmatprep.subr.mxu0 0.0
          %1380 = vmatpush1.msra.mxu0 0.0
          %1381 = vmatprep.subr.mxu0 0.0
          %1382 = vmatpush1.msra.mxu0 0.0
          %1383 = vmatprep.subr.mxu0 0.0
          %1384 = vmatpush1.msra.mxu0 0.0
          %1385 = vmatprep.subr.mxu0 0.0
          %1386 = vmatpush1.msra.mxu0 0.0
          %1387 = vmatprep.subr.mxu0 0.0
          %1388 = vmatpush1.msra.mxu0 0.0
          %1389 = vmatprep.subr.mxu0 0.0
          %1390 = vmatpush1.msra.mxu0 0.0
          %1391 = vmatprep.subr.mxu0 0.0
          %1392 = vmatpush1.msra.mxu0 0.0
          %1393 = vmatprep.subr.mxu0 0.0
          %1394 = vmatpush1.msra.mxu0 0.0
          %1395 = vmatprep.subr.mxu0 0.0
          %1396 = vmatpush1.msra.mxu0 0.0
          %1397 = vmatprep.subr.mxu0 0.0
          %1398 = vmatpush1.msra.mxu0 0.0
          %1399 = vmatprep.subr.mxu0 0.0
          %1400 = vmatpush1.msra.mxu0 0.0
          %1401 = vmatprep.subr.mxu0 0.0
          %1402 = vmatpush1.msra.mxu0 0.0
          %1403 = vmatprep.subr.mxu0 0.0
          %1404 = vmatpush1.msra.mxu0 0.0
          %1405 = vmatprep.subr.mxu0 0.0
          %1406 = vmatpush1.msra.mxu0 0.0
          %1407 = vmatprep.subr.mxu0 0.0
          %1408 = vmatpush1.msra.mxu0 0.0
          %1409 = vmatprep.subr.mxu0 0.0
          %1410 = vmatpush1.msra.mxu0 0.0
          %1411 = vmatprep.subr.mxu0 0.0
          %1412 = vmatpush1.msra.mxu0 0.0
          %1413 = vmatprep.subr.mxu0 0.0
          %1414 = vmatpush1.msra.mxu0 0.0
          %1415 = vmatprep.subr.mxu0 0.0
          %1416 = vmatpush1.msra.mxu0 0.0
          %1417 = vmatprep.mubr.f32.mxu0 0.0
          %1418 = vmatmul.mubr.f32.gmra.mrb[0].mxu0 %v1351
          %v1419 = vpop.f32.mrb[0].mxu0
          %v1420 = vadd.f32 %v1348, %v1419
          %v1421 = vpop.f32.mrb[0].mxu0
          %1422 = vdwg.mxu0
          %1423 = vst [vmem:[#allocation23] sm:$0xff] %v1420
        $region124: #{tpu_custom_call.1} parent=67 // pred_fallthru
          _
        // Predicated region
        $region125: #{tpu_custom_call.1} parent=67 // pred_check
          %p1424 = pneg %p342
        $region126: #{tpu_custom_call.1} parent=67 // pred_check_branch
          %1426 = sbr.rel (%p1424) target = $region128
        $region127: #{tpu_custom_call.1} parent=67 // pred_region
          %s1428 = ssub.s32 128, 128
          %1429 = vsyncadd [#allocation5], %s1428
          %s1430 = smul.addr %s39, 128
          %s1431 = scalar_lea.hbm %s12, %s1430
          %s1433 = sshll.u32 [#allocation23], 4
          %s1434 = int_to_ptr.vmem [resolvable:$true] %s1433
          %1436 = dma.vmem_to_hbm [thread:$0]  %s1434, 128, %s1431, [#allocation5]
        $region128: #{tpu_custom_call.1} parent=67 // pred_fallthru
          _
        // Predicated region
        $region129: #{tpu_custom_call.1} parent=67 // pred_check
          %p1437 = pneg %p342
        $region130: #{tpu_custom_call.1} parent=67 // pred_check_branch
          %1439 = sbr.rel (%p1437) target = $region132
        $region131: #{tpu_custom_call.1} parent=67 // pred_region
          %1440 = dma.done [#allocation5], 128
        $region132: #{tpu_custom_call.1} parent=67 // pred_fallthru
          _
      $region68: #{tpu_custom_call.1} parent=5 // pred_fallthru
        _
      %p1441 = scmp.le.s32.totalorder 2, %s30
      // Predicated region
      $region133: #{tpu_custom_call.1} parent=5 // pred_check
        %p1442 = pneg %p1441
      $region134: #{tpu_custom_call.1} parent=5 // pred_check_branch
        %1444 = sbr.rel (%p1442) target = $region136
      $region135: #{tpu_custom_call.1} parent=5 // pred_region
        %s1445 = ssub.s32 %s30, 2
      $region136: #{tpu_custom_call.1} parent=5 // pred_fallthru
        _
    $region6: #{tpu_custom_call.1} parent=1 // loop_footer
      %s34 = sadd.s32 1, %s30
    $region7: #{tpu_custom_call.1} parent=1 // loop_footer_branch
      %29 = sbr.rel target = $region3
    $region8: #{tpu_custom_call.1} parent=1 // loop_exit
      _
    %1446 = vsyncpa [#allocation4], 1
    %s1447 = scalar_lea.sflag [#allocation4], 1
    %1448 = vsyncpa %s1447, 1
    %1449 = vsyncpa [#allocation7], 1
    %1450 = vsyncpa [#allocation10], 1
    %1451 = vsyncpa [#allocation13], 1
    %1452 = vsyncpa [#allocation16], 1
    %s1453 = scalar_lea.sflag [#allocation16], 1
    %1454 = vsyncpa %s1453, 1
    %1455 = vsyncpa [#allocation19], 1
    %s1456 = scalar_lea.sflag [#allocation19], 1
    %1457 = vsyncpa %s1456, 1
    %1458 = vsyncpa [#allocation22], 1
    %1459 = vsyncpa [#allocation5], 1
    %s1460 = scalar_lea.sflag [#allocation5], 1
    %1461 = vsyncpa %s1460, 1

</llo_original>
